<compile_context>
chip_gen: v6e
topology: v6e:2x2x1
jax: 0.10.0
libtpu: 0.0.40
codegen_flags: <defaults>
</compile_context>

<pallas_src>
import functools

import jax
import jax.numpy as jnp
from jax import lax
from jax.experimental import pallas as pl
from jax.experimental.pallas import tpu as pltpu

_LANE = 128
_EPS = 1e-5
# Explicit scoped-VMEM limit: lets tm sweeps up to ~8-16k keep full double-buffering on
# v5e (16 MiB default) while staying well under v7x's 64 MiB physical VMEM.
_VMEM_LIMIT_BYTES = 48 * 1024 * 1024


def _ceil_to(x, m):
    return ((x + m - 1) // m) * m


def _pad2d(a, rows, cols, value=0.0):
    return jnp.pad(a, ((0, rows - a.shape[0]), (0, cols - a.shape[1])),
                   constant_values=value)


# ---------------------------------------------------------------------------
# Pass 1: ESGGR featurization + per-tile BatchNorm statistics (mean / M2)
# ---------------------------------------------------------------------------
def _esggr_stats_kernel(dist_ref, hkappa_ref, logeta_ref, sel_ref,
                        feat_ref, sum_ref, m2_ref, *, n_real, tm):
    # Lorentz kernel phi = 1 / (1 + (d/eta)^kappa) via the tanh identity:
    #   phi = 0.5 * (1 - tanh(0.5 * kappa * (log d - log eta)))
    # -> log + tanh (2 EUP pushes/elem) instead of log + exp + reciprocal.
    logd = jnp.log(jnp.maximum(dist_ref[...], 1e-30))       # clamp: d == 0 -> phi == 1
    z = hkappa_ref[...] * (logd - logeta_ref[...])
    phi = 0.5 - 0.5 * jnp.tanh(z)                            # (tm, GP_p), f32

    # Per-group sum over P as an MXU matmul with a constant 0/1 selection matrix
    # -> feat is lane-dense (tm, G_p).  Kept in f32 so the BN statistics below are
    # full precision; only the stored copy is down-cast (bf16 by default).
    feat = jnp.dot(phi, sel_ref[...], preferred_element_type=jnp.float32)
    feat_ref[...] = feat.astype(feat_ref.dtype)

    # Tile-local masked mean / M2 partials (Chan-style combine happens outside).
    # Writing per-tile partials (no output revisit) keeps this grid axis fully
    # parallel, so both v7x TensorCores can share the EUP-heavy featurization.
    i = pl.program_id(0)
    row = i * tm + lax.broadcasted_iota(jnp.int32, (tm, 1), 0)
    valid = (row < n_real).astype(jnp.float32)               # (tm, 1)
    n_valid = jnp.minimum(jnp.maximum(n_real - i * tm, 0), tm)
    inv_n = 1.0 / jnp.maximum(n_valid, 1).astype(jnp.float32)

    fm = feat * valid
    tile_sum = jnp.sum(fm, axis=0, keepdims=True)            # (1, G_p)
    mean_t = tile_sum * inv_n
    dev = (feat - mean_t) * valid
    tile_m2 = jnp.sum(dev * dev, axis=0, keepdims=True)      # (1, G_p)

    # (8, G_p) output blocks keep the stores (8,128)-aligned; row 0 is read back.
    sum_ref[...] = jnp.broadcast_to(tile_sum, sum_ref.shape)
    m2_ref[...] = jnp.broadcast_to(tile_m2, m2_ref.shape)


# ---------------------------------------------------------------------------
# Pass 2: (BN-folded) MLP + in-kernel per-dataset head selection
# ---------------------------------------------------------------------------
def _mlp_head_kernel(feat_ref, w1_ref, b1_ref, w2_ref, b2_ref, wout_ref,
                     bout_ref, out_ref, *, n_bounds, tm):
    h = jnp.dot(feat_ref[...], w1_ref[...],
                preferred_element_type=jnp.float32) + b1_ref[...]
    h = jnp.maximum(h, 0.0)
    h = jnp.dot(h.astype(w2_ref.dtype), w2_ref[...],
                preferred_element_type=jnp.float32) + b2_ref[...]
    h = jnp.maximum(h, 0.0)
    y = jnp.dot(h.astype(wout_ref.dtype), wout_ref[...],
                preferred_element_type=jnp.float32) + bout_ref[...]   # (tm, D_p)

    # Each row belongs to exactly one dataset (static contiguous row ranges),
    # so select that dataset's head column in-kernel and store a narrow (tm, 1)
    # block: writeback shrinks from tm*128*4 bytes to tm*4 bytes per tile.
    row = pl.program_id(0) * tm + lax.broadcasted_iota(jnp.int32, (tm, 1), 0)
    ds_id = jnp.zeros((tm, 1), jnp.int32)
    for b in n_bounds[1:-1]:                                  # static python ints
        ds_id = ds_id + (row >= b).astype(jnp.int32)
    lane = lax.broadcasted_iota(jnp.int32, y.shape, 1)
    onehot = (lane == ds_id).astype(jnp.float32)
    out_ref[...] = jnp.sum(y * onehot, axis=1, keepdims=True)


def mtawegnn_forward(dist, params, n_bounds, *, tm=1024,
                     compute_dtype=jnp.bfloat16):
    """Fused forward. Returns a tuple of per-dataset (n_i, 1) predictions.

    compute_dtype: storage dtype for the feat intermediate and the MLP weight
    operands (matmul accumulation, BN statistics and the BN fold stay in f32).
    """
    eta, kappa, gamma, beta, w1, b1, w2, b2, wout, bout = params
    N, G, P = dist.shape
    GP = G * P
    H = w1.shape[1]
    D = wout.shape[1]

    GP_p = _ceil_to(GP, _LANE)
    G_p = _ceil_to(G, _LANE)
    H_p = _ceil_to(H, _LANE)
    D_p = _ceil_to(D, _LANE)
    tm = max(8, tm)
    N_p = _ceil_to(N, tm)
    nt = N_p // tm

    # ---- lane-dense, zero/one padded operands (wrapper-side precompute) ----
    dist_flat = _pad2d(dist.reshape(N, GP), N_p, GP_p, value=1.0)
    hkappa_gp = jnp.pad(jnp.repeat(0.5 * kappa, P), (0, GP_p - GP))[None, :]
    logeta_gp = jnp.pad(jnp.repeat(jnp.log(eta), P), (0, GP_p - GP))[None, :]
    sel = _pad2d(jax.nn.one_hot(jnp.repeat(jnp.arange(G), P), G_p,
                                dtype=jnp.float32), GP_p, G_p)
    gamma_p = jnp.pad(gamma, (0, G_p - G))
    beta_p = jnp.pad(beta, (0, G_p - G))
    w1_p = _pad2d(w1, G_p, H_p)
    b1_p = _pad2d(b1[None, :], 1, H_p)
    w2_p = _pad2d(w2, H_p, H_p).astype(compute_dtype)
    b2_p = _pad2d(b2[None, :], 1, H_p)
    wout_p = _pad2d(wout, H_p, D_p).astype(compute_dtype)
    bout_p = _pad2d(bout[None, :], 1, D_p)

    cparams = pltpu.CompilerParams(dimension_semantics=("parallel",),
                                   vmem_limit_bytes=_VMEM_LIMIT_BYTES)

    # ---- pass 1: featurization + per-tile BN partials (fully parallel axis) ----
    feat, tile_sums, tile_m2s = pl.pallas_call(
        functools.partial(_esggr_stats_kernel, n_real=N, tm=tm),
        out_shape=(jax.ShapeDtypeStruct((N_p, G_p), compute_dtype),
                   jax.ShapeDtypeStruct((nt * 8, G_p), jnp.float32),
                   jax.ShapeDtypeStruct((nt * 8, G_p), jnp.float32)),
        grid=(nt,),
        in_specs=[pl.BlockSpec((tm, GP_p), lambda i: (i, 0)),
                  pl.BlockSpec((1, GP_p), lambda i: (0, 0)),
                  pl.BlockSpec((1, GP_p), lambda i: (0, 0)),
                  pl.BlockSpec((GP_p, G_p), lambda i: (0, 0))],
        out_specs=(pl.BlockSpec((tm, G_p), lambda i: (i, 0)),
                   pl.BlockSpec((8, G_p), lambda i: (i, 0)),
                   pl.BlockSpec((8, G_p), lambda i: (i, 0))),
        compiler_params=cparams,
    )(dist_flat, hkappa_gp, logeta_gp, sel)

    # ---- combine per-tile statistics (Chan) and fold training-mode BatchNorm
    #      (biased var, eps=1e-5) into the first Linear: tiny f32 XLA ops ----
    counts = jnp.clip(N - jnp.arange(nt) * tm, 0, tm).astype(jnp.float32)
    sum_t = tile_sums.reshape(nt, 8, G_p)[:, 0, :]
    m2_t = tile_m2s.reshape(nt, 8, G_p)[:, 0, :]
    mean = jnp.sum(sum_t, axis=0) / N
    mean_t = sum_t / jnp.maximum(counts, 1.0)[:, None]
    m2 = jnp.sum(m2_t, axis=0) + jnp.sum(
        counts[:, None] * (mean_t - mean[None, :]) ** 2, axis=0)
    var = jnp.maximum(m2 / N, 0.0)
    inv_std = lax.rsqrt(var + _EPS)
    bn_scale = gamma_p * inv_std
    bn_shift = beta_p - mean * bn_scale
    w1_eff = (bn_scale[:, None] * w1_p).astype(compute_dtype)
    b1_eff = jnp.sum(bn_shift[:, None] * w1_p, axis=0, keepdims=True) + b1_p

    # ---- pass 2: MLP + stacked heads with in-kernel head selection ----
    y = pl.pallas_call(
        functools.partial(_mlp_head_kernel, n_bounds=tuple(n_bounds), tm=tm),
        out_shape=jax.ShapeDtypeStruct((N_p, 1), jnp.float32),
        grid=(nt,),
        in_specs=[pl.BlockSpec((tm, G_p), lambda i: (i, 0)),
                  pl.BlockSpec((G_p, H_p), lambda i: (0, 0)),
                  pl.BlockSpec((1, H_p), lambda i: (0, 0)),
                  pl.BlockSpec((H_p, H_p), lambda i: (0, 0)),
                  pl.BlockSpec((1, H_p), lambda i: (0, 0)),
                  pl.BlockSpec((H_p, D_p), lambda i: (0, 0)),
                  pl.BlockSpec((1, D_p), lambda i: (0, 0))],
        out_specs=pl.BlockSpec((tm, 1), lambda i: (i, 0)),
        compiler_params=cparams,
    )(feat, w1_eff, b1_eff, w2_p, b2_p, wout_p, bout_p)

    # Per-dataset row split; the head column was already selected in-kernel
    # (matches `self.out[i](hidden_out[i])` in the PyTorch forward).
    return tuple(y[n_bounds[i]:n_bounds[i + 1], :]
                 for i in range(len(n_bounds) - 1))


# ---------------------------------------------------------------------------
# Pure-JAX reference (unpadded f32 math, PyTorch semantics) for checking
# ---------------------------------------------------------------------------
def reference_forward(dist, params, n_bounds):
    eta, kappa, gamma, beta, w1, b1, w2, b2, wout, bout = params
    ratio = dist / eta[None, :, None]
    phi = 1.0 / (1.0 + ratio ** kappa[None, :, None])
    feat = jnp.sum(phi, axis=-1)                                  # (N, G)
    mean = jnp.mean(feat, axis=0)
    var = jnp.mean((feat - mean) ** 2, axis=0)                    # biased (training BN)
    x = (feat - mean) * lax.rsqrt(var + _EPS) * gamma + beta
    h = jnp.maximum(x @ w1 + b1, 0.0)
    h = jnp.maximum(h @ w2 + b2, 0.0)
    y = h @ wout + bout
    return tuple(y[n_bounds[i]:n_bounds[i + 1], i:i + 1]
                 for i in range(len(n_bounds) - 1))


def make_params(key, num_grps, hidden, num_datasets):
    """Deterministic synthetic parameters matching the module's __init__ shapes."""
    ks = jax.random.split(key, 6)
    # ESGGR per-group kernel parameters (tau_rng=(0.5,1.5), kappa_rng=(2,5))
    eta = jnp.linspace(0.5, 1.5, num_grps, dtype=jnp.float32)
    kappa = jnp.linspace(2.0, 5.0, num_grps, dtype=jnp.float32)
    # BatchNorm1d(num_feat) default affine init
    gamma = jnp.ones((num_grps,), jnp.float32)
    beta = jnp.zeros((num_grps,), jnp.float32)
    # layer_list ~ [Linear(num_grps, hidden), ReLU, Linear(hidden, hidden), ReLU]
    w1 = jax.random.normal(ks[0], (num_grps, hidden), jnp.float32) * 0.2
    b1 = jax.random.normal(ks[1], (hidden,), jnp.float32) * 0.05
    w2 = jax.random.normal(ks[2], (hidden, hidden), jnp.float32) * 0.1
    b2 = jax.random.normal(ks[3], (hidden,), jnp.float32) * 0.05
    # out = ModuleList([Linear(hidden, 1) for _ in datasets]) -> stacked (hidden, D)
    wout = jax.random.normal(ks[4], (hidden, num_datasets), jnp.float32) * 0.1
    bout = jax.random.normal(ks[5], (num_datasets,), jnp.float32) * 0.05
    return (eta, kappa, gamma, beta, w1, b1, w2, b2, wout, bout)


if __name__ == "__main__":
    key = jax.random.PRNGKey(0)

    # 4 datasets (LC50DM, LC50, IGC50, LD50), 256 samples each -> N = 1024:
    # with tm=512 this exercises the multi-tile, megacore-parallel path.
    samples_per_dataset = [256, 256, 256, 256]
    n_bounds = [0]
    for n in samples_per_dataset:
        n_bounds.append(n_bounds[-1] + n)
    N = n_bounds[-1]

    num_grps = 4      # element-pair groups in the GGR
    pairs = 32        # distances per group per sample (G*P = 128 -> lane-dense)
    hidden = 32       # width of the MLP layers
    num_datasets = len(samples_per_dataset)

    k_dist, k_params = jax.random.split(key)
    # Strictly positive distances (Angstrom-ish scale).
    dist = jax.random.uniform(k_dist, (N, num_grps, pairs), jnp.float32,
                              minval=1.0, maxval=10.0)
    params = make_params(k_params, num_grps, hidden, num_datasets)

    # tm=512 (review-recommended range 512-2048); sweep 1024-2048 at production N.
    fwd_f32 = jax.jit(functools.partial(mtawegnn_forward,
                                        n_bounds=tuple(n_bounds), tm=512,
                                        compute_dtype=jnp.float32))
    fwd_bf16 = jax.jit(functools.partial(mtawegnn_forward,
                                         n_bounds=tuple(n_bounds), tm=512,
                                         compute_dtype=jnp.bfloat16))

    out_f32 = jax.block_until_ready(fwd_f32(dist, params))
    out_bf16 = jax.block_until_ready(fwd_bf16(dist, params))

    with jax.default_matmul_precision("highest"):
        refs = reference_forward(dist, params, tuple(n_bounds))

    assert len(out_f32) == num_datasets and len(out_bf16) == num_datasets
    for i, (y32, ybf, yr) in enumerate(zip(out_f32, out_bf16, refs)):
        assert y32.shape == (samples_per_dataset[i], 1), y32.shape
        assert ybf.shape == (samples_per_dataset[i], 1), ybf.shape
        assert jnp.all(jnp.isfinite(y32)) and jnp.all(jnp.isfinite(ybf))
        # f32 intermediates: tight check against the pure-f32 reference.
        assert jnp.allclose(y32, yr, rtol=5e-3, atol=5e-3), \
            float(jnp.max(jnp.abs(y32 - yr)))
        # bf16 feat/weight operands (perf default): the extra error is the intended
        # precision trade-off; accumulation, BN stats and the BN fold stay in f32.
        assert jnp.allclose(ybf, yr, rtol=5e-2, atol=5e-2), \
            float(jnp.max(jnp.abs(ybf - yr)))

    print("KERNEL_OK")
</pallas_src>

<mosaic_0001>
module attributes {stable_mosaic.version = 11 : i64} {
  func.func @_esggr_stats_kernel(%arg0: i32, %arg1: memref<512x128xf32, #tpu.memory_space<vmem>>, %arg2: memref<1x128xf32, #tpu.memory_space<vmem>>, %arg3: memref<1x128xf32, #tpu.memory_space<vmem>>, %arg4: memref<128x128xf32, #tpu.memory_space<vmem>>, %arg5: memref<512x128xf32, #tpu.memory_space<vmem>>, %arg6: memref<8x128xf32, #tpu.memory_space<vmem>>, %arg7: memref<8x128xf32, #tpu.memory_space<vmem>>) attributes {dimension_semantics = [#tpu.dimension_semantics<parallel>], iteration_bounds = array<i64: 2>, scalar_prefetch = 0 : i64, scratch_operands = 0 : i64, tpu.core_type = #tpu.core_type<tc>, window_params = [{transform_indices = @transform_0, window_bounds = array<i64: 512, 128>}, {pipeline_mode = #tpu.pipeline_mode<synchronous>, transform_indices = @transform_1, window_bounds = array<i64: 1, 128>}, {pipeline_mode = #tpu.pipeline_mode<synchronous>, transform_indices = @transform_2, window_bounds = array<i64: 1, 128>}, {pipeline_mode = #tpu.pipeline_mode<synchronous>, transform_indices = @transform_3, window_bounds = array<i64: 128, 128>}, {transform_indices = @transform_4, window_bounds = array<i64: 512, 128>}, {transform_indices = @transform_5, window_bounds = array<i64: 8, 128>}, {transform_indices = @transform_6, window_bounds = array<i64: 8, 128>}]} {
    %c0 = arith.constant 0 : index
    %c0_0 = arith.constant 0 : index
    %0 = vector.load %arg1[%c0, %c0_0] : memref<512x128xf32, #tpu.memory_space<vmem>>, vector<512x128xf32>
    %cst = arith.constant 1.000000e-30 : f32
    %1 = vector.broadcast %cst : f32 to vector<512x128xf32>
    %2 = arith.maximumf %0, %1 : vector<512x128xf32>
    %3 = math.log %2 : vector<512x128xf32>
    %c0_1 = arith.constant 0 : index
    %c0_2 = arith.constant 0 : index
    %4 = vector.load %arg2[%c0_1, %c0_2] : memref<1x128xf32, #tpu.memory_space<vmem>>, vector<1x128xf32>
    %c0_3 = arith.constant 0 : index
    %c0_4 = arith.constant 0 : index
    %5 = vector.load %arg3[%c0_3, %c0_4] : memref<1x128xf32, #tpu.memory_space<vmem>>, vector<1x128xf32>
    %6 = vector.broadcast %5 : vector<1x128xf32> to vector<512x128xf32>
    %7 = arith.subf %3, %6 : vector<512x128xf32>
    %8 = vector.broadcast %4 : vector<1x128xf32> to vector<512x128xf32>
    %9 = arith.mulf %8, %7 : vector<512x128xf32>
    %10 = math.tanh %9 : vector<512x128xf32>
    %cst_5 = arith.constant 5.000000e-01 : f32
    %11 = vector.broadcast %cst_5 : f32 to vector<512x128xf32>
    %12 = arith.mulf %11, %10 : vector<512x128xf32>
    %cst_6 = arith.constant 5.000000e-01 : f32
    %13 = vector.broadcast %cst_6 : f32 to vector<512x128xf32>
    %14 = arith.subf %13, %12 : vector<512x128xf32>
    %c0_7 = arith.constant 0 : index
    %c0_8 = arith.constant 0 : index
    %15 = vector.load %arg4[%c0_7, %c0_8] : memref<128x128xf32, #tpu.memory_space<vmem>>, vector<128x128xf32>
    %cst_9 = arith.constant dense<0.000000e+00> : vector<512x128xf32>
    %16 = tpu.matmul %14, %15, %cst_9 {dimension_numbers = #tpu.dot_dimension_numbers<[1], [0], [0], [1], [0, 0, 1, 1], [], []>} : vector<512x128xf32>, vector<128x128xf32>, vector<512x128xf32> -> vector<512x128xf32>
    %c0_10 = arith.constant 0 : index
    %c0_11 = arith.constant 0 : index
    %17 = vector.load %arg5[%c0_10, %c0_11] : memref<512x128xf32, #tpu.memory_space<vmem>>, vector<512x128xf32>
    tpu.vector_store %arg5[%c0_10, %c0_11], %16 {strides = array<i32>} : memref<512x128xf32, #tpu.memory_space<vmem>>, vector<512x128xf32>,
    %c512_i32 = arith.constant 512 : i32
    %18 = arith.muli %arg0, %c512_i32 : i32
    %19 = tpu.iota {dimensions = array<i32: 0>} : vector<512x1xi32>
    %20 = vector.broadcast %18 : i32 to vector<512x1xi32>
    %21 = arith.addi %20, %19 : vector<512x1xi32>
    %c1024_i32 = arith.constant 1024 : i32
    %22 = vector.broadcast %c1024_i32 : i32 to vector<512x1xi32>
    %23 = arith.cmpi slt, %21, %22 : vector<512x1xi32>
    %24 = arith.extui %23 : vector<512x1xi1> to vector<512x1xi32>
    %25 = arith.sitofp %24 : vector<512x1xi32> to vector<512x1xf32>
    %c512_i32_12 = arith.constant 512 : i32
    %26 = arith.muli %arg0, %c512_i32_12 : i32
    %c1024_i32_13 = arith.constant 1024 : i32
    %27 = arith.subi %c1024_i32_13, %26 : i32
    %c0_i32 = arith.constant 0 : i32
    %28 = arith.maxsi %27, %c0_i32 : i32
    %c512_i32_14 = arith.constant 512 : i32
    %29 = arith.minsi %28, %c512_i32_14 : i32
    %c1_i32 = arith.constant 1 : i32
    %30 = arith.maxsi %29, %c1_i32 : i32
    %31 = arith.sitofp %30 : i32 to f32
    %cst_15 = arith.constant 1.000000e+00 : f32
    %32 = arith.divf %cst_15, %31 : f32
    %33 = vector.broadcast %25 : vector<512x1xf32> to vector<512x128xf32>
    %34 = arith.mulf %16, %33 : vector<512x128xf32>
    %cst_16 = arith.constant dense<0.000000e+00> : vector<128xf32>
    %35 = vector.multi_reduction <add>, %34, %cst_16 [0] : vector<512x128xf32> to vector<128xf32>
    %36 = vector.shape_cast %35 : vector<128xf32> to vector<1x128xf32>
    %37 = vector.broadcast %32 : f32 to vector<1x128xf32>
    %38 = arith.mulf %36, %37 : vector<1x128xf32>
    %39 = vector.broadcast %38 : vector<1x128xf32> to vector<512x128xf32>
    %40 = arith.subf %16, %39 : vector<512x128xf32>
    %41 = vector.broadcast %25 : vector<512x1xf32> to vector<512x128xf32>
    %42 = arith.mulf %40, %41 : vector<512x128xf32>
    %43 = arith.mulf %42, %42 : vector<512x128xf32>
    %cst_17 = arith.constant dense<0.000000e+00> : vector<128xf32>
    %44 = vector.multi_reduction <add>, %43, %cst_17 [0] : vector<512x128xf32> to vector<128xf32>
    %45 = vector.shape_cast %44 : vector<128xf32> to vector<1x128xf32>
    %46 = vector.shape_cast %36 : vector<1x128xf32> to vector<1x128xf32>
    %47 = vector.broadcast %46 : vector<1x128xf32> to vector<8x128xf32>
    %c0_18 = arith.constant 0 : index
    %c0_19 = arith.constant 0 : index
    %48 = vector.load %arg6[%c0_18, %c0_19] : memref<8x128xf32, #tpu.memory_space<vmem>>, vector<8x128xf32>
    tpu.vector_store %arg6[%c0_18, %c0_19], %47 {strides = array<i32>} : memref<8x128xf32, #tpu.memory_space<vmem>>, vector<8x128xf32>,
    %49 = vector.shape_cast %45 : vector<1x128xf32> to vector<1x128xf32>
    %50 = vector.broadcast %49 : vector<1x128xf32> to vector<8x128xf32>
    %c0_20 = arith.constant 0 : index
    %c0_21 = arith.constant 0 : index
    %51 = vector.load %arg7[%c0_20, %c0_21] : memref<8x128xf32, #tpu.memory_space<vmem>>, vector<8x128xf32>
    tpu.vector_store %arg7[%c0_20, %c0_21], %50 {strides = array<i32>} : memref<8x128xf32, #tpu.memory_space<vmem>>, vector<8x128xf32>,
    return
  }
  func.func @transform_0(%arg0: i32) -> (i32, i32) {
    %c0_i32 = arith.constant 0 : i32
    %c0_i32_0 = arith.constant 0 : i32
    return %arg0, %c0_i32 : i32, i32
  }
  func.func @transform_1(%arg0: i32) -> (i32, i32) {
    %c0_i32 = arith.constant 0 : i32
    %c0_i32_0 = arith.constant 0 : i32
    %c0_i32_1 = arith.constant 0 : i32
    return %c0_i32, %c0_i32_0 : i32, i32
  }
  func.func @transform_2(%arg0: i32) -> (i32, i32) {
    %c0_i32 = arith.constant 0 : i32
    %c0_i32_0 = arith.constant 0 : i32
    %c0_i32_1 = arith.constant 0 : i32
    return %c0_i32, %c0_i32_0 : i32, i32
  }
  func.func @transform_3(%arg0: i32) -> (i32, i32) {
    %c0_i32 = arith.constant 0 : i32
    %c0_i32_0 = arith.constant 0 : i32
    %c0_i32_1 = arith.constant 0 : i32
    return %c0_i32, %c0_i32_0 : i32, i32
  }
  func.func @transform_4(%arg0: i32) -> (i32, i32) {
    %c0_i32 = arith.constant 0 : i32
    %c0_i32_0 = arith.constant 0 : i32
    return %arg0, %c0_i32 : i32, i32
  }
  func.func @transform_5(%arg0: i32) -> (i32, i32) {
    %c0_i32 = arith.constant 0 : i32
    %c0_i32_0 = arith.constant 0 : i32
    return %arg0, %c0_i32 : i32, i32
  }
  func.func @transform_6(%arg0: i32) -> (i32, i32) {
    %c0_i32 = arith.constant 0 : i32
    %c0_i32_0 = arith.constant 0 : i32
    return %arg0, %c0_i32 : i32, i32
  }
}

module attributes {stable_mosaic.version = 11 : i64} {
  func.func @_mlp_head_kernel(%arg0: i32, %arg1: memref<512x128xf32, #tpu.memory_space<vmem>>, %arg2: memref<128x128xf32, #tpu.memory_space<vmem>>, %arg3: memref<1x128xf32, #tpu.memory_space<vmem>>, %arg4: memref<128x128xf32, #tpu.memory_space<vmem>>, %arg5: memref<1x128xf32, #tpu.memory_space<vmem>>, %arg6: memref<128x128xf32, #tpu.memory_space<vmem>>, %arg7: memref<1x128xf32, #tpu.memory_space<vmem>>, %arg8: memref<512x1xf32, #tpu.memory_space<vmem>>) attributes {dimension_semantics = [#tpu.dimension_semantics<parallel>], iteration_bounds = array<i64: 2>, scalar_prefetch = 0 : i64, scratch_operands = 0 : i64, tpu.core_type = #tpu.core_type<tc>, window_params = [{transform_indices = @transform_0, window_bounds = array<i64: 512, 128>}, {pipeline_mode = #tpu.pipeline_mode<synchronous>, transform_indices = @transform_1, window_bounds = array<i64: 128, 128>}, {pipeline_mode = #tpu.pipeline_mode<synchronous>, transform_indices = @transform_2, window_bounds = array<i64: 1, 128>}, {pipeline_mode = #tpu.pipeline_mode<synchronous>, transform_indices = @transform_3, window_bounds = array<i64: 128, 128>}, {pipeline_mode = #tpu.pipeline_mode<synchronous>, transform_indices = @transform_4, window_bounds = array<i64: 1, 128>}, {pipeline_mode = #tpu.pipeline_mode<synchronous>, transform_indices = @transform_5, window_bounds = array<i64: 128, 128>}, {pipeline_mode = #tpu.pipeline_mode<synchronous>, transform_indices = @transform_6, window_bounds = array<i64: 1, 128>}, {transform_indices = @transform_7, window_bounds = array<i64: 512, 1>}]} {
    %c0 = arith.constant 0 : index
    %c0_0 = arith.constant 0 : index
    %0 = vector.load %arg1[%c0, %c0_0] : memref<512x128xf32, #tpu.memory_space<vmem>>, vector<512x128xf32>
    %c0_1 = arith.constant 0 : index
    %c0_2 = arith.constant 0 : index
    %1 = vector.load %arg2[%c0_1, %c0_2] : memref<128x128xf32, #tpu.memory_space<vmem>>, vector<128x128xf32>
    %cst = arith.constant dense<0.000000e+00> : vector<512x128xf32>
    %2 = tpu.matmul %0, %1, %cst {dimension_numbers = #tpu.dot_dimension_numbers<[1], [0], [0], [1], [0, 0, 1, 1], [], []>} : vector<512x128xf32>, vector<128x128xf32>, vector<512x128xf32> -> vector<512x128xf32>
    %c0_3 = arith.constant 0 : index
    %c0_4 = arith.constant 0 : index
    %3 = vector.load %arg3[%c0_3, %c0_4] : memref<1x128xf32, #tpu.memory_space<vmem>>, vector<1x128xf32>
    %4 = vector.broadcast %3 : vector<1x128xf32> to vector<512x128xf32>
    %5 = arith.addf %2, %4 : vector<512x128xf32>
    %cst_5 = arith.constant 0.000000e+00 : f32
    %6 = vector.broadcast %cst_5 : f32 to vector<512x128xf32>
    %7 = arith.maximumf %5, %6 : vector<512x128xf32>
    %c0_6 = arith.constant 0 : index
    %c0_7 = arith.constant 0 : index
    %8 = vector.load %arg4[%c0_6, %c0_7] : memref<128x128xf32, #tpu.memory_space<vmem>>, vector<128x128xf32>
    %cst_8 = arith.constant dense<0.000000e+00> : vector<512x128xf32>
    %9 = tpu.matmul %7, %8, %cst_8 {dimension_numbers = #tpu.dot_dimension_numbers<[1], [0], [0], [1], [0, 0, 1, 1], [], []>} : vector<512x128xf32>, vector<128x128xf32>, vector<512x128xf32> -> vector<512x128xf32>
    %c0_9 = arith.constant 0 : index
    %c0_10 = arith.constant 0 : index
    %10 = vector.load %arg5[%c0_9, %c0_10] : memref<1x128xf32, #tpu.memory_space<vmem>>, vector<1x128xf32>
    %11 = vector.broadcast %10 : vector<1x128xf32> to vector<512x128xf32>
    %12 = arith.addf %9, %11 : vector<512x128xf32>
    %cst_11 = arith.constant 0.000000e+00 : f32
    %13 = vector.broadcast %cst_11 : f32 to vector<512x128xf32>
    %14 = arith.maximumf %12, %13 : vector<512x128xf32>
    %c0_12 = arith.constant 0 : index
    %c0_13 = arith.constant 0 : index
    %15 = vector.load %arg6[%c0_12, %c0_13] : memref<128x128xf32, #tpu.memory_space<vmem>>, vector<128x128xf32>
    %cst_14 = arith.constant dense<0.000000e+00> : vector<512x128xf32>
    %16 = tpu.matmul %14, %15, %cst_14 {dimension_numbers = #tpu.dot_dimension_numbers<[1], [0], [0], [1], [0, 0, 1, 1], [], []>} : vector<512x128xf32>, vector<128x128xf32>, vector<512x128xf32> -> vector<512x128xf32>
    %c0_15 = arith.constant 0 : index
    %c0_16 = arith.constant 0 : index
    %17 = vector.load %arg7[%c0_15, %c0_16] : memref<1x128xf32, #tpu.memory_space<vmem>>, vector<1x128xf32>
    %18 = vector.broadcast %17 : vector<1x128xf32> to vector<512x128xf32>
    %19 = arith.addf %16, %18 : vector<512x128xf32>
    %c512_i32 = arith.constant 512 : i32
    %20 = arith.muli %arg0, %c512_i32 : i32
    %21 = tpu.iota {dimensions = array<i32: 0>} : vector<512x1xi32>
    %22 = vector.broadcast %20 : i32 to vector<512x1xi32>
    %23 = arith.addi %22, %21 : vector<512x1xi32>
    %c0_i32 = arith.constant 0 : i32
    %24 = vector.broadcast %c0_i32 : i32 to vector<512x1xi32>
    %c256_i32 = arith.constant 256 : i32
    %25 = vector.broadcast %c256_i32 : i32 to vector<512x1xi32>
    %26 = arith.cmpi sge, %23, %25 : vector<512x1xi32>
    %27 = arith.extui %26 : vector<512x1xi1> to vector<512x1xi32>
    %28 = arith.addi %24, %27 : vector<512x1xi32>
    %c512_i32_17 = arith.constant 512 : i32
    %29 = vector.broadcast %c512_i32_17 : i32 to vector<512x1xi32>
    %30 = arith.cmpi sge, %23, %29 : vector<512x1xi32>
    %31 = arith.extui %30 : vector<512x1xi1> to vector<512x1xi32>
    %32 = arith.addi %28, %31 : vector<512x1xi32>
    %c768_i32 = arith.constant 768 : i32
    %33 = vector.broadcast %c768_i32 : i32 to vector<512x1xi32>
    %34 = arith.cmpi sge, %23, %33 : vector<512x1xi32>
    %35 = arith.extui %34 : vector<512x1xi1> to vector<512x1xi32>
    %36 = arith.addi %32, %35 : vector<512x1xi32>
    %37 = tpu.iota {dimensions = array<i32: 1>} : vector<512x128xi32>
    %38 = vector.broadcast %36 : vector<512x1xi32> to vector<512x128xi32>
    %39 = arith.cmpi eq, %37, %38 : vector<512x128xi32>
    %40 = arith.extui %39 : vector<512x128xi1> to vector<512x128xi32>
    %41 = arith.sitofp %40 : vector<512x128xi32> to vector<512x128xf32>
    %42 = arith.mulf %19, %41 : vector<512x128xf32>
    %cst_18 = arith.constant dense<0.000000e+00> : vector<512xf32>
    %43 = vector.multi_reduction <add>, %42, %cst_18 [1] : vector<512x128xf32> to vector<512xf32>
    %44 = vector.shape_cast %43 : vector<512xf32> to vector<512x1xf32>
    %c0_19 = arith.constant 0 : index
    %c0_20 = arith.constant 0 : index
    %45 = vector.load %arg8[%c0_19, %c0_20] : memref<512x1xf32, #tpu.memory_space<vmem>>, vector<512x1xf32>
    tpu.vector_store %arg8[%c0_19, %c0_20], %44 {strides = array<i32>} : memref<512x1xf32, #tpu.memory_space<vmem>>, vector<512x1xf32>,
    return
  }
  func.func @transform_0(%arg0: i32) -> (i32, i32) {
    %c0_i32 = arith.constant 0 : i32
    %c0_i32_0 = arith.constant 0 : i32
    return %arg0, %c0_i32 : i32, i32
  }
  func.func @transform_1(%arg0: i32) -> (i32, i32) {
    %c0_i32 = arith.constant 0 : i32
    %c0_i32_0 = arith.constant 0 : i32
    %c0_i32_1 = arith.constant 0 : i32
    return %c0_i32, %c0_i32_0 : i32, i32
  }
  func.func @transform_2(%arg0: i32) -> (i32, i32) {
    %c0_i32 = arith.constant 0 : i32
    %c0_i32_0 = arith.constant 0 : i32
    %c0_i32_1 = arith.constant 0 : i32
    return %c0_i32, %c0_i32_0 : i32, i32
  }
  func.func @transform_3(%arg0: i32) -> (i32, i32) {
    %c0_i32 = arith.constant 0 : i32
    %c0_i32_0 = arith.constant 0 : i32
    %c0_i32_1 = arith.constant 0 : i32
    return %c0_i32, %c0_i32_0 : i32, i32
  }
  func.func @transform_4(%arg0: i32) -> (i32, i32) {
    %c0_i32 = arith.constant 0 : i32
    %c0_i32_0 = arith.constant 0 : i32
    %c0_i32_1 = arith.constant 0 : i32
    return %c0_i32, %c0_i32_0 : i32, i32
  }
  func.func @transform_5(%arg0: i32) -> (i32, i32) {
    %c0_i32 = arith.constant 0 : i32
    %c0_i32_0 = arith.constant 0 : i32
    %c0_i32_1 = arith.constant 0 : i32
    return %c0_i32, %c0_i32_0 : i32, i32
  }
  func.func @transform_6(%arg0: i32) -> (i32, i32) {
    %c0_i32 = arith.constant 0 : i32
    %c0_i32_0 = arith.constant 0 : i32
    %c0_i32_1 = arith.constant 0 : i32
    return %c0_i32, %c0_i32_0 : i32, i32
  }
  func.func @transform_7(%arg0: i32) -> (i32, i32) {
    %c0_i32 = arith.constant 0 : i32
    %c0_i32_0 = arith.constant 0 : i32
    return %arg0, %c0_i32 : i32, i32
  }
}

</mosaic_0001>

<llo_original>
// kernel: eq.1
$region0: #{eq.1}
  %s0 = inlined_call_operand.vmem [shape: s32[4,32], index: 0, kind: input, shape index: {}]
  %s1 = inlined_call_operand.vmem [shape: s32[128], index: 1, kind: output, shape index: {}]
  $region1: #{eq.1} parent=0
    #allocation0 [shape = 'u8[4096]{0}', space=vmem, size = 0x1000, scoped, tag = 'scoped mem for output reshape']
    #allocation1 [shape = 'u8[4096]{0}', space=vmem, size = 0x1000, scoped, tag = 'scoped mem for input reshape']
    %s3 = sshll.u32 1, 4
    %s4 = ssub.s32 %s3, 1
    %v5 = vld [vmem:[%s0] sm:%s4]
    %6 = vst [vmem:[#allocation1] sm:%s4] %v5
    %v7 = vld [vmem:[#allocation1] sm:$0x1]
    %vm8 = vcmask 261120
    %9 = vst.msk [vmem:[#allocation0] sm:$0x1] %vm8, %v7
    %s10 = scalar_lea.vmem [#allocation1], 3
    %v11 = vld [vmem:[%s10] sm:$0x1]
    %12 = vrot.lane.b32.xlu0 %v11, 96
    %v13 = vpop.permute.xlu0 %12
    %vm14 = vcmask 1048320
    %15 = vst.msk [vmem:[#allocation0] sm:$0x1] %vm14, %v13
    %s16 = scalar_lea.vmem [#allocation1], 2
    %v17 = vld [vmem:[%s16] sm:$0x1]
    %18 = vrot.lane.b32.xlu0 %v17, 64
    %v19 = vpop.permute.xlu0 %18
    %vm20 = vcmask 785920
    %21 = vst.msk [vmem:[#allocation0] sm:$0x1] %vm20, %v19
    %s22 = scalar_lea.vmem [#allocation1], 1
    %v23 = vld [vmem:[%s22] sm:$0x1]
    %24 = vrot.lane.b32.xlu0 %v23, 32
    %v25 = vpop.permute.xlu0 %24
    %vm26 = vcmask 523520
    %27 = vst.msk [vmem:[#allocation0] sm:$0x1] %vm26, %v25
    %s29 = sshll.u32 1, 1
    %s30 = ssub.s32 %s29, 1
    %v32 = vld [vmem:[#allocation0] sm:%s30]
    %s33 = sshll.u32 1, 1
    %s34 = ssub.s32 %s33, 1
    %35 = vst [vmem:[%s1] sm:%s34] %v32

// kernel: mtawegnn_forward.2
$region0: #{mtawegnn_forward.2}
  #allocation0 [shape = 'u32[]', space=smem, size = 0x4, offset = 0x4, fixed_abs, tag = 'smem constant byte address 0x4 - core index']
  #allocation1 [shape = 'u32[144,128]{1,0:T(1,128)}', space=vmem, size = 0x12000, scoped, tag = 'internal scratch']
  %s0 = inlined_call_operand.vmem [shape: f32[1024,128], index: 0, kind: input, shape index: {}]
  %s1 = inlined_call_operand.vmem [shape: f32[1,128], index: 1, kind: input, shape index: {}]
  %s2 = inlined_call_operand.vmem [shape: f32[1,128], index: 2, kind: input, shape index: {}]
  %s3 = inlined_call_operand.vmem [shape: f32[128,128], index: 3, kind: input, shape index: {}]
  %s4 = inlined_call_operand.vmem [shape: f32[1024,128], index: 4, kind: output, shape index: {0}]
  %s5 = inlined_call_operand.vmem [shape: f32[16,128], index: 5, kind: output, shape index: {1}]
  %s6 = inlined_call_operand.vmem [shape: f32[16,128], index: 6, kind: output, shape index: {2}]
  %7 = xla_tuple %s4, %s5, %s6
  %s8 = sld [smem:[#allocation0]]
  $region65: #{mtawegnn_forward.2} parent=0
    _
  %s10 = ssub.s32 1, %s8
  %s11 = scalar_select 0, %s10, %s8
  loop: start=0, step=1, limit=4
  $region2: #{mtawegnn_forward.2} parent=0 // loop_pre_header
    _
  $region3: #{mtawegnn_forward.2} parent=0 // loop_header
    %s13 = sphi 0, %s17
    %p14 = scmp.ge.s32.totalorder %s13, 4
    %s23 = sphi 0, %s25
    %s26 = sphi 0, %s23
    %s27 = sphi 0, %s26
    %s43 = sphi 0, %s27
    %s47 = sphi 0, %s47
    %s49 = sphi 0, %s47
    %s50 = sphi 0, %s49
    %s64 = sphi 0, %s50
    %s68 = sphi 0, %s68
    %s70 = sphi 0, %s68
    %s71 = sphi 0, %s70
    %s85 = sphi 0, %s71
    %s89 = sphi 0, %s89
    %s91 = sphi 0, %s89
    %s92 = sphi 0, %s91
    %s106 = sphi 0, %s92
    %s112 = sphi 0, %s114
    %s115 = sphi 0, %s112
    %s116 = sphi 0, %s115
    %s132 = sphi 0, %s116
    %s138 = sphi 0, %s140
    %s141 = sphi 0, %s138
    %s142 = sphi 0, %s141
    %s158 = sphi 0, %s142
    %s164 = sphi 0, %s166
    %s167 = sphi 0, %s164
    %s168 = sphi 0, %s167
    %s184 = sphi 0, %s168
  $region4: #{mtawegnn_forward.2} parent=0 // loop_header_branch
    %16 = sbr.rel (%p14) target = $region8
  $region5: #{mtawegnn_forward.2} parent=0 // loop_body
    %s18 = ssub.s32 %s13, 1
    %s19 = ssub.s32 %s13, 2
    %s20 = sadd.s32 %s13, 1
    %s21 = ssub.s32 %s13, %s20
    %p22 = scmp.eq.s32.totalorder %s21, 0
    %s24 = sadd.s32 %s23, 1
    %s25 = scalar_select %p22, %s23, %s24
    %p28 = pneg %p22
    %p29 = scmp.eq.s32.totalorder %s13, 1
    %p30 = por %p28, %p29
    %p31 = scmp.ne.s32.totalorder %s23, %s26
    %p32 = scmp.eq.s32.totalorder %s13, 0
    %p33 = por %p31, %p32
    %p34 = scmp.ne.s32.totalorder %s23, %s26
    %p35 = scmp.eq.s32.totalorder %s18, 1
    %p36 = por %p34, %p35
    %p37 = scmp.ne.s32.totalorder %s26, %s27
    %p38 = scmp.eq.s32.totalorder %s18, 0
    %p39 = por %p37, %p38
    %p40 = scmp.ne.s32.totalorder %s26, %s27
    %p41 = scmp.eq.s32.totalorder %s19, 1
    %p42 = por %p40, %p41
    %p44 = scmp.ne.s32.totalorder %s27, %s43
    %p45 = scmp.eq.s32.totalorder %s19, 0
    %p46 = por %p44, %p45
    %s48 = sadd.s32 %s47, 1
    %p51 = scmp.eq.s32.totalorder %s13, 1
    %p52 = scmp.ne.s32.totalorder %s47, %s49
    %p53 = scmp.eq.s32.totalorder %s13, 0
    %p54 = por %p52, %p53
    %p55 = scmp.ne.s32.totalorder %s47, %s49
    %p56 = scmp.eq.s32.totalorder %s18, 1
    %p57 = por %p55, %p56
    %p58 = scmp.ne.s32.totalorder %s49, %s50
    %p59 = scmp.eq.s32.totalorder %s18, 0
    %p60 = por %p58, %p59
    %p61 = scmp.ne.s32.totalorder %s49, %s50
    %p62 = scmp.eq.s32.totalorder %s19, 1
    %p63 = por %p61, %p62
    %p65 = scmp.ne.s32.totalorder %s50, %s64
    %p66 = scmp.eq.s32.totalorder %s19, 0
    %p67 = por %p65, %p66
    %s69 = sadd.s32 %s68, 1
    %p72 = scmp.eq.s32.totalorder %s13, 1
    %p73 = scmp.ne.s32.totalorder %s68, %s70
    %p74 = scmp.eq.s32.totalorder %s13, 0
    %p75 = por %p73, %p74
    %p76 = scmp.ne.s32.totalorder %s68, %s70
    %p77 = scmp.eq.s32.totalorder %s18, 1
    %p78 = por %p76, %p77
    %p79 = scmp.ne.s32.totalorder %s70, %s71
    %p80 = scmp.eq.s32.totalorder %s18, 0
    %p81 = por %p79, %p80
    %p82 = scmp.ne.s32.totalorder %s70, %s71
    %p83 = scmp.eq.s32.totalorder %s19, 1
    %p84 = por %p82, %p83
    %p86 = scmp.ne.s32.totalorder %s71, %s85
    %p87 = scmp.eq.s32.totalorder %s19, 0
    %p88 = por %p86, %p87
    %s90 = sadd.s32 %s89, 1
    %p93 = scmp.eq.s32.totalorder %s13, 1
    %p94 = scmp.ne.s32.totalorder %s89, %s91
    %p95 = scmp.eq.s32.totalorder %s13, 0
    %p96 = por %p94, %p95
    %p97 = scmp.ne.s32.totalorder %s89, %s91
    %p98 = scmp.eq.s32.totalorder %s18, 1
    %p99 = por %p97, %p98
    %p100 = scmp.ne.s32.totalorder %s91, %s92
    %p101 = scmp.eq.s32.totalorder %s18, 0
    %p102 = por %p100, %p101
    %p103 = scmp.ne.s32.totalorder %s91, %s92
    %p104 = scmp.eq.s32.totalorder %s19, 1
    %p105 = por %p103, %p104
    %p107 = scmp.ne.s32.totalorder %s92, %s106
    %p108 = scmp.eq.s32.totalorder %s19, 0
    %p109 = por %p107, %p108
    %s110 = ssub.s32 %s13, %s20
    %p111 = scmp.eq.s32.totalorder %s110, 0
    %s113 = sadd.s32 %s112, 1
    %s114 = scalar_select %p111, %s112, %s113
    %p117 = pneg %p111
    %p118 = scmp.eq.s32.totalorder %s13, 1
    %p119 = por %p117, %p118
    %p120 = scmp.ne.s32.totalorder %s112, %s115
    %p121 = scmp.eq.s32.totalorder %s13, 0
    %p122 = por %p120, %p121
    %p123 = scmp.ne.s32.totalorder %s112, %s115
    %p124 = scmp.eq.s32.totalorder %s18, 1
    %p125 = por %p123, %p124
    %p126 = scmp.ne.s32.totalorder %s115, %s116
    %p127 = scmp.eq.s32.totalorder %s18, 0
    %p128 = por %p126, %p127
    %p129 = scmp.ne.s32.totalorder %s115, %s116
    %p130 = scmp.eq.s32.totalorder %s19, 1
    %p131 = por %p129, %p130
    %p133 = scmp.ne.s32.totalorder %s116, %s132
    %p134 = scmp.eq.s32.totalorder %s19, 0
    %p135 = por %p133, %p134
    %s136 = ssub.s32 %s13, %s20
    %p137 = scmp.eq.s32.totalorder %s136, 0
    %s139 = sadd.s32 %s138, 1
    %s140 = scalar_select %p137, %s138, %s139
    %p143 = pneg %p137
    %p144 = scmp.eq.s32.totalorder %s13, 1
    %p145 = por %p143, %p144
    %p146 = scmp.ne.s32.totalorder %s138, %s141
    %p147 = scmp.eq.s32.totalorder %s13, 0
    %p148 = por %p146, %p147
    %p149 = scmp.ne.s32.totalorder %s138, %s141
    %p150 = scmp.eq.s32.totalorder %s18, 1
    %p151 = por %p149, %p150
    %p152 = scmp.ne.s32.totalorder %s141, %s142
    %p153 = scmp.eq.s32.totalorder %s18, 0
    %p154 = por %p152, %p153
    %p155 = scmp.ne.s32.totalorder %s141, %s142
    %p156 = scmp.eq.s32.totalorder %s19, 1
    %p157 = por %p155, %p156
    %p159 = scmp.ne.s32.totalorder %s142, %s158
    %p160 = scmp.eq.s32.totalorder %s19, 0
    %p161 = por %p159, %p160
    %s162 = ssub.s32 %s13, %s20
    %p163 = scmp.eq.s32.totalorder %s162, 0
    %s165 = sadd.s32 %s164, 1
    %s166 = scalar_select %p163, %s164, %s165
    %p169 = pneg %p163
    %p170 = scmp.eq.s32.totalorder %s13, 1
    %p171 = por %p169, %p170
    %p172 = scmp.ne.s32.totalorder %s164, %s167
    %p173 = scmp.eq.s32.totalorder %s13, 0
    %p174 = por %p172, %p173
    %p175 = scmp.ne.s32.totalorder %s164, %s167
    %p176 = scmp.eq.s32.totalorder %s18, 1
    %p177 = por %p175, %p176
    %p178 = scmp.ne.s32.totalorder %s167, %s168
    %p179 = scmp.eq.s32.totalorder %s18, 0
    %p180 = por %p178, %p179
    %p181 = scmp.ne.s32.totalorder %s167, %s168
    %p182 = scmp.eq.s32.totalorder %s19, 1
    %p183 = por %p181, %p182
    %p185 = scmp.ne.s32.totalorder %s168, %s184
    %p186 = scmp.eq.s32.totalorder %s19, 0
    %p187 = por %p185, %p186
    %p188 = scmp.le.s32.totalorder 1, %s13
    %p189 = scmp.lt.s32.totalorder %s13, 3
    %p190 = pnand %p188, %p189
    %p191 = pneg %p190
    // Predicated region
    $region9: #{mtawegnn_forward.2} parent=5 // pred_check
      _
    $region10: #{mtawegnn_forward.2} parent=5 // pred_check_branch
      %193 = sbr.rel (%p190) target = $region12
    $region11: #{mtawegnn_forward.2} parent=5 // pred_region
      %s194 = ssub.s32 %s13, 1
      // Predicated region
      $region13: #{mtawegnn_forward.2} parent=11 // pred_check
        %p195 = pneg %p60
      $region14: #{mtawegnn_forward.2} parent=11 // pred_check_branch
        %197 = sbr.rel (%p195) target = $region16
      $region15: #{mtawegnn_forward.2} parent=11 // pred_region
        _
      $region16: #{mtawegnn_forward.2} parent=11 // pred_fallthru
        _
      // Predicated region
      $region17: #{mtawegnn_forward.2} parent=11 // pred_check
        %p198 = pneg %p81
      $region18: #{mtawegnn_forward.2} parent=11 // pred_check_branch
        %200 = sbr.rel (%p198) target = $region20
      $region19: #{mtawegnn_forward.2} parent=11 // pred_region
        _
      $region20: #{mtawegnn_forward.2} parent=11 // pred_fallthru
        _
      // Predicated region
      $region21: #{mtawegnn_forward.2} parent=11 // pred_check
        %p201 = pneg %p102
      $region22: #{mtawegnn_forward.2} parent=11 // pred_check_branch
        %203 = sbr.rel (%p201) target = $region24
      $region23: #{mtawegnn_forward.2} parent=11 // pred_region
        _
      $region24: #{mtawegnn_forward.2} parent=11 // pred_fallthru
        _
    $region12: #{mtawegnn_forward.2} parent=5 // pred_fallthru
      _
    %p204 = scmp.lt.s32.totalorder %s13, 2
    // Predicated region
    $region25: #{mtawegnn_forward.2} parent=5 // pred_check
      %p205 = pneg %p204
    $region26: #{mtawegnn_forward.2} parent=5 // pred_check_branch
      %207 = sbr.rel (%p205) target = $region28
    $region27: #{mtawegnn_forward.2} parent=5 // pred_region
      // Predicated region
      $region29: #{mtawegnn_forward.2} parent=27 // pred_check
        %p208 = pneg %p33
      $region30: #{mtawegnn_forward.2} parent=27 // pred_check_branch
        %210 = sbr.rel (%p208) target = $region32
      $region31: #{mtawegnn_forward.2} parent=27 // pred_region
        %s211 = smul.u32 64, %s13
        %p212 = scmp.lt.s32.totalorder %s211, 127
        %s213 = scalar_select %p212, %s211, 127
        %s214 = smul.addr %s213, 8
        %s215 = scalar_lea.vmem %s0, %s214
        %s216 = smul.u32 64, %s13
      $region32: #{mtawegnn_forward.2} parent=27 // pred_fallthru
        _
    $region28: #{mtawegnn_forward.2} parent=5 // pred_fallthru
      _
    %p217 = scmp.le.s32.totalorder 1, %s13
    %p218 = scmp.lt.s32.totalorder %s13, 3
    %p219 = pnand %p217, %p218
    %p220 = pneg %p219
    // Predicated region
    $region33: #{mtawegnn_forward.2} parent=5 // pred_check
      _
    $region34: #{mtawegnn_forward.2} parent=5 // pred_check_branch
      %222 = sbr.rel (%p219) target = $region36
    $region35: #{mtawegnn_forward.2} parent=5 // pred_region
      %s223 = ssub.s32 %s13, 1
      %s224 = smul.u32 64, %s18
      %p225 = scmp.lt.s32.totalorder %s224, 127
      %s226 = scalar_select %p225, %s224, 127
      %s227 = smul.addr %s226, 8
      %s228 = scalar_lea.vmem %s0, %s227
      %p229 = pneg %p39
      %p230 = pneg %p36
      %p231 = pneg %p60
      %p232 = pneg %p57
      %p233 = pneg %p81
      %p234 = pneg %p78
      %p235 = pneg %p102
      %p236 = pneg %p99
      %p237 = pneg %p128
      %p238 = pneg %p125
      %s239 = smul.u32 64, %s18
      %p240 = scmp.lt.s32.totalorder %s239, 127
      %s241 = scalar_select %p240, %s239, 127
      %s242 = smul.addr %s241, 8
      %s243 = scalar_lea.vmem %s4, %s242
      %p244 = pneg %p154
      %p245 = pneg %p151
      %p246 = scmp.lt.s32.totalorder %s18, 1
      %s247 = scalar_select %p246, %s18, 1
      %s248 = smul.addr %s247, 8
      %s249 = scalar_lea.vmem %s5, %s248
      %p250 = pneg %p180
      %p251 = pneg %p177
      %p252 = scmp.lt.s32.totalorder %s18, 1
      %s253 = scalar_select %p252, %s18, 1
      %s254 = smul.addr %s253, 8
      %s255 = scalar_lea.vmem %s6, %s254
      %s256 = smul.u32 64, %s18
      %p257 = scmp.lt.s32.totalorder %s256, 127
      %s258 = scalar_select %p257, %s256, 127
      %s259 = smul.addr %s258, 8
      %s260 = scalar_lea.vmem %s0, %s259
      %s261 = smul.u32 64, %s18
      %s262 = smul.u32 64, %s18
      %p263 = scmp.lt.s32.totalorder %s262, 127
      %s264 = scalar_select %p263, %s262, 127
      %s265 = smul.addr %s264, 8
      %s266 = scalar_lea.vmem %s4, %s265
      %s267 = smul.u32 64, %s18
      %p268 = scmp.lt.s32.totalorder %s18, 1
      %s269 = scalar_select %p268, %s18, 1
      %s270 = smul.addr %s269, 8
      %s271 = scalar_lea.vmem %s5, %s270
      %p272 = scmp.lt.s32.totalorder %s18, 1
      %s273 = scalar_select %p272, %s18, 1
      %s274 = smul.addr %s273, 8
      %s275 = scalar_lea.vmem %s6, %s274
      %v276 = vld [vmem:[%s260] sm:$0xff]
      %v277 = vld [vmem:[%s260 + $0x8] sm:$0xff]
      %v278 = vld [vmem:[%s260 + $0x10] sm:$0xff]
      %v279 = vld [vmem:[%s260 + $0x18] sm:$0xff]
      %v280 = vld [vmem:[%s260 + $0x20] sm:$0xff]
      %v281 = vld [vmem:[%s260 + $0x28] sm:$0xff]
      %v282 = vld [vmem:[%s260 + $0x30] sm:$0xff]
      %v283 = vld [vmem:[%s260 + $0x38] sm:$0xff]
      %v284 = vld [vmem:[%s260 + $0x40] sm:$0xff]
      %v285 = vld [vmem:[%s260 + $0x48] sm:$0xff]
      %v286 = vld [vmem:[%s260 + $0x50] sm:$0xff]
      %v287 = vld [vmem:[%s260 + $0x58] sm:$0xff]
      %v288 = vld [vmem:[%s260 + $0x60] sm:$0xff]
      %v289 = vld [vmem:[%s260 + $0x68] sm:$0xff]
      %v290 = vld [vmem:[%s260 + $0x70] sm:$0xff]
      %v291 = vld [vmem:[%s260 + $0x78] sm:$0xff]
      %v292 = vld [vmem:[%s260 + $0x80] sm:$0xff]
      %v293 = vld [vmem:[%s260 + $0x88] sm:$0xff]
      %v294 = vld [vmem:[%s260 + $0x90] sm:$0xff]
      %v295 = vld [vmem:[%s260 + $0x98] sm:$0xff]
      %v296 = vld [vmem:[%s260 + $0xa0] sm:$0xff]
      %v297 = vld [vmem:[%s260 + $0xa8] sm:$0xff]
      %v298 = vld [vmem:[%s260 + $0xb0] sm:$0xff]
      %v299 = vld [vmem:[%s260 + $0xb8] sm:$0xff]
      %v300 = vld [vmem:[%s260 + $0xc0] sm:$0xff]
      %v301 = vld [vmem:[%s260 + $0xc8] sm:$0xff]
      %v302 = vld [vmem:[%s260 + $0xd0] sm:$0xff]
      %v303 = vld [vmem:[%s260 + $0xd8] sm:$0xff]
      %v304 = vld [vmem:[%s260 + $0xe0] sm:$0xff]
      %v305 = vld [vmem:[%s260 + $0xe8] sm:$0xff]
      %v306 = vld [vmem:[%s260 + $0xf0] sm:$0xff]
      %v307 = vld [vmem:[%s260 + $0xf8] sm:$0xff]
      %v308 = vld [vmem:[%s260 + $0x100] sm:$0xff]
      %v309 = vld [vmem:[%s260 + $0x108] sm:$0xff]
      %v310 = vld [vmem:[%s260 + $0x110] sm:$0xff]
      %v311 = vld [vmem:[%s260 + $0x118] sm:$0xff]
      %v312 = vld [vmem:[%s260 + $0x120] sm:$0xff]
      %v313 = vld [vmem:[%s260 + $0x128] sm:$0xff]
      %v314 = vld [vmem:[%s260 + $0x130] sm:$0xff]
      %v315 = vld [vmem:[%s260 + $0x138] sm:$0xff]
      %v316 = vld [vmem:[%s260 + $0x140] sm:$0xff]
      %v317 = vld [vmem:[%s260 + $0x148] sm:$0xff]
      %v318 = vld [vmem:[%s260 + $0x150] sm:$0xff]
      %v319 = vld [vmem:[%s260 + $0x158] sm:$0xff]
      %v320 = vld [vmem:[%s260 + $0x160] sm:$0xff]
      %v321 = vld [vmem:[%s260 + $0x168] sm:$0xff]
      %v322 = vld [vmem:[%s260 + $0x170] sm:$0xff]
      %v323 = vld [vmem:[%s260 + $0x178] sm:$0xff]
      %v324 = vld [vmem:[%s260 + $0x180] sm:$0xff]
      %v325 = vld [vmem:[%s260 + $0x188] sm:$0xff]
      %v326 = vld [vmem:[%s260 + $0x190] sm:$0xff]
      %v327 = vld [vmem:[%s260 + $0x198] sm:$0xff]
      %v328 = vld [vmem:[%s260 + $0x1a0] sm:$0xff]
      %v329 = vld [vmem:[%s260 + $0x1a8] sm:$0xff]
      %v330 = vld [vmem:[%s260 + $0x1b0] sm:$0xff]
      %v331 = vld [vmem:[%s260 + $0x1b8] sm:$0xff]
      %v332 = vld [vmem:[%s260 + $0x1c0] sm:$0xff]
      %v333 = vld [vmem:[%s260 + $0x1c8] sm:$0xff]
      %v334 = vld [vmem:[%s260 + $0x1d0] sm:$0xff]
      %v335 = vld [vmem:[%s260 + $0x1d8] sm:$0xff]
      %v336 = vld [vmem:[%s260 + $0x1e0] sm:$0xff]
      %v337 = vld [vmem:[%s260 + $0x1e8] sm:$0xff]
      %v338 = vld [vmem:[%s260 + $0x1f0] sm:$0xff]
      %v339 = vld [vmem:[%s260 + $0x1f8] sm:$0xff]
      %v340 = vmax.f32 %v276, 1e-30
      %v341 = vmax.f32 %v277, 1e-30
      %v342 = vmax.f32 %v278, 1e-30
      %v343 = vmax.f32 %v279, 1e-30
      %v344 = vmax.f32 %v280, 1e-30
      %v345 = vmax.f32 %v281, 1e-30
      %v346 = vmax.f32 %v282, 1e-30
      %v347 = vmax.f32 %v283, 1e-30
      %v348 = vmax.f32 %v284, 1e-30
      %v349 = vmax.f32 %v285, 1e-30
      %v350 = vmax.f32 %v286, 1e-30
      %v351 = vmax.f32 %v287, 1e-30
      %v352 = vmax.f32 %v288, 1e-30
      %v353 = vmax.f32 %v289, 1e-30
      %v354 = vmax.f32 %v290, 1e-30
      %v355 = vmax.f32 %v291, 1e-30
      %v356 = vmax.f32 %v292, 1e-30
      %v357 = vmax.f32 %v293, 1e-30
      %v358 = vmax.f32 %v294, 1e-30
      %v359 = vmax.f32 %v295, 1e-30
      %v360 = vmax.f32 %v296, 1e-30
      %v361 = vmax.f32 %v297, 1e-30
      %v362 = vmax.f32 %v298, 1e-30
      %v363 = vmax.f32 %v299, 1e-30
      %v364 = vmax.f32 %v300, 1e-30
      %v365 = vmax.f32 %v301, 1e-30
      %v366 = vmax.f32 %v302, 1e-30
      %v367 = vmax.f32 %v303, 1e-30
      %v368 = vmax.f32 %v304, 1e-30
      %v369 = vmax.f32 %v305, 1e-30
      %v370 = vmax.f32 %v306, 1e-30
      %v371 = vmax.f32 %v307, 1e-30
      %v372 = vmax.f32 %v308, 1e-30
      %v373 = vmax.f32 %v309, 1e-30
      %v374 = vmax.f32 %v310, 1e-30
      %v375 = vmax.f32 %v311, 1e-30
      %v376 = vmax.f32 %v312, 1e-30
      %v377 = vmax.f32 %v313, 1e-30
      %v378 = vmax.f32 %v314, 1e-30
      %v379 = vmax.f32 %v315, 1e-30
      %v380 = vmax.f32 %v316, 1e-30
      %v381 = vmax.f32 %v317, 1e-30
      %v382 = vmax.f32 %v318, 1e-30
      %v383 = vmax.f32 %v319, 1e-30
      %v384 = vmax.f32 %v320, 1e-30
      %v385 = vmax.f32 %v321, 1e-30
      %v386 = vmax.f32 %v322, 1e-30
      %v387 = vmax.f32 %v323, 1e-30
      %v388 = vmax.f32 %v324, 1e-30
      %v389 = vmax.f32 %v325, 1e-30
      %v390 = vmax.f32 %v326, 1e-30
      %v391 = vmax.f32 %v327, 1e-30
      %v392 = vmax.f32 %v328, 1e-30
      %v393 = vmax.f32 %v329, 1e-30
      %v394 = vmax.f32 %v330, 1e-30
      %v395 = vmax.f32 %v331, 1e-30
      %v396 = vmax.f32 %v332, 1e-30
      %v397 = vmax.f32 %v333, 1e-30
      %v398 = vmax.f32 %v334, 1e-30
      %v399 = vmax.f32 %v335, 1e-30
      %v400 = vmax.f32 %v336, 1e-30
      %v401 = vmax.f32 %v337, 1e-30
      %v402 = vmax.f32 %v338, 1e-30
      %v403 = vmax.f32 %v339, 1e-30
      %v404 = vlog2.pop %v340
      %v405 = vmul.f32 %v404, 0.6931472
      %v406 = vlog2.pop %v341
      %v407 = vmul.f32 %v406, 0.6931472
      %v408 = vlog2.pop %v342
      %v409 = vmul.f32 %v408, 0.6931472
      %v410 = vlog2.pop %v343
      %v411 = vmul.f32 %v410, 0.6931472
      %v412 = vlog2.pop %v344
      %v413 = vmul.f32 %v412, 0.6931472
      %v414 = vlog2.pop %v345
      %v415 = vmul.f32 %v414, 0.6931472
      %v416 = vlog2.pop %v346
      %v417 = vmul.f32 %v416, 0.6931472
      %v418 = vlog2.pop %v347
      %v419 = vmul.f32 %v418, 0.6931472
      %v420 = vlog2.pop %v348
      %v421 = vmul.f32 %v420, 0.6931472
      %v422 = vlog2.pop %v349
      %v423 = vmul.f32 %v422, 0.6931472
      %v424 = vlog2.pop %v350
      %v425 = vmul.f32 %v424, 0.6931472
      %v426 = vlog2.pop %v351
      %v427 = vmul.f32 %v426, 0.6931472
      %v428 = vlog2.pop %v352
      %v429 = vmul.f32 %v428, 0.6931472
      %v430 = vlog2.pop %v353
      %v431 = vmul.f32 %v430, 0.6931472
      %v432 = vlog2.pop %v354
      %v433 = vmul.f32 %v432, 0.6931472
      %v434 = vlog2.pop %v355
      %v435 = vmul.f32 %v434, 0.6931472
      %v436 = vlog2.pop %v356
      %v437 = vmul.f32 %v436, 0.6931472
      %v438 = vlog2.pop %v357
      %v439 = vmul.f32 %v438, 0.6931472
      %v440 = vlog2.pop %v358
      %v441 = vmul.f32 %v440, 0.6931472
      %v442 = vlog2.pop %v359
      %v443 = vmul.f32 %v442, 0.6931472
      %v444 = vlog2.pop %v360
      %v445 = vmul.f32 %v444, 0.6931472
      %v446 = vlog2.pop %v361
      %v447 = vmul.f32 %v446, 0.6931472
      %v448 = vlog2.pop %v362
      %v449 = vmul.f32 %v448, 0.6931472
      %v450 = vlog2.pop %v363
      %v451 = vmul.f32 %v450, 0.6931472
      %v452 = vlog2.pop %v364
      %v453 = vmul.f32 %v452, 0.6931472
      %v454 = vlog2.pop %v365
      %v455 = vmul.f32 %v454, 0.6931472
      %v456 = vlog2.pop %v366
      %v457 = vmul.f32 %v456, 0.6931472
      %v458 = vlog2.pop %v367
      %v459 = vmul.f32 %v458, 0.6931472
      %v460 = vlog2.pop %v368
      %v461 = vmul.f32 %v460, 0.6931472
      %v462 = vlog2.pop %v369
      %v463 = vmul.f32 %v462, 0.6931472
      %v464 = vlog2.pop %v370
      %v465 = vmul.f32 %v464, 0.6931472
      %v466 = vlog2.pop %v371
      %v467 = vmul.f32 %v466, 0.6931472
      %v468 = vlog2.pop %v372
      %v469 = vmul.f32 %v468, 0.6931472
      %v470 = vlog2.pop %v373
      %v471 = vmul.f32 %v470, 0.6931472
      %v472 = vlog2.pop %v374
      %v473 = vmul.f32 %v472, 0.6931472
      %v474 = vlog2.pop %v375
      %v475 = vmul.f32 %v474, 0.6931472
      %v476 = vlog2.pop %v376
      %v477 = vmul.f32 %v476, 0.6931472
      %v478 = vlog2.pop %v377
      %v479 = vmul.f32 %v478, 0.6931472
      %v480 = vlog2.pop %v378
      %v481 = vmul.f32 %v480, 0.6931472
      %v482 = vlog2.pop %v379
      %v483 = vmul.f32 %v482, 0.6931472
      %v484 = vlog2.pop %v380
      %v485 = vmul.f32 %v484, 0.6931472
      %v486 = vlog2.pop %v381
      %v487 = vmul.f32 %v486, 0.6931472
      %v488 = vlog2.pop %v382
      %v489 = vmul.f32 %v488, 0.6931472
      %v490 = vlog2.pop %v383
      %v491 = vmul.f32 %v490, 0.6931472
      %v492 = vlog2.pop %v384
      %v493 = vmul.f32 %v492, 0.6931472
      %v494 = vlog2.pop %v385
      %v495 = vmul.f32 %v494, 0.6931472
      %v496 = vlog2.pop %v386
      %v497 = vmul.f32 %v496, 0.6931472
      %v498 = vlog2.pop %v387
      %v499 = vmul.f32 %v498, 0.6931472
      %v500 = vlog2.pop %v388
      %v501 = vmul.f32 %v500, 0.6931472
      %v502 = vlog2.pop %v389
      %v503 = vmul.f32 %v502, 0.6931472
      %v504 = vlog2.pop %v390
      %v505 = vmul.f32 %v504, 0.6931472
      %v506 = vlog2.pop %v391
      %v507 = vmul.f32 %v506, 0.6931472
      %v508 = vlog2.pop %v392
      %v509 = vmul.f32 %v508, 0.6931472
      %v510 = vlog2.pop %v393
      %v511 = vmul.f32 %v510, 0.6931472
      %v512 = vlog2.pop %v394
      %v513 = vmul.f32 %v512, 0.6931472
      %v514 = vlog2.pop %v395
      %v515 = vmul.f32 %v514, 0.6931472
      %v516 = vlog2.pop %v396
      %v517 = vmul.f32 %v516, 0.6931472
      %v518 = vlog2.pop %v397
      %v519 = vmul.f32 %v518, 0.6931472
      %v520 = vlog2.pop %v398
      %v521 = vmul.f32 %v520, 0.6931472
      %v522 = vlog2.pop %v399
      %v523 = vmul.f32 %v522, 0.6931472
      %v524 = vlog2.pop %v400
      %v525 = vmul.f32 %v524, 0.6931472
      %v526 = vlog2.pop %v401
      %v527 = vmul.f32 %v526, 0.6931472
      %v528 = vlog2.pop %v402
      %v529 = vmul.f32 %v528, 0.6931472
      %v530 = vlog2.pop %v403
      %v531 = vmul.f32 %v530, 0.6931472
      %v532 = vld [vmem:[%s1] sm:$0x1]
      %v533 = vld [vmem:[%s2] sm:$0x1]
      %v535 = vlaneseq
      %v536 = vshrl.u32 %v535, 7
      %v537 = vsub.s32 0, %v536
      %v538 = vrot.slane %v533, %v537
      %v540 = vsub.f32 %v405, %v538
      %v541 = vsub.f32 %v407, %v538
      %v542 = vsub.f32 %v409, %v538
      %v543 = vsub.f32 %v411, %v538
      %v544 = vsub.f32 %v413, %v538
      %v545 = vsub.f32 %v415, %v538
      %v546 = vsub.f32 %v417, %v538
      %v547 = vsub.f32 %v419, %v538
      %v548 = vsub.f32 %v421, %v538
      %v549 = vsub.f32 %v423, %v538
      %v550 = vsub.f32 %v425, %v538
      %v551 = vsub.f32 %v427, %v538
      %v552 = vsub.f32 %v429, %v538
      %v553 = vsub.f32 %v431, %v538
      %v554 = vsub.f32 %v433, %v538
      %v555 = vsub.f32 %v435, %v538
      %v556 = vsub.f32 %v437, %v538
      %v557 = vsub.f32 %v439, %v538
      %v558 = vsub.f32 %v441, %v538
      %v559 = vsub.f32 %v443, %v538
      %v560 = vsub.f32 %v445, %v538
      %v561 = vsub.f32 %v447, %v538
      %v562 = vsub.f32 %v449, %v538
      %v563 = vsub.f32 %v451, %v538
      %v564 = vsub.f32 %v453, %v538
      %v565 = vsub.f32 %v455, %v538
      %v566 = vsub.f32 %v457, %v538
      %v567 = vsub.f32 %v459, %v538
      %v568 = vsub.f32 %v461, %v538
      %v569 = vsub.f32 %v463, %v538
      %v570 = vsub.f32 %v465, %v538
      %v571 = vsub.f32 %v467, %v538
      %v572 = vsub.f32 %v469, %v538
      %v573 = vsub.f32 %v471, %v538
      %v574 = vsub.f32 %v473, %v538
      %v575 = vsub.f32 %v475, %v538
      %v576 = vsub.f32 %v477, %v538
      %v577 = vsub.f32 %v479, %v538
      %v578 = vsub.f32 %v481, %v538
      %v579 = vsub.f32 %v483, %v538
      %v580 = vsub.f32 %v485, %v538
      %v581 = vsub.f32 %v487, %v538
      %v582 = vsub.f32 %v489, %v538
      %v583 = vsub.f32 %v491, %v538
      %v584 = vsub.f32 %v493, %v538
      %v585 = vsub.f32 %v495, %v538
      %v586 = vsub.f32 %v497, %v538
      %v587 = vsub.f32 %v499, %v538
      %v588 = vsub.f32 %v501, %v538
      %v589 = vsub.f32 %v503, %v538
      %v590 = vsub.f32 %v505, %v538
      %v591 = vsub.f32 %v507, %v538
      %v592 = vsub.f32 %v509, %v538
      %v593 = vsub.f32 %v511, %v538
      %v594 = vsub.f32 %v513, %v538
      %v595 = vsub.f32 %v515, %v538
      %v596 = vsub.f32 %v517, %v538
      %v597 = vsub.f32 %v519, %v538
      %v598 = vsub.f32 %v521, %v538
      %v599 = vsub.f32 %v523, %v538
      %v600 = vsub.f32 %v525, %v538
      %v601 = vsub.f32 %v527, %v538
      %v602 = vsub.f32 %v529, %v538
      %v603 = vsub.f32 %v531, %v538
      %v605 = vlaneseq
      %v606 = vshrl.u32 %v605, 7
      %v607 = vsub.s32 0, %v606
      %v608 = vrot.slane %v532, %v607
      %v610 = vmul.f32 %v608, %v540
      %v611 = vmul.f32 %v608, %v541
      %v612 = vmul.f32 %v608, %v542
      %v613 = vmul.f32 %v608, %v543
      %v614 = vmul.f32 %v608, %v544
      %v615 = vmul.f32 %v608, %v545
      %v616 = vmul.f32 %v608, %v546
      %v617 = vmul.f32 %v608, %v547
      %v618 = vmul.f32 %v608, %v548
      %v619 = vmul.f32 %v608, %v549
      %v620 = vmul.f32 %v608, %v550
      %v621 = vmul.f32 %v608, %v551
      %v622 = vmul.f32 %v608, %v552
      %v623 = vmul.f32 %v608, %v553
      %v624 = vmul.f32 %v608, %v554
      %v625 = vmul.f32 %v608, %v555
      %v626 = vmul.f32 %v608, %v556
      %v627 = vmul.f32 %v608, %v557
      %v628 = vmul.f32 %v608, %v558
      %v629 = vmul.f32 %v608, %v559
      %v630 = vmul.f32 %v608, %v560
      %v631 = vmul.f32 %v608, %v561
      %v632 = vmul.f32 %v608, %v562
      %v633 = vmul.f32 %v608, %v563
      %v634 = vmul.f32 %v608, %v564
      %v635 = vmul.f32 %v608, %v565
      %v636 = vmul.f32 %v608, %v566
      %v637 = vmul.f32 %v608, %v567
      %v638 = vmul.f32 %v608, %v568
      %v639 = vmul.f32 %v608, %v569
      %v640 = vmul.f32 %v608, %v570
      %v641 = vmul.f32 %v608, %v571
      %v642 = vmul.f32 %v608, %v572
      %v643 = vmul.f32 %v608, %v573
      %v644 = vmul.f32 %v608, %v574
      %v645 = vmul.f32 %v608, %v575
      %v646 = vmul.f32 %v608, %v576
      %v647 = vmul.f32 %v608, %v577
      %v648 = vmul.f32 %v608, %v578
      %v649 = vmul.f32 %v608, %v579
      %v650 = vmul.f32 %v608, %v580
      %v651 = vmul.f32 %v608, %v581
      %v652 = vmul.f32 %v608, %v582
      %v653 = vmul.f32 %v608, %v583
      %v654 = vmul.f32 %v608, %v584
      %v655 = vmul.f32 %v608, %v585
      %v656 = vmul.f32 %v608, %v586
      %v657 = vmul.f32 %v608, %v587
      %v658 = vmul.f32 %v608, %v588
      %v659 = vmul.f32 %v608, %v589
      %v660 = vmul.f32 %v608, %v590
      %v661 = vmul.f32 %v608, %v591
      %v662 = vmul.f32 %v608, %v592
      %v663 = vmul.f32 %v608, %v593
      %v664 = vmul.f32 %v608, %v594
      %v665 = vmul.f32 %v608, %v595
      %v666 = vmul.f32 %v608, %v596
      %v667 = vmul.f32 %v608, %v597
      %v668 = vmul.f32 %v608, %v598
      %v669 = vmul.f32 %v608, %v599
      %v670 = vmul.f32 %v608, %v600
      %v671 = vmul.f32 %v608, %v601
      %v672 = vmul.f32 %v608, %v602
      %v673 = vmul.f32 %v608, %v603
      %v674 = vtanh.pop %v610
      %v675 = vtanh.pop %v611
      %v676 = vtanh.pop %v612
      %v677 = vtanh.pop %v613
      %v678 = vtanh.pop %v614
      %v679 = vtanh.pop %v615
      %v680 = vtanh.pop %v616
      %v681 = vtanh.pop %v617
      %v682 = vtanh.pop %v618
      %v683 = vtanh.pop %v619
      %v684 = vtanh.pop %v620
      %v685 = vtanh.pop %v621
      %v686 = vtanh.pop %v622
      %v687 = vtanh.pop %v623
      %v688 = vtanh.pop %v624
      %v689 = vtanh.pop %v625
      %v690 = vtanh.pop %v626
      %v691 = vtanh.pop %v627
      %v692 = vtanh.pop %v628
      %v693 = vtanh.pop %v629
      %v694 = vtanh.pop %v630
      %v695 = vtanh.pop %v631
      %v696 = vtanh.pop %v632
      %v697 = vtanh.pop %v633
      %v698 = vtanh.pop %v634
      %v699 = vtanh.pop %v635
      %v700 = vtanh.pop %v636
      %v701 = vtanh.pop %v637
      %v702 = vtanh.pop %v638
      %v703 = vtanh.pop %v639
      %v704 = vtanh.pop %v640
      %v705 = vtanh.pop %v641
      %v706 = vtanh.pop %v642
      %v707 = vtanh.pop %v643
      %v708 = vtanh.pop %v644
      %v709 = vtanh.pop %v645
      %v710 = vtanh.pop %v646
      %v711 = vtanh.pop %v647
      %v712 = vtanh.pop %v648
      %v713 = vtanh.pop %v649
      %v714 = vtanh.pop %v650
      %v715 = vtanh.pop %v651
      %v716 = vtanh.pop %v652
      %v717 = vtanh.pop %v653
      %v718 = vtanh.pop %v654
      %v719 = vtanh.pop %v655
      %v720 = vtanh.pop %v656
      %v721 = vtanh.pop %v657
      %v722 = vtanh.pop %v658
      %v723 = vtanh.pop %v659
      %v724 = vtanh.pop %v660
      %v725 = vtanh.pop %v661
      %v726 = vtanh.pop %v662
      %v727 = vtanh.pop %v663
      %v728 = vtanh.pop %v664
      %v729 = vtanh.pop %v665
      %v730 = vtanh.pop %v666
      %v731 = vtanh.pop %v667
      %v732 = vtanh.pop %v668
      %v733 = vtanh.pop %v669
      %v734 = vtanh.pop %v670
      %v735 = vtanh.pop %v671
      %v736 = vtanh.pop %v672
      %v737 = vtanh.pop %v673
      %v738 = vmul.f32 %v674, 0.5
      %v739 = vmul.f32 %v675, 0.5
      %v740 = vmul.f32 %v676, 0.5
      %v741 = vmul.f32 %v677, 0.5
      %v742 = vmul.f32 %v678, 0.5
      %v743 = vmul.f32 %v679, 0.5
      %v744 = vmul.f32 %v680, 0.5
      %v745 = vmul.f32 %v681, 0.5
      %v746 = vmul.f32 %v682, 0.5
      %v747 = vmul.f32 %v683, 0.5
      %v748 = vmul.f32 %v684, 0.5
      %v749 = vmul.f32 %v685, 0.5
      %v750 = vmul.f32 %v686, 0.5
      %v751 = vmul.f32 %v687, 0.5
      %v752 = vmul.f32 %v688, 0.5
      %v753 = vmul.f32 %v689, 0.5
      %v754 = vmul.f32 %v690, 0.5
      %v755 = vmul.f32 %v691, 0.5
      %v756 = vmul.f32 %v692, 0.5
      %v757 = vmul.f32 %v693, 0.5
      %v758 = vmul.f32 %v694, 0.5
      %v759 = vmul.f32 %v695, 0.5
      %v760 = vmul.f32 %v696, 0.5
      %v761 = vmul.f32 %v697, 0.5
      %v762 = vmul.f32 %v698, 0.5
      %v763 = vmul.f32 %v699, 0.5
      %v764 = vmul.f32 %v700, 0.5
      %v765 = vmul.f32 %v701, 0.5
      %v766 = vmul.f32 %v702, 0.5
      %v767 = vmul.f32 %v703, 0.5
      %v768 = vmul.f32 %v704, 0.5
      %v769 = vmul.f32 %v705, 0.5
      %v770 = vmul.f32 %v706, 0.5
      %v771 = vmul.f32 %v707, 0.5
      %v772 = vmul.f32 %v708, 0.5
      %v773 = vmul.f32 %v709, 0.5
      %v774 = vmul.f32 %v710, 0.5
      %v775 = vmul.f32 %v711, 0.5
      %v776 = vmul.f32 %v712, 0.5
      %v777 = vmul.f32 %v713, 0.5
      %v778 = vmul.f32 %v714, 0.5
      %v779 = vmul.f32 %v715, 0.5
      %v780 = vmul.f32 %v716, 0.5
      %v781 = vmul.f32 %v717, 0.5
      %v782 = vmul.f32 %v718, 0.5
      %v783 = vmul.f32 %v719, 0.5
      %v784 = vmul.f32 %v720, 0.5
      %v785 = vmul.f32 %v721, 0.5
      %v786 = vmul.f32 %v722, 0.5
      %v787 = vmul.f32 %v723, 0.5
      %v788 = vmul.f32 %v724, 0.5
      %v789 = vmul.f32 %v725, 0.5
      %v790 = vmul.f32 %v726, 0.5
      %v791 = vmul.f32 %v727, 0.5
      %v792 = vmul.f32 %v728, 0.5
      %v793 = vmul.f32 %v729, 0.5
      %v794 = vmul.f32 %v730, 0.5
      %v795 = vmul.f32 %v731, 0.5
      %v796 = vmul.f32 %v732, 0.5
      %v797 = vmul.f32 %v733, 0.5
      %v798 = vmul.f32 %v734, 0.5
      %v799 = vmul.f32 %v735, 0.5
      %v800 = vmul.f32 %v736, 0.5
      %v801 = vmul.f32 %v737, 0.5
      %v802 = vsub.f32 0.5, %v738
      %v803 = vsub.f32 0.5, %v739
      %v804 = vsub.f32 0.5, %v740
      %v805 = vsub.f32 0.5, %v741
      %v806 = vsub.f32 0.5, %v742
      %v807 = vsub.f32 0.5, %v743
      %v808 = vsub.f32 0.5, %v744
      %v809 = vsub.f32 0.5, %v745
      %v810 = vsub.f32 0.5, %v746
      %v811 = vsub.f32 0.5, %v747
      %v812 = vsub.f32 0.5, %v748
      %v813 = vsub.f32 0.5, %v749
      %v814 = vsub.f32 0.5, %v750
      %v815 = vsub.f32 0.5, %v751
      %v816 = vsub.f32 0.5, %v752
      %v817 = vsub.f32 0.5, %v753
      %v818 = vsub.f32 0.5, %v754
      %v819 = vsub.f32 0.5, %v755
      %v820 = vsub.f32 0.5, %v756
      %v821 = vsub.f32 0.5, %v757
      %v822 = vsub.f32 0.5, %v758
      %v823 = vsub.f32 0.5, %v759
      %v824 = vsub.f32 0.5, %v760
      %v825 = vsub.f32 0.5, %v761
      %v826 = vsub.f32 0.5, %v762
      %v827 = vsub.f32 0.5, %v763
      %v828 = vsub.f32 0.5, %v764
      %v829 = vsub.f32 0.5, %v765
      %v830 = vsub.f32 0.5, %v766
      %v831 = vsub.f32 0.5, %v767
      %v832 = vsub.f32 0.5, %v768
      %v833 = vsub.f32 0.5, %v769
      %v834 = vsub.f32 0.5, %v770
      %v835 = vsub.f32 0.5, %v771
      %v836 = vsub.f32 0.5, %v772
      %v837 = vsub.f32 0.5, %v773
      %v838 = vsub.f32 0.5, %v774
      %v839 = vsub.f32 0.5, %v775
      %v840 = vsub.f32 0.5, %v776
      %v841 = vsub.f32 0.5, %v777
      %v842 = vsub.f32 0.5, %v778
      %v843 = vsub.f32 0.5, %v779
      %v844 = vsub.f32 0.5, %v780
      %v845 = vsub.f32 0.5, %v781
      %v846 = vsub.f32 0.5, %v782
      %v847 = vsub.f32 0.5, %v783
      %v848 = vsub.f32 0.5, %v784
      %v849 = vsub.f32 0.5, %v785
      %v850 = vsub.f32 0.5, %v786
      %v851 = vsub.f32 0.5, %v787
      %v852 = vsub.f32 0.5, %v788
      %v853 = vsub.f32 0.5, %v789
      %v854 = vsub.f32 0.5, %v790
      %v855 = vsub.f32 0.5, %v791
      %v856 = vsub.f32 0.5, %v792
      %v857 = vsub.f32 0.5, %v793
      %v858 = vsub.f32 0.5, %v794
      %v859 = vsub.f32 0.5, %v795
      %v860 = vsub.f32 0.5, %v796
      %v861 = vsub.f32 0.5, %v797
      %v862 = vsub.f32 0.5, %v798
      %v863 = vsub.f32 0.5, %v799
      %v864 = vsub.f32 0.5, %v800
      %v865 = vsub.f32 0.5, %v801
      %v866 = vld [vmem:[%s3] sm:$0xff]
      %v867 = vld [vmem:[%s3 + $0x8] sm:$0xff]
      %v868 = vld [vmem:[%s3 + $0x10] sm:$0xff]
      %v869 = vld [vmem:[%s3 + $0x18] sm:$0xff]
      %v870 = vld [vmem:[%s3 + $0x20] sm:$0xff]
      %v871 = vld [vmem:[%s3 + $0x28] sm:$0xff]
      %v872 = vld [vmem:[%s3 + $0x30] sm:$0xff]
      %v873 = vld [vmem:[%s3 + $0x38] sm:$0xff]
      %v874 = vld [vmem:[%s3 + $0x40] sm:$0xff]
      %v875 = vld [vmem:[%s3 + $0x48] sm:$0xff]
      %v876 = vld [vmem:[%s3 + $0x50] sm:$0xff]
      %v877 = vld [vmem:[%s3 + $0x58] sm:$0xff]
      %v878 = vld [vmem:[%s3 + $0x60] sm:$0xff]
      %v879 = vld [vmem:[%s3 + $0x68] sm:$0xff]
      %v880 = vld [vmem:[%s3 + $0x70] sm:$0xff]
      %v881 = vld [vmem:[%s3 + $0x78] sm:$0xff]
      %882 = vmatprep.subr.mxu0 0.0
      %883 = vmatpush1.msra.mxu0 %v881
      %884 = vmatprep.subr.mxu0 0.0
      %885 = vmatpush1.msra.mxu0 %v880
      %886 = vmatprep.subr.mxu0 0.0
      %887 = vmatpush1.msra.mxu0 %v879
      %888 = vmatprep.subr.mxu0 0.0
      %889 = vmatpush1.msra.mxu0 %v878
      %890 = vmatprep.subr.mxu0 0.0
      %891 = vmatpush1.msra.mxu0 %v877
      %892 = vmatprep.subr.mxu0 0.0
      %893 = vmatpush1.msra.mxu0 %v876
      %894 = vmatprep.subr.mxu0 0.0
      %895 = vmatpush1.msra.mxu0 %v875
      %896 = vmatprep.subr.mxu0 0.0
      %897 = vmatpush1.msra.mxu0 %v874
      %898 = vmatprep.subr.mxu0 0.0
      %899 = vmatpush1.msra.mxu0 %v873
      %900 = vmatprep.subr.mxu0 0.0
      %901 = vmatpush1.msra.mxu0 %v872
      %902 = vmatprep.subr.mxu0 0.0
      %903 = vmatpush1.msra.mxu0 %v871
      %904 = vmatprep.subr.mxu0 0.0
      %905 = vmatpush1.msra.mxu0 %v870
      %906 = vmatprep.subr.mxu0 0.0
      %907 = vmatpush1.msra.mxu0 %v869
      %908 = vmatprep.subr.mxu0 0.0
      %909 = vmatpush1.msra.mxu0 %v868
      %910 = vmatprep.subr.mxu0 0.0
      %911 = vmatpush1.msra.mxu0 %v867
      %912 = vmatprep.subr.mxu0 0.0
      %913 = vmatpush1.msra.mxu0 %v866
      %914 = vmatprep.subr.mxu0 0.0
      %915 = vmatpush2.msra.mxu0 0.0
      %916 = vmatprep.subr.mxu0 0.0
      %917 = vmatpush2.msra.mxu0 0.0
      %918 = vmatprep.subr.mxu0 0.0
      %919 = vmatpush2.msra.mxu0 0.0
      %920 = vmatprep.subr.mxu0 0.0
      %921 = vmatpush2.msra.mxu0 0.0
      %922 = vmatprep.subr.mxu0 0.0
      %923 = vmatpush2.msra.mxu0 0.0
      %924 = vmatprep.subr.mxu0 0.0
      %925 = vmatpush2.msra.mxu0 0.0
      %926 = vmatprep.subr.mxu0 0.0
      %927 = vmatpush2.msra.mxu0 0.0
      %928 = vmatprep.subr.mxu0 0.0
      %929 = vmatpush2.msra.mxu0 0.0
      %930 = vmatprep.subr.mxu0 0.0
      %931 = vmatpush2.msra.mxu0 0.0
      %932 = vmatprep.subr.mxu0 0.0
      %933 = vmatpush2.msra.mxu0 0.0
      %934 = vmatprep.subr.mxu0 0.0
      %935 = vmatpush2.msra.mxu0 0.0
      %936 = vmatprep.subr.mxu0 0.0
      %937 = vmatpush2.msra.mxu0 0.0
      %938 = vmatprep.subr.mxu0 0.0
      %939 = vmatpush2.msra.mxu0 0.0
      %940 = vmatprep.subr.mxu0 0.0
      %941 = vmatpush2.msra.mxu0 0.0
      %942 = vmatprep.subr.mxu0 0.0
      %943 = vmatpush2.msra.mxu0 0.0
      %944 = vmatprep.subr.mxu0 0.0
      %945 = vmatpush2.msra.mxu0 0.0
      %946 = vmatprep.mubr.f32.mxu0 0.0
      %947 = vmatmul.mubr.f32.gmra.mxu0 %v802
      %v948 = vpop.f32.mrf.mxu0
      %v949 = vadd.f32 0.0, %v948
      %v950 = vpop.f32.mrf.mxu0
      %951 = vmatprep.mubr.f32.mxu0 0.0
      %952 = vmatmul.mubr.f32.gmra.mxu0 %v803
      %v953 = vpop.f32.mrf.mxu0
      %v954 = vadd.f32 0.0, %v953
      %v955 = vpop.f32.mrf.mxu0
      %956 = vmatprep.mubr.f32.mxu0 0.0
      %957 = vmatmul.mubr.f32.gmra.mxu0 %v804
      %v958 = vpop.f32.mrf.mxu0
      %v959 = vadd.f32 0.0, %v958
      %v960 = vpop.f32.mrf.mxu0
      %961 = vmatprep.mubr.f32.mxu0 0.0
      %962 = vmatmul.mubr.f32.gmra.mxu0 %v805
      %v963 = vpop.f32.mrf.mxu0
      %v964 = vadd.f32 0.0, %v963
      %v965 = vpop.f32.mrf.mxu0
      %966 = vmatprep.mubr.f32.mxu0 0.0
      %967 = vmatmul.mubr.f32.gmra.mxu0 %v806
      %v968 = vpop.f32.mrf.mxu0
      %v969 = vadd.f32 0.0, %v968
      %v970 = vpop.f32.mrf.mxu0
      %971 = vmatprep.mubr.f32.mxu0 0.0
      %972 = vmatmul.mubr.f32.gmra.mxu0 %v807
      %v973 = vpop.f32.mrf.mxu0
      %v974 = vadd.f32 0.0, %v973
      %v975 = vpop.f32.mrf.mxu0
      %976 = vmatprep.mubr.f32.mxu0 0.0
      %977 = vmatmul.mubr.f32.gmra.mxu0 %v808
      %v978 = vpop.f32.mrf.mxu0
      %v979 = vadd.f32 0.0, %v978
      %v980 = vpop.f32.mrf.mxu0
      %981 = vmatprep.mubr.f32.mxu0 0.0
      %982 = vmatmul.mubr.f32.gmra.mxu0 %v809
      %v983 = vpop.f32.mrf.mxu0
      %v984 = vadd.f32 0.0, %v983
      %v985 = vpop.f32.mrf.mxu0
      %986 = vmatprep.mubr.f32.mxu0 0.0
      %987 = vmatmul.mubr.f32.gmra.mxu0 %v810
      %v988 = vpop.f32.mrf.mxu0
      %v989 = vadd.f32 0.0, %v988
      %v990 = vpop.f32.mrf.mxu0
      %991 = vmatprep.mubr.f32.mxu0 0.0
      %992 = vmatmul.mubr.f32.gmra.mxu0 %v811
      %v993 = vpop.f32.mrf.mxu0
      %v994 = vadd.f32 0.0, %v993
      %v995 = vpop.f32.mrf.mxu0
      %996 = vmatprep.mubr.f32.mxu0 0.0
      %997 = vmatmul.mubr.f32.gmra.mxu0 %v812
      %v998 = vpop.f32.mrf.mxu0
      %v999 = vadd.f32 0.0, %v998
      %v1000 = vpop.f32.mrf.mxu0
      %1001 = vmatprep.mubr.f32.mxu0 0.0
      %1002 = vmatmul.mubr.f32.gmra.mxu0 %v813
      %v1003 = vpop.f32.mrf.mxu0
      %v1004 = vadd.f32 0.0, %v1003
      %v1005 = vpop.f32.mrf.mxu0
      %1006 = vmatprep.mubr.f32.mxu0 0.0
      %1007 = vmatmul.mubr.f32.gmra.mxu0 %v814
      %v1008 = vpop.f32.mrf.mxu0
      %v1009 = vadd.f32 0.0, %v1008
      %v1010 = vpop.f32.mrf.mxu0
      %1011 = vmatprep.mubr.f32.mxu0 0.0
      %1012 = vmatmul.mubr.f32.gmra.mxu0 %v815
      %v1013 = vpop.f32.mrf.mxu0
      %v1014 = vadd.f32 0.0, %v1013
      %v1015 = vpop.f32.mrf.mxu0
      %1016 = vmatprep.mubr.f32.mxu0 0.0
      %1017 = vmatmul.mubr.f32.gmra.mxu0 %v816
      %v1018 = vpop.f32.mrf.mxu0
      %v1019 = vadd.f32 0.0, %v1018
      %v1020 = vpop.f32.mrf.mxu0
      %1021 = vmatprep.mubr.f32.mxu0 0.0
      %1022 = vmatmul.mubr.f32.gmra.mxu0 %v817
      %v1023 = vpop.f32.mrf.mxu0
      %v1024 = vadd.f32 0.0, %v1023
      %v1025 = vpop.f32.mrf.mxu0
      %1026 = vmatprep.mubr.f32.mxu0 0.0
      %1027 = vmatmul.mubr.f32.gmra.mxu0 %v818
      %v1028 = vpop.f32.mrf.mxu0
      %v1029 = vadd.f32 0.0, %v1028
      %v1030 = vpop.f32.mrf.mxu0
      %1031 = vmatprep.mubr.f32.mxu0 0.0
      %1032 = vmatmul.mubr.f32.gmra.mxu0 %v819
      %v1033 = vpop.f32.mrf.mxu0
      %v1034 = vadd.f32 0.0, %v1033
      %v1035 = vpop.f32.mrf.mxu0
      %1036 = vmatprep.mubr.f32.mxu0 0.0
      %1037 = vmatmul.mubr.f32.gmra.mxu0 %v820
      %v1038 = vpop.f32.mrf.mxu0
      %v1039 = vadd.f32 0.0, %v1038
      %v1040 = vpop.f32.mrf.mxu0
      %1041 = vmatprep.mubr.f32.mxu0 0.0
      %1042 = vmatmul.mubr.f32.gmra.mxu0 %v821
      %v1043 = vpop.f32.mrf.mxu0
      %v1044 = vadd.f32 0.0, %v1043
      %v1045 = vpop.f32.mrf.mxu0
      %1046 = vmatprep.mubr.f32.mxu0 0.0
      %1047 = vmatmul.mubr.f32.gmra.mxu0 %v822
      %v1048 = vpop.f32.mrf.mxu0
      %v1049 = vadd.f32 0.0, %v1048
      %v1050 = vpop.f32.mrf.mxu0
      %1051 = vmatprep.mubr.f32.mxu0 0.0
      %1052 = vmatmul.mubr.f32.gmra.mxu0 %v823
      %v1053 = vpop.f32.mrf.mxu0
      %v1054 = vadd.f32 0.0, %v1053
      %v1055 = vpop.f32.mrf.mxu0
      %1056 = vmatprep.mubr.f32.mxu0 0.0
      %1057 = vmatmul.mubr.f32.gmra.mxu0 %v824
      %v1058 = vpop.f32.mrf.mxu0
      %v1059 = vadd.f32 0.0, %v1058
      %v1060 = vpop.f32.mrf.mxu0
      %1061 = vmatprep.mubr.f32.mxu0 0.0
      %1062 = vmatmul.mubr.f32.gmra.mxu0 %v825
      %v1063 = vpop.f32.mrf.mxu0
      %v1064 = vadd.f32 0.0, %v1063
      %v1065 = vpop.f32.mrf.mxu0
      %1066 = vmatprep.mubr.f32.mxu0 0.0
      %1067 = vmatmul.mubr.f32.gmra.mxu0 %v826
      %v1068 = vpop.f32.mrf.mxu0
      %v1069 = vadd.f32 0.0, %v1068
      %v1070 = vpop.f32.mrf.mxu0
      %1071 = vmatprep.mubr.f32.mxu0 0.0
      %1072 = vmatmul.mubr.f32.gmra.mxu0 %v827
      %v1073 = vpop.f32.mrf.mxu0
      %v1074 = vadd.f32 0.0, %v1073
      %v1075 = vpop.f32.mrf.mxu0
      %1076 = vmatprep.mubr.f32.mxu0 0.0
      %1077 = vmatmul.mubr.f32.gmra.mxu0 %v828
      %v1078 = vpop.f32.mrf.mxu0
      %v1079 = vadd.f32 0.0, %v1078
      %v1080 = vpop.f32.mrf.mxu0
      %1081 = vmatprep.mubr.f32.mxu0 0.0
      %1082 = vmatmul.mubr.f32.gmra.mxu0 %v829
      %v1083 = vpop.f32.mrf.mxu0
      %v1084 = vadd.f32 0.0, %v1083
      %v1085 = vpop.f32.mrf.mxu0
      %1086 = vmatprep.mubr.f32.mxu0 0.0
      %1087 = vmatmul.mubr.f32.gmra.mxu0 %v830
      %v1088 = vpop.f32.mrf.mxu0
      %v1089 = vadd.f32 0.0, %v1088
      %v1090 = vpop.f32.mrf.mxu0
      %1091 = vmatprep.mubr.f32.mxu0 0.0
      %1092 = vmatmul.mubr.f32.gmra.mxu0 %v831
      %v1093 = vpop.f32.mrf.mxu0
      %v1094 = vadd.f32 0.0, %v1093
      %v1095 = vpop.f32.mrf.mxu0
      %1096 = vmatprep.mubr.f32.mxu0 0.0
      %1097 = vmatmul.mubr.f32.gmra.mxu0 %v832
      %v1098 = vpop.f32.mrf.mxu0
      %v1099 = vadd.f32 0.0, %v1098
      %v1100 = vpop.f32.mrf.mxu0
      %1101 = vmatprep.mubr.f32.mxu0 0.0
      %1102 = vmatmul.mubr.f32.gmra.mxu0 %v833
      %v1103 = vpop.f32.mrf.mxu0
      %v1104 = vadd.f32 0.0, %v1103
      %v1105 = vpop.f32.mrf.mxu0
      %1106 = vmatprep.mubr.f32.mxu0 0.0
      %1107 = vmatmul.mubr.f32.gmra.mxu0 %v834
      %v1108 = vpop.f32.mrf.mxu0
      %v1109 = vadd.f32 0.0, %v1108
      %v1110 = vpop.f32.mrf.mxu0
      %1111 = vmatprep.mubr.f32.mxu0 0.0
      %1112 = vmatmul.mubr.f32.gmra.mxu0 %v835
      %v1113 = vpop.f32.mrf.mxu0
      %v1114 = vadd.f32 0.0, %v1113
      %v1115 = vpop.f32.mrf.mxu0
      %1116 = vmatprep.mubr.f32.mxu0 0.0
      %1117 = vmatmul.mubr.f32.gmra.mxu0 %v836
      %v1118 = vpop.f32.mrf.mxu0
      %v1119 = vadd.f32 0.0, %v1118
      %v1120 = vpop.f32.mrf.mxu0
      %1121 = vmatprep.mubr.f32.mxu0 0.0
      %1122 = vmatmul.mubr.f32.gmra.mxu0 %v837
      %v1123 = vpop.f32.mrf.mxu0
      %v1124 = vadd.f32 0.0, %v1123
      %v1125 = vpop.f32.mrf.mxu0
      %1126 = vmatprep.mubr.f32.mxu0 0.0
      %1127 = vmatmul.mubr.f32.gmra.mxu0 %v838
      %v1128 = vpop.f32.mrf.mxu0
      %v1129 = vadd.f32 0.0, %v1128
      %v1130 = vpop.f32.mrf.mxu0
      %1131 = vmatprep.mubr.f32.mxu0 0.0
      %1132 = vmatmul.mubr.f32.gmra.mxu0 %v839
      %v1133 = vpop.f32.mrf.mxu0
      %v1134 = vadd.f32 0.0, %v1133
      %v1135 = vpop.f32.mrf.mxu0
      %1136 = vmatprep.mubr.f32.mxu0 0.0
      %1137 = vmatmul.mubr.f32.gmra.mxu0 %v840
      %v1138 = vpop.f32.mrf.mxu0
      %v1139 = vadd.f32 0.0, %v1138
      %v1140 = vpop.f32.mrf.mxu0
      %1141 = vmatprep.mubr.f32.mxu0 0.0
      %1142 = vmatmul.mubr.f32.gmra.mxu0 %v841
      %v1143 = vpop.f32.mrf.mxu0
      %v1144 = vadd.f32 0.0, %v1143
      %v1145 = vpop.f32.mrf.mxu0
      %1146 = vmatprep.mubr.f32.mxu0 0.0
      %1147 = vmatmul.mubr.f32.gmra.mxu0 %v842
      %v1148 = vpop.f32.mrf.mxu0
      %v1149 = vadd.f32 0.0, %v1148
      %v1150 = vpop.f32.mrf.mxu0
      %1151 = vmatprep.mubr.f32.mxu0 0.0
      %1152 = vmatmul.mubr.f32.gmra.mxu0 %v843
      %v1153 = vpop.f32.mrf.mxu0
      %v1154 = vadd.f32 0.0, %v1153
      %v1155 = vpop.f32.mrf.mxu0
      %1156 = vmatprep.mubr.f32.mxu0 0.0
      %1157 = vmatmul.mubr.f32.gmra.mxu0 %v844
      %v1158 = vpop.f32.mrf.mxu0
      %v1159 = vadd.f32 0.0, %v1158
      %v1160 = vpop.f32.mrf.mxu0
      %1161 = vmatprep.mubr.f32.mxu0 0.0
      %1162 = vmatmul.mubr.f32.gmra.mxu0 %v845
      %v1163 = vpop.f32.mrf.mxu0
      %v1164 = vadd.f32 0.0, %v1163
      %v1165 = vpop.f32.mrf.mxu0
      %1166 = vmatprep.mubr.f32.mxu0 0.0
      %1167 = vmatmul.mubr.f32.gmra.mxu0 %v846
      %v1168 = vpop.f32.mrf.mxu0
      %v1169 = vadd.f32 0.0, %v1168
      %v1170 = vpop.f32.mrf.mxu0
      %1171 = vmatprep.mubr.f32.mxu0 0.0
      %1172 = vmatmul.mubr.f32.gmra.mxu0 %v847
      %v1173 = vpop.f32.mrf.mxu0
      %v1174 = vadd.f32 0.0, %v1173
      %v1175 = vpop.f32.mrf.mxu0
      %1176 = vmatprep.mubr.f32.mxu0 0.0
      %1177 = vmatmul.mubr.f32.gmra.mxu0 %v848
      %v1178 = vpop.f32.mrf.mxu0
      %v1179 = vadd.f32 0.0, %v1178
      %v1180 = vpop.f32.mrf.mxu0
      %1181 = vmatprep.mubr.f32.mxu0 0.0
      %1182 = vmatmul.mubr.f32.gmra.mxu0 %v849
      %v1183 = vpop.f32.mrf.mxu0
      %v1184 = vadd.f32 0.0, %v1183
      %v1185 = vpop.f32.mrf.mxu0
      %1186 = vmatprep.mubr.f32.mxu0 0.0
      %1187 = vmatmul.mubr.f32.gmra.mxu0 %v850
      %v1188 = vpop.f32.mrf.mxu0
      %v1189 = vadd.f32 0.0, %v1188
      %v1190 = vpop.f32.mrf.mxu0
      %1191 = vmatprep.mubr.f32.mxu0 0.0
      %1192 = vmatmul.mubr.f32.gmra.mxu0 %v851
      %v1193 = vpop.f32.mrf.mxu0
      %v1194 = vadd.f32 0.0, %v1193
      %v1195 = vpop.f32.mrf.mxu0
      %1196 = vmatprep.mubr.f32.mxu0 0.0
      %1197 = vmatmul.mubr.f32.gmra.mxu0 %v852
      %v1198 = vpop.f32.mrf.mxu0
      %v1199 = vadd.f32 0.0, %v1198
      %v1200 = vpop.f32.mrf.mxu0
      %1201 = vmatprep.mubr.f32.mxu0 0.0
      %1202 = vmatmul.mubr.f32.gmra.mxu0 %v853
      %v1203 = vpop.f32.mrf.mxu0
      %v1204 = vadd.f32 0.0, %v1203
      %v1205 = vpop.f32.mrf.mxu0
      %1206 = vmatprep.mubr.f32.mxu0 0.0
      %1207 = vmatmul.mubr.f32.gmra.mxu0 %v854
      %v1208 = vpop.f32.mrf.mxu0
      %v1209 = vadd.f32 0.0, %v1208
      %v1210 = vpop.f32.mrf.mxu0
      %1211 = vmatprep.mubr.f32.mxu0 0.0
      %1212 = vmatmul.mubr.f32.gmra.mxu0 %v855
      %v1213 = vpop.f32.mrf.mxu0
      %v1214 = vadd.f32 0.0, %v1213
      %v1215 = vpop.f32.mrf.mxu0
      %1216 = vmatprep.mubr.f32.mxu0 0.0
      %1217 = vmatmul.mubr.f32.gmra.mxu0 %v856
      %v1218 = vpop.f32.mrf.mxu0
      %v1219 = vadd.f32 0.0, %v1218
      %v1220 = vpop.f32.mrf.mxu0
      %1221 = vmatprep.mubr.f32.mxu0 0.0
      %1222 = vmatmul.mubr.f32.gmra.mxu0 %v857
      %v1223 = vpop.f32.mrf.mxu0
      %v1224 = vadd.f32 0.0, %v1223
      %v1225 = vpop.f32.mrf.mxu0
      %1226 = vmatprep.mubr.f32.mxu0 0.0
      %1227 = vmatmul.mubr.f32.gmra.mxu0 %v858
      %v1228 = vpop.f32.mrf.mxu0
      %v1229 = vadd.f32 0.0, %v1228
      %v1230 = vpop.f32.mrf.mxu0
      %1231 = vmatprep.mubr.f32.mxu0 0.0
      %1232 = vmatmul.mubr.f32.gmra.mxu0 %v859
      %v1233 = vpop.f32.mrf.mxu0
      %v1234 = vadd.f32 0.0, %v1233
      %v1235 = vpop.f32.mrf.mxu0
      %1236 = vmatprep.mubr.f32.mxu0 0.0
      %1237 = vmatmul.mubr.f32.gmra.mxu0 %v860
      %v1238 = vpop.f32.mrf.mxu0
      %v1239 = vadd.f32 0.0, %v1238
      %v1240 = vpop.f32.mrf.mxu0
      %1241 = vmatprep.mubr.f32.mxu0 0.0
      %1242 = vmatmul.mubr.f32.gmra.mxu0 %v861
      %v1243 = vpop.f32.mrf.mxu0
      %v1244 = vadd.f32 0.0, %v1243
      %v1245 = vpop.f32.mrf.mxu0
      %1246 = vmatprep.mubr.f32.mxu0 0.0
      %1247 = vmatmul.mubr.f32.gmra.mxu0 %v862
      %v1248 = vpop.f32.mrf.mxu0
      %v1249 = vadd.f32 0.0, %v1248
      %v1250 = vpop.f32.mrf.mxu0
      %1251 = vmatprep.mubr.f32.mxu0 0.0
      %1252 = vmatmul.mubr.f32.gmra.mxu0 %v863
      %v1253 = vpop.f32.mrf.mxu0
      %v1254 = vadd.f32 0.0, %v1253
      %v1255 = vpop.f32.mrf.mxu0
      %1256 = vmatprep.mubr.f32.mxu0 0.0
      %1257 = vmatmul.mubr.f32.gmra.mxu0 %v864
      %v1258 = vpop.f32.mrf.mxu0
      %v1259 = vadd.f32 0.0, %v1258
      %v1260 = vpop.f32.mrf.mxu0
      %1261 = vmatprep.mubr.f32.mxu0 0.0
      %1262 = vmatmul.mubr.f32.gmra.mxu0 %v865
      %v1263 = vpop.f32.mrf.mxu0
      %v1264 = vadd.f32 0.0, %v1263
      %v1265 = vpop.f32.mrf.mxu0
      %1266 = vdwg.mxu0
      %1267 = vst [vmem:[%s266] sm:$0xff] %v949
      %1268 = vst [vmem:[%s266 + $0x8] sm:$0xff] %v954
      %1269 = vst [vmem:[%s266 + $0x10] sm:$0xff] %v959
      %1270 = vst [vmem:[%s266 + $0x18] sm:$0xff] %v964
      %1271 = vst [vmem:[%s266 + $0x20] sm:$0xff] %v969
      %1272 = vst [vmem:[%s266 + $0x28] sm:$0xff] %v974
      %1273 = vst [vmem:[%s266 + $0x30] sm:$0xff] %v979
      %1274 = vst [vmem:[%s266 + $0x38] sm:$0xff] %v984
      %1275 = vst [vmem:[%s266 + $0x40] sm:$0xff] %v989
      %1276 = vst [vmem:[%s266 + $0x48] sm:$0xff] %v994
      %1277 = vst [vmem:[%s266 + $0x50] sm:$0xff] %v999
      %1278 = vst [vmem:[%s266 + $0x58] sm:$0xff] %v1004
      %1279 = vst [vmem:[%s266 + $0x60] sm:$0xff] %v1009
      %1280 = vst [vmem:[%s266 + $0x68] sm:$0xff] %v1014
      %1281 = vst [vmem:[%s266 + $0x70] sm:$0xff] %v1019
      %1282 = vst [vmem:[%s266 + $0x78] sm:$0xff] %v1024
      %1283 = vst [vmem:[%s266 + $0x80] sm:$0xff] %v1029
      %1284 = vst [vmem:[%s266 + $0x88] sm:$0xff] %v1034
      %1285 = vst [vmem:[%s266 + $0x90] sm:$0xff] %v1039
      %1286 = vst [vmem:[%s266 + $0x98] sm:$0xff] %v1044
      %1287 = vst [vmem:[%s266 + $0xa0] sm:$0xff] %v1049
      %1288 = vst [vmem:[%s266 + $0xa8] sm:$0xff] %v1054
      %1289 = vst [vmem:[%s266 + $0xb0] sm:$0xff] %v1059
      %1290 = vst [vmem:[%s266 + $0xb8] sm:$0xff] %v1064
      %1291 = vst [vmem:[%s266 + $0xc0] sm:$0xff] %v1069
      %1292 = vst [vmem:[%s266 + $0xc8] sm:$0xff] %v1074
      %1293 = vst [vmem:[%s266 + $0xd0] sm:$0xff] %v1079
      %1294 = vst [vmem:[%s266 + $0xd8] sm:$0xff] %v1084
      %1295 = vst [vmem:[%s266 + $0xe0] sm:$0xff] %v1089
      %1296 = vst [vmem:[%s266 + $0xe8] sm:$0xff] %v1094
      %1297 = vst [vmem:[%s266 + $0xf0] sm:$0xff] %v1099
      %1298 = vst [vmem:[%s266 + $0xf8] sm:$0xff] %v1104
      %1299 = vst [vmem:[%s266 + $0x100] sm:$0xff] %v1109
      %1300 = vst [vmem:[%s266 + $0x108] sm:$0xff] %v1114
      %1301 = vst [vmem:[%s266 + $0x110] sm:$0xff] %v1119
      %1302 = vst [vmem:[%s266 + $0x118] sm:$0xff] %v1124
      %1303 = vst [vmem:[%s266 + $0x120] sm:$0xff] %v1129
      %1304 = vst [vmem:[%s266 + $0x128] sm:$0xff] %v1134
      %1305 = vst [vmem:[%s266 + $0x130] sm:$0xff] %v1139
      %1306 = vst [vmem:[%s266 + $0x138] sm:$0xff] %v1144
      %1307 = vst [vmem:[%s266 + $0x140] sm:$0xff] %v1149
      %1308 = vst [vmem:[%s266 + $0x148] sm:$0xff] %v1154
      %1309 = vst [vmem:[%s266 + $0x150] sm:$0xff] %v1159
      %1310 = vst [vmem:[%s266 + $0x158] sm:$0xff] %v1164
      %1311 = vst [vmem:[%s266 + $0x160] sm:$0xff] %v1169
      %1312 = vst [vmem:[%s266 + $0x168] sm:$0xff] %v1174
      %1313 = vst [vmem:[%s266 + $0x170] sm:$0xff] %v1179
      %1314 = vst [vmem:[%s266 + $0x178] sm:$0xff] %v1184
      %1315 = vst [vmem:[%s266 + $0x180] sm:$0xff] %v1189
      %1316 = vst [vmem:[%s266 + $0x188] sm:$0xff] %v1194
      %1317 = vst [vmem:[%s266 + $0x190] sm:$0xff] %v1199
      %1318 = vst [vmem:[%s266 + $0x198] sm:$0xff] %v1204
      %1319 = vst [vmem:[%s266 + $0x1a0] sm:$0xff] %v1209
      %1320 = vst [vmem:[%s266 + $0x1a8] sm:$0xff] %v1214
      %1321 = vst [vmem:[%s266 + $0x1b0] sm:$0xff] %v1219
      %1322 = vst [vmem:[%s266 + $0x1b8] sm:$0xff] %v1224
      %1323 = vst [vmem:[%s266 + $0x1c0] sm:$0xff] %v1229
      %1324 = vst [vmem:[%s266 + $0x1c8] sm:$0xff] %v1234
      %1325 = vst [vmem:[%s266 + $0x1d0] sm:$0xff] %v1239
      %1326 = vst [vmem:[%s266 + $0x1d8] sm:$0xff] %v1244
      %1327 = vst [vmem:[%s266 + $0x1e0] sm:$0xff] %v1249
      %1328 = vst [vmem:[%s266 + $0x1e8] sm:$0xff] %v1254
      %1329 = vst [vmem:[%s266 + $0x1f0] sm:$0xff] %v1259
      %1330 = vst [vmem:[%s266 + $0x1f8] sm:$0xff] %v1264
      %s1331 = smul.u32 %s18, 512
      %v1332 = vlaneseq
      %v1333 = vshrl.u32 %v1332, 7
      %v1334 = vadd.s32 %v1333, 8
      %v1335 = vadd.s32 %v1333, 16
      %v1336 = vadd.s32 %v1333, 24
      %v1337 = vadd.s32 %v1333, 32
      %v1338 = vadd.s32 %v1333, 40
      %v1339 = vadd.s32 %v1333, 48
      %v1340 = vadd.s32 %v1333, 56
      %v1341 = vadd.s32 %v1333, 64
      %v1342 = vadd.s32 %v1333, 72
      %v1343 = vadd.s32 %v1333, 80
      %v1344 = vadd.s32 %v1333, 88
      %v1345 = vadd.s32 %v1333, 96
      %v1346 = vadd.s32 %v1333, 104
      %v1347 = vadd.s32 %v1333, 112
      %v1348 = vadd.s32 %v1333, 120
      %v1349 = vadd.s32 %v1333, 128
      %v1350 = vadd.s32 %v1333, 136
      %v1351 = vadd.s32 %v1333, 144
      %v1352 = vadd.s32 %v1333, 152
      %v1353 = vadd.s32 %v1333, 160
      %v1354 = vadd.s32 %v1333, 168
      %v1355 = vadd.s32 %v1333, 176
      %v1356 = vadd.s32 %v1333, 184
      %v1357 = vadd.s32 %v1333, 192
      %v1358 = vadd.s32 %v1333, 200
      %v1359 = vadd.s32 %v1333, 208
      %v1360 = vadd.s32 %v1333, 216
      %v1361 = vadd.s32 %v1333, 224
      %v1362 = vadd.s32 %v1333, 232
      %v1363 = vadd.s32 %v1333, 240
      %v1364 = vadd.s32 %v1333, 248
      %v1365 = vadd.s32 %v1333, 256
      %v1366 = vadd.s32 %v1333, 264
      %v1367 = vadd.s32 %v1333, 272
      %v1368 = vadd.s32 %v1333, 280
      %v1369 = vadd.s32 %v1333, 288
      %v1370 = vadd.s32 %v1333, 296
      %v1371 = vadd.s32 %v1333, 304
      %v1372 = vadd.s32 %v1333, 312
      %v1373 = vadd.s32 %v1333, 320
      %v1374 = vadd.s32 %v1333, 328
      %v1375 = vadd.s32 %v1333, 336
      %v1376 = vadd.s32 %v1333, 344
      %v1377 = vadd.s32 %v1333, 352
      %v1378 = vadd.s32 %v1333, 360
      %v1379 = vadd.s32 %v1333, 368
      %v1380 = vadd.s32 %v1333, 376
      %v1381 = vadd.s32 %v1333, 384
      %v1382 = vadd.s32 %v1333, 392
      %v1383 = vadd.s32 %v1333, 400
      %v1384 = vadd.s32 %v1333, 408
      %v1385 = vadd.s32 %v1333, 416
      %v1386 = vadd.s32 %v1333, 424
      %v1387 = vadd.s32 %v1333, 432
      %v1388 = vadd.s32 %v1333, 440
      %v1389 = vadd.s32 %v1333, 448
      %v1390 = vadd.s32 %v1333, 456
      %v1391 = vadd.s32 %v1333, 464
      %v1392 = vadd.s32 %v1333, 472
      %v1393 = vadd.s32 %v1333, 480
      %v1394 = vadd.s32 %v1333, 488
      %v1395 = vadd.s32 %v1333, 496
      %v1396 = vadd.s32 %v1333, 504
      %v1397 = vstv %s1331
      %v1398 = vadd.s32 %v1397, %v1333
      %v1399 = vadd.s32 %v1397, %v1334
      %v1400 = vadd.s32 %v1397, %v1335
      %v1401 = vadd.s32 %v1397, %v1336
      %v1402 = vadd.s32 %v1397, %v1337
      %v1403 = vadd.s32 %v1397, %v1338
      %v1404 = vadd.s32 %v1397, %v1339
      %v1405 = vadd.s32 %v1397, %v1340
      %v1406 = vadd.s32 %v1397, %v1341
      %v1407 = vadd.s32 %v1397, %v1342
      %v1408 = vadd.s32 %v1397, %v1343
      %v1409 = vadd.s32 %v1397, %v1344
      %v1410 = vadd.s32 %v1397, %v1345
      %v1411 = vadd.s32 %v1397, %v1346
      %v1412 = vadd.s32 %v1397, %v1347
      %v1413 = vadd.s32 %v1397, %v1348
      %v1414 = vadd.s32 %v1397, %v1349
      %v1415 = vadd.s32 %v1397, %v1350
      %v1416 = vadd.s32 %v1397, %v1351
      %v1417 = vadd.s32 %v1397, %v1352
      %v1418 = vadd.s32 %v1397, %v1353
      %v1419 = vadd.s32 %v1397, %v1354
      %v1420 = vadd.s32 %v1397, %v1355
      %v1421 = vadd.s32 %v1397, %v1356
      %v1422 = vadd.s32 %v1397, %v1357
      %v1423 = vadd.s32 %v1397, %v1358
      %v1424 = vadd.s32 %v1397, %v1359
      %v1425 = vadd.s32 %v1397, %v1360
      %v1426 = vadd.s32 %v1397, %v1361
      %v1427 = vadd.s32 %v1397, %v1362
      %v1428 = vadd.s32 %v1397, %v1363
      %v1429 = vadd.s32 %v1397, %v1364
      %v1430 = vadd.s32 %v1397, %v1365
      %v1431 = vadd.s32 %v1397, %v1366
      %v1432 = vadd.s32 %v1397, %v1367
      %v1433 = vadd.s32 %v1397, %v1368
      %v1434 = vadd.s32 %v1397, %v1369
      %v1435 = vadd.s32 %v1397, %v1370
      %v1436 = vadd.s32 %v1397, %v1371
      %v1437 = vadd.s32 %v1397, %v1372
      %v1438 = vadd.s32 %v1397, %v1373
      %v1439 = vadd.s32 %v1397, %v1374
      %v1440 = vadd.s32 %v1397, %v1375
      %v1441 = vadd.s32 %v1397, %v1376
      %v1442 = vadd.s32 %v1397, %v1377
      %v1443 = vadd.s32 %v1397, %v1378
      %v1444 = vadd.s32 %v1397, %v1379
      %v1445 = vadd.s32 %v1397, %v1380
      %v1446 = vadd.s32 %v1397, %v1381
      %v1447 = vadd.s32 %v1397, %v1382
      %v1448 = vadd.s32 %v1397, %v1383
      %v1449 = vadd.s32 %v1397, %v1384
      %v1450 = vadd.s32 %v1397, %v1385
      %v1451 = vadd.s32 %v1397, %v1386
      %v1452 = vadd.s32 %v1397, %v1387
      %v1453 = vadd.s32 %v1397, %v1388
      %v1454 = vadd.s32 %v1397, %v1389
      %v1455 = vadd.s32 %v1397, %v1390
      %v1456 = vadd.s32 %v1397, %v1391
      %v1457 = vadd.s32 %v1397, %v1392
      %v1458 = vadd.s32 %v1397, %v1393
      %v1459 = vadd.s32 %v1397, %v1394
      %v1460 = vadd.s32 %v1397, %v1395
      %v1461 = vadd.s32 %v1397, %v1396
      %vm1462 = vcmp.lt.s32.totalorder %v1398, 1024
      %vm1463 = vcmp.lt.s32.totalorder %v1399, 1024
      %vm1464 = vcmp.lt.s32.totalorder %v1400, 1024
      %vm1465 = vcmp.lt.s32.totalorder %v1401, 1024
      %vm1466 = vcmp.lt.s32.totalorder %v1402, 1024
      %vm1467 = vcmp.lt.s32.totalorder %v1403, 1024
      %vm1468 = vcmp.lt.s32.totalorder %v1404, 1024
      %vm1469 = vcmp.lt.s32.totalorder %v1405, 1024
      %vm1470 = vcmp.lt.s32.totalorder %v1406, 1024
      %vm1471 = vcmp.lt.s32.totalorder %v1407, 1024
      %vm1472 = vcmp.lt.s32.totalorder %v1408, 1024
      %vm1473 = vcmp.lt.s32.totalorder %v1409, 1024
      %vm1474 = vcmp.lt.s32.totalorder %v1410, 1024
      %vm1475 = vcmp.lt.s32.totalorder %v1411, 1024
      %vm1476 = vcmp.lt.s32.totalorder %v1412, 1024
      %vm1477 = vcmp.lt.s32.totalorder %v1413, 1024
      %vm1478 = vcmp.lt.s32.totalorder %v1414, 1024
      %vm1479 = vcmp.lt.s32.totalorder %v1415, 1024
      %vm1480 = vcmp.lt.s32.totalorder %v1416, 1024
      %vm1481 = vcmp.lt.s32.totalorder %v1417, 1024
      %vm1482 = vcmp.lt.s32.totalorder %v1418, 1024
      %vm1483 = vcmp.lt.s32.totalorder %v1419, 1024
      %vm1484 = vcmp.lt.s32.totalorder %v1420, 1024
      %vm1485 = vcmp.lt.s32.totalorder %v1421, 1024
      %vm1486 = vcmp.lt.s32.totalorder %v1422, 1024
      %vm1487 = vcmp.lt.s32.totalorder %v1423, 1024
      %vm1488 = vcmp.lt.s32.totalorder %v1424, 1024
      %vm1489 = vcmp.lt.s32.totalorder %v1425, 1024
      %vm1490 = vcmp.lt.s32.totalorder %v1426, 1024
      %vm1491 = vcmp.lt.s32.totalorder %v1427, 1024
      %vm1492 = vcmp.lt.s32.totalorder %v1428, 1024
      %vm1493 = vcmp.lt.s32.totalorder %v1429, 1024
      %vm1494 = vcmp.lt.s32.totalorder %v1430, 1024
      %vm1495 = vcmp.lt.s32.totalorder %v1431, 1024
      %vm1496 = vcmp.lt.s32.totalorder %v1432, 1024
      %vm1497 = vcmp.lt.s32.totalorder %v1433, 1024
      %vm1498 = vcmp.lt.s32.totalorder %v1434, 1024
      %vm1499 = vcmp.lt.s32.totalorder %v1435, 1024
      %vm1500 = vcmp.lt.s32.totalorder %v1436, 1024
      %vm1501 = vcmp.lt.s32.totalorder %v1437, 1024
      %vm1502 = vcmp.lt.s32.totalorder %v1438, 1024
      %vm1503 = vcmp.lt.s32.totalorder %v1439, 1024
      %vm1504 = vcmp.lt.s32.totalorder %v1440, 1024
      %vm1505 = vcmp.lt.s32.totalorder %v1441, 1024
      %vm1506 = vcmp.lt.s32.totalorder %v1442, 1024
      %vm1507 = vcmp.lt.s32.totalorder %v1443, 1024
      %vm1508 = vcmp.lt.s32.totalorder %v1444, 1024
      %vm1509 = vcmp.lt.s32.totalorder %v1445, 1024
      %vm1510 = vcmp.lt.s32.totalorder %v1446, 1024
      %vm1511 = vcmp.lt.s32.totalorder %v1447, 1024
      %vm1512 = vcmp.lt.s32.totalorder %v1448, 1024
      %vm1513 = vcmp.lt.s32.totalorder %v1449, 1024
      %vm1514 = vcmp.lt.s32.totalorder %v1450, 1024
      %vm1515 = vcmp.lt.s32.totalorder %v1451, 1024
      %vm1516 = vcmp.lt.s32.totalorder %v1452, 1024
      %vm1517 = vcmp.lt.s32.totalorder %v1453, 1024
      %vm1518 = vcmp.lt.s32.totalorder %v1454, 1024
      %vm1519 = vcmp.lt.s32.totalorder %v1455, 1024
      %vm1520 = vcmp.lt.s32.totalorder %v1456, 1024
      %vm1521 = vcmp.lt.s32.totalorder %v1457, 1024
      %vm1522 = vcmp.lt.s32.totalorder %v1458, 1024
      %vm1523 = vcmp.lt.s32.totalorder %v1459, 1024
      %vm1524 = vcmp.lt.s32.totalorder %v1460, 1024
      %vm1525 = vcmp.lt.s32.totalorder %v1461, 1024
      %v1526 = vsel %vm1462, 1, 0
      %v1527 = vsel %vm1463, 1, 0
      %v1528 = vsel %vm1464, 1, 0
      %v1529 = vsel %vm1465, 1, 0
      %v1530 = vsel %vm1466, 1, 0
      %v1531 = vsel %vm1467, 1, 0
      %v1532 = vsel %vm1468, 1, 0
      %v1533 = vsel %vm1469, 1, 0
      %v1534 = vsel %vm1470, 1, 0
      %v1535 = vsel %vm1471, 1, 0
      %v1536 = vsel %vm1472, 1, 0
      %v1537 = vsel %vm1473, 1, 0
      %v1538 = vsel %vm1474, 1, 0
      %v1539 = vsel %vm1475, 1, 0
      %v1540 = vsel %vm1476, 1, 0
      %v1541 = vsel %vm1477, 1, 0
      %v1542 = vsel %vm1478, 1, 0
      %v1543 = vsel %vm1479, 1, 0
      %v1544 = vsel %vm1480, 1, 0
      %v1545 = vsel %vm1481, 1, 0
      %v1546 = vsel %vm1482, 1, 0
      %v1547 = vsel %vm1483, 1, 0
      %v1548 = vsel %vm1484, 1, 0
      %v1549 = vsel %vm1485, 1, 0
      %v1550 = vsel %vm1486, 1, 0
      %v1551 = vsel %vm1487, 1, 0
      %v1552 = vsel %vm1488, 1, 0
      %v1553 = vsel %vm1489, 1, 0
      %v1554 = vsel %vm1490, 1, 0
      %v1555 = vsel %vm1491, 1, 0
      %v1556 = vsel %vm1492, 1, 0
      %v1557 = vsel %vm1493, 1, 0
      %v1558 = vsel %vm1494, 1, 0
      %v1559 = vsel %vm1495, 1, 0
      %v1560 = vsel %vm1496, 1, 0
      %v1561 = vsel %vm1497, 1, 0
      %v1562 = vsel %vm1498, 1, 0
      %v1563 = vsel %vm1499, 1, 0
      %v1564 = vsel %vm1500, 1, 0
      %v1565 = vsel %vm1501, 1, 0
      %v1566 = vsel %vm1502, 1, 0
      %v1567 = vsel %vm1503, 1, 0
      %v1568 = vsel %vm1504, 1, 0
      %v1569 = vsel %vm1505, 1, 0
      %v1570 = vsel %vm1506, 1, 0
      %v1571 = vsel %vm1507, 1, 0
      %v1572 = vsel %vm1508, 1, 0
      %v1573 = vsel %vm1509, 1, 0
      %v1574 = vsel %vm1510, 1, 0
      %v1575 = vsel %vm1511, 1, 0
      %v1576 = vsel %vm1512, 1, 0
      %v1577 = vsel %vm1513, 1, 0
      %v1578 = vsel %vm1514, 1, 0
      %v1579 = vsel %vm1515, 1, 0
      %v1580 = vsel %vm1516, 1, 0
      %v1581 = vsel %vm1517, 1, 0
      %v1582 = vsel %vm1518, 1, 0
      %v1583 = vsel %vm1519, 1, 0
      %v1584 = vsel %vm1520, 1, 0
      %v1585 = vsel %vm1521, 1, 0
      %v1586 = vsel %vm1522, 1, 0
      %v1587 = vsel %vm1523, 1, 0
      %v1588 = vsel %vm1524, 1, 0
      %v1589 = vsel %vm1525, 1, 0
      %v1590 = vcvt.s32.f32 %v1526
      %v1591 = vcvt.s32.f32 %v1527
      %v1592 = vcvt.s32.f32 %v1528
      %v1593 = vcvt.s32.f32 %v1529
      %v1594 = vcvt.s32.f32 %v1530
      %v1595 = vcvt.s32.f32 %v1531
      %v1596 = vcvt.s32.f32 %v1532
      %v1597 = vcvt.s32.f32 %v1533
      %v1598 = vcvt.s32.f32 %v1534
      %v1599 = vcvt.s32.f32 %v1535
      %v1600 = vcvt.s32.f32 %v1536
      %v1601 = vcvt.s32.f32 %v1537
      %v1602 = vcvt.s32.f32 %v1538
      %v1603 = vcvt.s32.f32 %v1539
      %v1604 = vcvt.s32.f32 %v1540
      %v1605 = vcvt.s32.f32 %v1541
      %v1606 = vcvt.s32.f32 %v1542
      %v1607 = vcvt.s32.f32 %v1543
      %v1608 = vcvt.s32.f32 %v1544
      %v1609 = vcvt.s32.f32 %v1545
      %v1610 = vcvt.s32.f32 %v1546
      %v1611 = vcvt.s32.f32 %v1547
      %v1612 = vcvt.s32.f32 %v1548
      %v1613 = vcvt.s32.f32 %v1549
      %v1614 = vcvt.s32.f32 %v1550
      %v1615 = vcvt.s32.f32 %v1551
      %v1616 = vcvt.s32.f32 %v1552
      %v1617 = vcvt.s32.f32 %v1553
      %v1618 = vcvt.s32.f32 %v1554
      %v1619 = vcvt.s32.f32 %v1555
      %v1620 = vcvt.s32.f32 %v1556
      %v1621 = vcvt.s32.f32 %v1557
      %v1622 = vcvt.s32.f32 %v1558
      %v1623 = vcvt.s32.f32 %v1559
      %v1624 = vcvt.s32.f32 %v1560
      %v1625 = vcvt.s32.f32 %v1561
      %v1626 = vcvt.s32.f32 %v1562
      %v1627 = vcvt.s32.f32 %v1563
      %v1628 = vcvt.s32.f32 %v1564
      %v1629 = vcvt.s32.f32 %v1565
      %v1630 = vcvt.s32.f32 %v1566
      %v1631 = vcvt.s32.f32 %v1567
      %v1632 = vcvt.s32.f32 %v1568
      %v1633 = vcvt.s32.f32 %v1569
      %v1634 = vcvt.s32.f32 %v1570
      %v1635 = vcvt.s32.f32 %v1571
      %v1636 = vcvt.s32.f32 %v1572
      %v1637 = vcvt.s32.f32 %v1573
      %v1638 = vcvt.s32.f32 %v1574
      %v1639 = vcvt.s32.f32 %v1575
      %v1640 = vcvt.s32.f32 %v1576
      %v1641 = vcvt.s32.f32 %v1577
      %v1642 = vcvt.s32.f32 %v1578
      %v1643 = vcvt.s32.f32 %v1579
      %v1644 = vcvt.s32.f32 %v1580
      %v1645 = vcvt.s32.f32 %v1581
      %v1646 = vcvt.s32.f32 %v1582
      %v1647 = vcvt.s32.f32 %v1583
      %v1648 = vcvt.s32.f32 %v1584
      %v1649 = vcvt.s32.f32 %v1585
      %v1650 = vcvt.s32.f32 %v1586
      %v1651 = vcvt.s32.f32 %v1587
      %v1652 = vcvt.s32.f32 %v1588
      %v1653 = vcvt.s32.f32 %v1589
      %s1654 = ssub.s32 1024, %s1331
      %p1655 = scmp.gt.s32.totalorder %s1654, 0
      %s1656 = scalar_select %p1655, %s1654, 0
      %p1657 = scmp.lt.s32.totalorder %s1656, 512
      %s1658 = scalar_select %p1657, %s1656, 512
      %p1659 = scmp.gt.s32.totalorder %s1658, 1
      %s1660 = scalar_select %p1659, %s1658, 1
      %s1661 = scvt.s32.f32 %s1660
      %v1662 = vstv %s1661
      %v1663 = vrcp.pop %v1662
      %s1664 = vtos %v1663
      %v1665 = vmul.f32 %v949, %v1590
      %v1666 = vmul.f32 %v954, %v1591
      %v1667 = vmul.f32 %v959, %v1592
      %v1668 = vmul.f32 %v964, %v1593
      %v1669 = vmul.f32 %v969, %v1594
      %v1670 = vmul.f32 %v974, %v1595
      %v1671 = vmul.f32 %v979, %v1596
      %v1672 = vmul.f32 %v984, %v1597
      %v1673 = vmul.f32 %v989, %v1598
      %v1674 = vmul.f32 %v994, %v1599
      %v1675 = vmul.f32 %v999, %v1600
      %v1676 = vmul.f32 %v1004, %v1601
      %v1677 = vmul.f32 %v1009, %v1602
      %v1678 = vmul.f32 %v1014, %v1603
      %v1679 = vmul.f32 %v1019, %v1604
      %v1680 = vmul.f32 %v1024, %v1605
      %v1681 = vmul.f32 %v1029, %v1606
      %v1682 = vmul.f32 %v1034, %v1607
      %v1683 = vmul.f32 %v1039, %v1608
      %v1684 = vmul.f32 %v1044, %v1609
      %v1685 = vmul.f32 %v1049, %v1610
      %v1686 = vmul.f32 %v1054, %v1611
      %v1687 = vmul.f32 %v1059, %v1612
      %v1688 = vmul.f32 %v1064, %v1613
      %v1689 = vmul.f32 %v1069, %v1614
      %v1690 = vmul.f32 %v1074, %v1615
      %v1691 = vmul.f32 %v1079, %v1616
      %v1692 = vmul.f32 %v1084, %v1617
      %v1693 = vmul.f32 %v1089, %v1618
      %v1694 = vmul.f32 %v1094, %v1619
      %v1695 = vmul.f32 %v1099, %v1620
      %v1696 = vmul.f32 %v1104, %v1621
      %v1697 = vmul.f32 %v1109, %v1622
      %v1698 = vmul.f32 %v1114, %v1623
      %v1699 = vmul.f32 %v1119, %v1624
      %v1700 = vmul.f32 %v1124, %v1625
      %v1701 = vmul.f32 %v1129, %v1626
      %v1702 = vmul.f32 %v1134, %v1627
      %v1703 = vmul.f32 %v1139, %v1628
      %v1704 = vmul.f32 %v1144, %v1629
      %v1705 = vmul.f32 %v1149, %v1630
      %v1706 = vmul.f32 %v1154, %v1631
      %v1707 = vmul.f32 %v1159, %v1632
      %v1708 = vmul.f32 %v1164, %v1633
      %v1709 = vmul.f32 %v1169, %v1634
      %v1710 = vmul.f32 %v1174, %v1635
      %v1711 = vmul.f32 %v1179, %v1636
      %v1712 = vmul.f32 %v1184, %v1637
      %v1713 = vmul.f32 %v1189, %v1638
      %v1714 = vmul.f32 %v1194, %v1639
      %v1715 = vmul.f32 %v1199, %v1640
      %v1716 = vmul.f32 %v1204, %v1641
      %v1717 = vmul.f32 %v1209, %v1642
      %v1718 = vmul.f32 %v1214, %v1643
      %v1719 = vmul.f32 %v1219, %v1644
      %v1720 = vmul.f32 %v1224, %v1645
      %v1721 = vmul.f32 %v1229, %v1646
      %v1722 = vmul.f32 %v1234, %v1647
      %v1723 = vmul.f32 %v1239, %v1648
      %v1724 = vmul.f32 %v1244, %v1649
      %v1725 = vmul.f32 %v1249, %v1650
      %v1726 = vmul.f32 %v1254, %v1651
      %v1727 = vmul.f32 %v1259, %v1652
      %v1728 = vmul.f32 %v1264, %v1653
      %v1729 = vadd.f32 %v1665, %v1666
      %v1730 = vadd.f32 %v1729, %v1667
      %v1731 = vadd.f32 %v1730, %v1668
      %v1732 = vadd.f32 %v1731, %v1669
      %v1733 = vadd.f32 %v1732, %v1670
      %v1734 = vadd.f32 %v1733, %v1671
      %v1735 = vadd.f32 %v1734, %v1672
      %v1736 = vadd.f32 %v1735, %v1673
      %v1737 = vadd.f32 %v1736, %v1674
      %v1738 = vadd.f32 %v1737, %v1675
      %v1739 = vadd.f32 %v1738, %v1676
      %v1740 = vadd.f32 %v1739, %v1677
      %v1741 = vadd.f32 %v1740, %v1678
      %v1742 = vadd.f32 %v1741, %v1679
      %v1743 = vadd.f32 %v1742, %v1680
      %v1744 = vadd.f32 %v1743, %v1681
      %v1745 = vadd.f32 %v1744, %v1682
      %v1746 = vadd.f32 %v1745, %v1683
      %v1747 = vadd.f32 %v1746, %v1684
      %v1748 = vadd.f32 %v1747, %v1685
      %v1749 = vadd.f32 %v1748, %v1686
      %v1750 = vadd.f32 %v1749, %v1687
      %v1751 = vadd.f32 %v1750, %v1688
      %v1752 = vadd.f32 %v1751, %v1689
      %v1753 = vadd.f32 %v1752, %v1690
      %v1754 = vadd.f32 %v1753, %v1691
      %v1755 = vadd.f32 %v1754, %v1692
      %v1756 = vadd.f32 %v1755, %v1693
      %v1757 = vadd.f32 %v1756, %v1694
      %v1758 = vadd.f32 %v1757, %v1695
      %v1759 = vadd.f32 %v1758, %v1696
      %v1760 = vadd.f32 %v1759, %v1697
      %v1761 = vadd.f32 %v1760, %v1698
      %v1762 = vadd.f32 %v1761, %v1699
      %v1763 = vadd.f32 %v1762, %v1700
      %v1764 = vadd.f32 %v1763, %v1701
      %v1765 = vadd.f32 %v1764, %v1702
      %v1766 = vadd.f32 %v1765, %v1703
      %v1767 = vadd.f32 %v1766, %v1704
      %v1768 = vadd.f32 %v1767, %v1705
      %v1769 = vadd.f32 %v1768, %v1706
      %v1770 = vadd.f32 %v1769, %v1707
      %v1771 = vadd.f32 %v1770, %v1708
      %v1772 = vadd.f32 %v1771, %v1709
      %v1773 = vadd.f32 %v1772, %v1710
      %v1774 = vadd.f32 %v1773, %v1711
      %v1775 = vadd.f32 %v1774, %v1712
      %v1776 = vadd.f32 %v1775, %v1713
      %v1777 = vadd.f32 %v1776, %v1714
      %v1778 = vadd.f32 %v1777, %v1715
      %v1779 = vadd.f32 %v1778, %v1716
      %v1780 = vadd.f32 %v1779, %v1717
      %v1781 = vadd.f32 %v1780, %v1718
      %v1782 = vadd.f32 %v1781, %v1719
      %v1783 = vadd.f32 %v1782, %v1720
      %v1784 = vadd.f32 %v1783, %v1721
      %v1785 = vadd.f32 %v1784, %v1722
      %v1786 = vadd.f32 %v1785, %v1723
      %v1787 = vadd.f32 %v1786, %v1724
      %v1788 = vadd.f32 %v1787, %v1725
      %v1789 = vadd.f32 %v1788, %v1726
      %v1790 = vadd.f32 %v1789, %v1727
      %v1791 = vadd.f32 %v1790, %v1728
      %v1792 = vrot.slane %v1791, 4
      %v1793 = vadd.f32 %v1791, %v1792
      %v1794 = vrot.slane %v1793, 2
      %v1795 = vadd.f32 %v1793, %v1794
      %v1796 = vrot.slane %v1795, 1
      %v1797 = vadd.f32 %v1795, %v1796
      %v1798 = vstv %s1664
      %v1799 = vmul.f32 %v1797, %v1798
      %v1800 = vsub.f32 %v949, %v1799
      %v1801 = vsub.f32 %v954, %v1799
      %v1802 = vsub.f32 %v959, %v1799
      %v1803 = vsub.f32 %v964, %v1799
      %v1804 = vsub.f32 %v969, %v1799
      %v1805 = vsub.f32 %v974, %v1799
      %v1806 = vsub.f32 %v979, %v1799
      %v1807 = vsub.f32 %v984, %v1799
      %v1808 = vsub.f32 %v989, %v1799
      %v1809 = vsub.f32 %v994, %v1799
      %v1810 = vsub.f32 %v999, %v1799
      %v1811 = vsub.f32 %v1004, %v1799
      %v1812 = vsub.f32 %v1009, %v1799
      %v1813 = vsub.f32 %v1014, %v1799
      %v1814 = vsub.f32 %v1019, %v1799
      %v1815 = vsub.f32 %v1024, %v1799
      %v1816 = vsub.f32 %v1029, %v1799
      %v1817 = vsub.f32 %v1034, %v1799
      %v1818 = vsub.f32 %v1039, %v1799
      %v1819 = vsub.f32 %v1044, %v1799
      %v1820 = vsub.f32 %v1049, %v1799
      %v1821 = vsub.f32 %v1054, %v1799
      %v1822 = vsub.f32 %v1059, %v1799
      %v1823 = vsub.f32 %v1064, %v1799
      %v1824 = vsub.f32 %v1069, %v1799
      %v1825 = vsub.f32 %v1074, %v1799
      %v1826 = vsub.f32 %v1079, %v1799
      %v1827 = vsub.f32 %v1084, %v1799
      %v1828 = vsub.f32 %v1089, %v1799
      %v1829 = vsub.f32 %v1094, %v1799
      %v1830 = vsub.f32 %v1099, %v1799
      %v1831 = vsub.f32 %v1104, %v1799
      %v1832 = vsub.f32 %v1109, %v1799
      %v1833 = vsub.f32 %v1114, %v1799
      %v1834 = vsub.f32 %v1119, %v1799
      %v1835 = vsub.f32 %v1124, %v1799
      %v1836 = vsub.f32 %v1129, %v1799
      %v1837 = vsub.f32 %v1134, %v1799
      %v1838 = vsub.f32 %v1139, %v1799
      %v1839 = vsub.f32 %v1144, %v1799
      %v1840 = vsub.f32 %v1149, %v1799
      %v1841 = vsub.f32 %v1154, %v1799
      %v1842 = vsub.f32 %v1159, %v1799
      %v1843 = vsub.f32 %v1164, %v1799
      %v1844 = vsub.f32 %v1169, %v1799
      %v1845 = vsub.f32 %v1174, %v1799
      %v1846 = vsub.f32 %v1179, %v1799
      %v1847 = vsub.f32 %v1184, %v1799
      %v1848 = vsub.f32 %v1189, %v1799
      %v1849 = vsub.f32 %v1194, %v1799
      %v1850 = vsub.f32 %v1199, %v1799
      %v1851 = vsub.f32 %v1204, %v1799
      %v1852 = vsub.f32 %v1209, %v1799
      %v1853 = vsub.f32 %v1214, %v1799
      %v1854 = vsub.f32 %v1219, %v1799
      %v1855 = vsub.f32 %v1224, %v1799
      %v1856 = vsub.f32 %v1229, %v1799
      %v1857 = vsub.f32 %v1234, %v1799
      %v1858 = vsub.f32 %v1239, %v1799
      %v1859 = vsub.f32 %v1244, %v1799
      %v1860 = vsub.f32 %v1249, %v1799
      %v1861 = vsub.f32 %v1254, %v1799
      %v1862 = vsub.f32 %v1259, %v1799
      %v1863 = vsub.f32 %v1264, %v1799
      %v1864 = vmul.f32 %v1800, %v1590
      %v1865 = vmul.f32 %v1801, %v1591
      %v1866 = vmul.f32 %v1802, %v1592
      %v1867 = vmul.f32 %v1803, %v1593
      %v1868 = vmul.f32 %v1804, %v1594
      %v1869 = vmul.f32 %v1805, %v1595
      %v1870 = vmul.f32 %v1806, %v1596
      %v1871 = vmul.f32 %v1807, %v1597
      %v1872 = vmul.f32 %v1808, %v1598
      %v1873 = vmul.f32 %v1809, %v1599
      %v1874 = vmul.f32 %v1810, %v1600
      %v1875 = vmul.f32 %v1811, %v1601
      %v1876 = vmul.f32 %v1812, %v1602
      %v1877 = vmul.f32 %v1813, %v1603
      %v1878 = vmul.f32 %v1814, %v1604
      %v1879 = vmul.f32 %v1815, %v1605
      %v1880 = vmul.f32 %v1816, %v1606
      %v1881 = vmul.f32 %v1817, %v1607
      %v1882 = vmul.f32 %v1818, %v1608
      %v1883 = vmul.f32 %v1819, %v1609
      %v1884 = vmul.f32 %v1820, %v1610
      %v1885 = vmul.f32 %v1821, %v1611
      %v1886 = vmul.f32 %v1822, %v1612
      %v1887 = vmul.f32 %v1823, %v1613
      %v1888 = vmul.f32 %v1824, %v1614
      %v1889 = vmul.f32 %v1825, %v1615
      %v1890 = vmul.f32 %v1826, %v1616
      %v1891 = vmul.f32 %v1827, %v1617
      %v1892 = vmul.f32 %v1828, %v1618
      %v1893 = vmul.f32 %v1829, %v1619
      %v1894 = vmul.f32 %v1830, %v1620
      %v1895 = vmul.f32 %v1831, %v1621
      %v1896 = vmul.f32 %v1832, %v1622
      %v1897 = vmul.f32 %v1833, %v1623
      %v1898 = vmul.f32 %v1834, %v1624
      %v1899 = vmul.f32 %v1835, %v1625
      %v1900 = vmul.f32 %v1836, %v1626
      %v1901 = vmul.f32 %v1837, %v1627
      %v1902 = vmul.f32 %v1838, %v1628
      %v1903 = vmul.f32 %v1839, %v1629
      %v1904 = vmul.f32 %v1840, %v1630
      %v1905 = vmul.f32 %v1841, %v1631
      %v1906 = vmul.f32 %v1842, %v1632
      %v1907 = vmul.f32 %v1843, %v1633
      %v1908 = vmul.f32 %v1844, %v1634
      %v1909 = vmul.f32 %v1845, %v1635
      %v1910 = vmul.f32 %v1846, %v1636
      %v1911 = vmul.f32 %v1847, %v1637
      %v1912 = vmul.f32 %v1848, %v1638
      %v1913 = vmul.f32 %v1849, %v1639
      %v1914 = vmul.f32 %v1850, %v1640
      %v1915 = vmul.f32 %v1851, %v1641
      %v1916 = vmul.f32 %v1852, %v1642
      %v1917 = vmul.f32 %v1853, %v1643
      %v1918 = vmul.f32 %v1854, %v1644
      %v1919 = vmul.f32 %v1855, %v1645
      %v1920 = vmul.f32 %v1856, %v1646
      %v1921 = vmul.f32 %v1857, %v1647
      %v1922 = vmul.f32 %v1858, %v1648
      %v1923 = vmul.f32 %v1859, %v1649
      %v1924 = vmul.f32 %v1860, %v1650
      %v1925 = vmul.f32 %v1861, %v1651
      %v1926 = vmul.f32 %v1862, %v1652
      %v1927 = vmul.f32 %v1863, %v1653
      %v1928 = vmul.f32 %v1864, %v1864
      %v1929 = vmul.f32 %v1865, %v1865
      %v1930 = vmul.f32 %v1866, %v1866
      %v1931 = vmul.f32 %v1867, %v1867
      %v1932 = vmul.f32 %v1868, %v1868
      %v1933 = vmul.f32 %v1869, %v1869
      %v1934 = vmul.f32 %v1870, %v1870
      %v1935 = vmul.f32 %v1871, %v1871
      %v1936 = vmul.f32 %v1872, %v1872
      %v1937 = vmul.f32 %v1873, %v1873
      %v1938 = vmul.f32 %v1874, %v1874
      %v1939 = vmul.f32 %v1875, %v1875
      %v1940 = vmul.f32 %v1876, %v1876
      %v1941 = vmul.f32 %v1877, %v1877
      %v1942 = vmul.f32 %v1878, %v1878
      %v1943 = vmul.f32 %v1879, %v1879
      %v1944 = vmul.f32 %v1880, %v1880
      %v1945 = vmul.f32 %v1881, %v1881
      %v1946 = vmul.f32 %v1882, %v1882
      %v1947 = vmul.f32 %v1883, %v1883
      %v1948 = vmul.f32 %v1884, %v1884
      %v1949 = vmul.f32 %v1885, %v1885
      %v1950 = vmul.f32 %v1886, %v1886
      %v1951 = vmul.f32 %v1887, %v1887
      %v1952 = vmul.f32 %v1888, %v1888
      %v1953 = vmul.f32 %v1889, %v1889
      %v1954 = vmul.f32 %v1890, %v1890
      %v1955 = vmul.f32 %v1891, %v1891
      %v1956 = vmul.f32 %v1892, %v1892
      %v1957 = vmul.f32 %v1893, %v1893
      %v1958 = vmul.f32 %v1894, %v1894
      %v1959 = vmul.f32 %v1895, %v1895
      %v1960 = vmul.f32 %v1896, %v1896
      %v1961 = vmul.f32 %v1897, %v1897
      %v1962 = vmul.f32 %v1898, %v1898
      %v1963 = vmul.f32 %v1899, %v1899
      %v1964 = vmul.f32 %v1900, %v1900
      %v1965 = vmul.f32 %v1901, %v1901
      %v1966 = vmul.f32 %v1902, %v1902
      %v1967 = vmul.f32 %v1903, %v1903
      %v1968 = vmul.f32 %v1904, %v1904
      %v1969 = vmul.f32 %v1905, %v1905
      %v1970 = vmul.f32 %v1906, %v1906
      %v1971 = vmul.f32 %v1907, %v1907
      %v1972 = vmul.f32 %v1908, %v1908
      %v1973 = vmul.f32 %v1909, %v1909
      %v1974 = vmul.f32 %v1910, %v1910
      %v1975 = vmul.f32 %v1911, %v1911
      %v1976 = vmul.f32 %v1912, %v1912
      %v1977 = vmul.f32 %v1913, %v1913
      %v1978 = vmul.f32 %v1914, %v1914
      %v1979 = vmul.f32 %v1915, %v1915
      %v1980 = vmul.f32 %v1916, %v1916
      %v1981 = vmul.f32 %v1917, %v1917
      %v1982 = vmul.f32 %v1918, %v1918
      %v1983 = vmul.f32 %v1919, %v1919
      %v1984 = vmul.f32 %v1920, %v1920
      %v1985 = vmul.f32 %v1921, %v1921
      %v1986 = vmul.f32 %v1922, %v1922
      %v1987 = vmul.f32 %v1923, %v1923
      %v1988 = vmul.f32 %v1924, %v1924
      %v1989 = vmul.f32 %v1925, %v1925
      %v1990 = vmul.f32 %v1926, %v1926
      %v1991 = vmul.f32 %v1927, %v1927
      %v1992 = vadd.f32 %v1928, %v1929
      %v1993 = vadd.f32 %v1992, %v1930
      %v1994 = vadd.f32 %v1993, %v1931
      %v1995 = vadd.f32 %v1994, %v1932
      %v1996 = vadd.f32 %v1995, %v1933
      %v1997 = vadd.f32 %v1996, %v1934
      %v1998 = vadd.f32 %v1997, %v1935
      %v1999 = vadd.f32 %v1998, %v1936
      %v2000 = vadd.f32 %v1999, %v1937
      %v2001 = vadd.f32 %v2000, %v1938
      %v2002 = vadd.f32 %v2001, %v1939
      %v2003 = vadd.f32 %v2002, %v1940
      %v2004 = vadd.f32 %v2003, %v1941
      %v2005 = vadd.f32 %v2004, %v1942
      %v2006 = vadd.f32 %v2005, %v1943
      %v2007 = vadd.f32 %v2006, %v1944
      %v2008 = vadd.f32 %v2007, %v1945
      %v2009 = vadd.f32 %v2008, %v1946
      %v2010 = vadd.f32 %v2009, %v1947
      %v2011 = vadd.f32 %v2010, %v1948
      %v2012 = vadd.f32 %v2011, %v1949
      %v2013 = vadd.f32 %v2012, %v1950
      %v2014 = vadd.f32 %v2013, %v1951
      %v2015 = vadd.f32 %v2014, %v1952
      %v2016 = vadd.f32 %v2015, %v1953
      %v2017 = vadd.f32 %v2016, %v1954
      %v2018 = vadd.f32 %v2017, %v1955
      %v2019 = vadd.f32 %v2018, %v1956
      %v2020 = vadd.f32 %v2019, %v1957
      %v2021 = vadd.f32 %v2020, %v1958
      %v2022 = vadd.f32 %v2021, %v1959
      %v2023 = vadd.f32 %v2022, %v1960
      %v2024 = vadd.f32 %v2023, %v1961
      %v2025 = vadd.f32 %v2024, %v1962
      %v2026 = vadd.f32 %v2025, %v1963
      %v2027 = vadd.f32 %v2026, %v1964
      %v2028 = vadd.f32 %v2027, %v1965
      %v2029 = vadd.f32 %v2028, %v1966
      %v2030 = vadd.f32 %v2029, %v1967
      %v2031 = vadd.f32 %v2030, %v1968
      %v2032 = vadd.f32 %v2031, %v1969
      %v2033 = vadd.f32 %v2032, %v1970
      %v2034 = vadd.f32 %v2033, %v1971
      %v2035 = vadd.f32 %v2034, %v1972
      %v2036 = vadd.f32 %v2035, %v1973
      %v2037 = vadd.f32 %v2036, %v1974
      %v2038 = vadd.f32 %v2037, %v1975
      %v2039 = vadd.f32 %v2038, %v1976
      %v2040 = vadd.f32 %v2039, %v1977
      %v2041 = vadd.f32 %v2040, %v1978
      %v2042 = vadd.f32 %v2041, %v1979
      %v2043 = vadd.f32 %v2042, %v1980
      %v2044 = vadd.f32 %v2043, %v1981
      %v2045 = vadd.f32 %v2044, %v1982
      %v2046 = vadd.f32 %v2045, %v1983
      %v2047 = vadd.f32 %v2046, %v1984
      %v2048 = vadd.f32 %v2047, %v1985
      %v2049 = vadd.f32 %v2048, %v1986
      %v2050 = vadd.f32 %v2049, %v1987
      %v2051 = vadd.f32 %v2050, %v1988
      %v2052 = vadd.f32 %v2051, %v1989
      %v2053 = vadd.f32 %v2052, %v1990
      %v2054 = vadd.f32 %v2053, %v1991
      %v2055 = vrot.slane %v2054, 4
      %v2056 = vadd.f32 %v2054, %v2055
      %v2057 = vrot.slane %v2056, 2
      %v2058 = vadd.f32 %v2056, %v2057
      %v2059 = vrot.slane %v2058, 1
      %v2060 = vadd.f32 %v2058, %v2059
      %2061 = vst [vmem:[%s271] sm:$0xff] %v1797
      %2062 = vst [vmem:[%s275] sm:$0xff] %v2060
      %s2063 = smul.u32 64, %s18
      %p2064 = scmp.lt.s32.totalorder %s2063, 127
      %s2065 = scalar_select %p2064, %s2063, 127
      %s2066 = smul.addr %s2065, 8
      %s2067 = scalar_lea.vmem %s4, %s2066
      %p2068 = scmp.lt.s32.totalorder %s18, 1
      %s2069 = scalar_select %p2068, %s18, 1
      %s2070 = smul.addr %s2069, 8
      %s2071 = scalar_lea.vmem %s5, %s2070
      %p2072 = scmp.lt.s32.totalorder %s18, 1
      %s2073 = scalar_select %p2072, %s18, 1
      %s2074 = smul.addr %s2073, 8
      %s2075 = scalar_lea.vmem %s6, %s2074
      // Predicated region
      $region37: #{mtawegnn_forward.2} parent=35 // pred_check
        %p2076 = pneg %p125
      $region38: #{mtawegnn_forward.2} parent=35 // pred_check_branch
        %2078 = sbr.rel (%p2076) target = $region40
      $region39: #{mtawegnn_forward.2} parent=35 // pred_region
        %s2079 = smul.u32 64, %s18
      $region40: #{mtawegnn_forward.2} parent=35 // pred_fallthru
        _
      // Predicated region
      $region41: #{mtawegnn_forward.2} parent=35 // pred_check
        %p2080 = pneg %p151
      $region42: #{mtawegnn_forward.2} parent=35 // pred_check_branch
        %2082 = sbr.rel (%p2080) target = $region44
      $region43: #{mtawegnn_forward.2} parent=35 // pred_region
        _
      $region44: #{mtawegnn_forward.2} parent=35 // pred_fallthru
        _
      // Predicated region
      $region45: #{mtawegnn_forward.2} parent=35 // pred_check
        %p2083 = pneg %p177
      $region46: #{mtawegnn_forward.2} parent=35 // pred_check_branch
        %2085 = sbr.rel (%p2083) target = $region48
      $region47: #{mtawegnn_forward.2} parent=35 // pred_region
        _
      $region48: #{mtawegnn_forward.2} parent=35 // pred_fallthru
        _
    $region36: #{mtawegnn_forward.2} parent=5 // pred_fallthru
      _
    %p2086 = scmp.le.s32.totalorder 2, %s13
    // Predicated region
    $region49: #{mtawegnn_forward.2} parent=5 // pred_check
      %p2087 = pneg %p2086
    $region50: #{mtawegnn_forward.2} parent=5 // pred_check_branch
      %2089 = sbr.rel (%p2087) target = $region52
    $region51: #{mtawegnn_forward.2} parent=5 // pred_region
      %s2090 = ssub.s32 %s13, 2
      // Predicated region
      $region53: #{mtawegnn_forward.2} parent=51 // pred_check
        %p2091 = pneg %p131
      $region54: #{mtawegnn_forward.2} parent=51 // pred_check_branch
        %2093 = sbr.rel (%p2091) target = $region56
      $region55: #{mtawegnn_forward.2} parent=51 // pred_region
        %s2094 = smul.u32 64, %s19
        %p2095 = scmp.lt.s32.totalorder %s2094, 127
        %s2096 = scalar_select %p2095, %s2094, 127
        %s2097 = smul.addr %s2096, 8
        %s2098 = scalar_lea.vmem %s4, %s2097
      $region56: #{mtawegnn_forward.2} parent=51 // pred_fallthru
        _
      // Predicated region
      $region57: #{mtawegnn_forward.2} parent=51 // pred_check
        %p2099 = pneg %p157
      $region58: #{mtawegnn_forward.2} parent=51 // pred_check_branch
        %2101 = sbr.rel (%p2099) target = $region60
      $region59: #{mtawegnn_forward.2} parent=51 // pred_region
        %p2102 = scmp.lt.s32.totalorder %s19, 1
        %s2103 = scalar_select %p2102, %s19, 1
        %s2104 = smul.addr %s2103, 8
        %s2105 = scalar_lea.vmem %s5, %s2104
      $region60: #{mtawegnn_forward.2} parent=51 // pred_fallthru
        _
      // Predicated region
      $region61: #{mtawegnn_forward.2} parent=51 // pred_check
        %p2106 = pneg %p183
      $region62: #{mtawegnn_forward.2} parent=51 // pred_check_branch
        %2108 = sbr.rel (%p2106) target = $region64
      $region63: #{mtawegnn_forward.2} parent=51 // pred_region
        %p2109 = scmp.lt.s32.totalorder %s19, 1
        %s2110 = scalar_select %p2109, %s19, 1
        %s2111 = smul.addr %s2110, 8
        %s2112 = scalar_lea.vmem %s6, %s2111
      $region64: #{mtawegnn_forward.2} parent=51 // pred_fallthru
        _
    $region52: #{mtawegnn_forward.2} parent=5 // pred_fallthru
      _
  $region6: #{mtawegnn_forward.2} parent=0 // loop_footer
    %s17 = sadd.s32 1, %s13
  $region7: #{mtawegnn_forward.2} parent=0 // loop_footer_branch
    %12 = sbr.rel target = $region3
  $region8: #{mtawegnn_forward.2} parent=0 // loop_exit
    _

// kernel: mtawegnn_forward.3
$region0: #{mtawegnn_forward.3}
  #allocation0 [shape = 'u32[]', space=smem, size = 0x4, offset = 0x4, fixed_abs, tag = 'smem constant byte address 0x4 - core index']
  #allocation1 [shape = 'u32[144,128]{1,0:T(1,128)}', space=vmem, size = 0x12000, scoped, tag = 'internal scratch']
  %s0 = inlined_call_operand.vmem [shape: f32[1024,128], index: 0, kind: input, shape index: {}]
  %s1 = inlined_call_operand.vmem [shape: f32[128,128], index: 1, kind: input, shape index: {}]
  %s2 = inlined_call_operand.vmem [shape: f32[1,128], index: 2, kind: input, shape index: {}]
  %s3 = inlined_call_operand.vmem [shape: f32[128,128], index: 3, kind: input, shape index: {}]
  %s4 = inlined_call_operand.vmem [shape: f32[1,128], index: 4, kind: input, shape index: {}]
  %s5 = inlined_call_operand.vmem [shape: f32[128,128], index: 5, kind: input, shape index: {}]
  %s6 = inlined_call_operand.vmem [shape: f32[1,128], index: 6, kind: input, shape index: {}]
  %s7 = inlined_call_operand.vmem [shape: f32[1024,1], index: 7, kind: output, shape index: {}]
  %s8 = sld [smem:[#allocation0]]
  $region61: #{mtawegnn_forward.3} parent=0
    _
  %s10 = ssub.s32 1, %s8
  %s11 = scalar_select 0, %s10, %s8
  loop: start=0, step=1, limit=4
  $region2: #{mtawegnn_forward.3} parent=0 // loop_pre_header
    _
  $region3: #{mtawegnn_forward.3} parent=0 // loop_header
    %s13 = sphi 0, %s17
    %p14 = scmp.ge.s32.totalorder %s13, 4
    %s23 = sphi 0, %s25
    %s26 = sphi 0, %s23
    %s27 = sphi 0, %s26
    %s43 = sphi 0, %s27
    %s47 = sphi 0, %s47
    %s49 = sphi 0, %s47
    %s50 = sphi 0, %s49
    %s64 = sphi 0, %s50
    %s68 = sphi 0, %s68
    %s70 = sphi 0, %s68
    %s71 = sphi 0, %s70
    %s85 = sphi 0, %s71
    %s89 = sphi 0, %s89
    %s91 = sphi 0, %s89
    %s92 = sphi 0, %s91
    %s106 = sphi 0, %s92
    %s110 = sphi 0, %s110
    %s112 = sphi 0, %s110
    %s113 = sphi 0, %s112
    %s127 = sphi 0, %s113
    %s131 = sphi 0, %s131
    %s133 = sphi 0, %s131
    %s134 = sphi 0, %s133
    %s148 = sphi 0, %s134
    %s152 = sphi 0, %s152
    %s154 = sphi 0, %s152
    %s155 = sphi 0, %s154
    %s169 = sphi 0, %s155
    %s175 = sphi 0, %s177
    %s178 = sphi 0, %s175
    %s179 = sphi 0, %s178
    %s195 = sphi 0, %s179
  $region4: #{mtawegnn_forward.3} parent=0 // loop_header_branch
    %16 = sbr.rel (%p14) target = $region8
  $region5: #{mtawegnn_forward.3} parent=0 // loop_body
    %s18 = ssub.s32 %s13, 1
    %s19 = ssub.s32 %s13, 2
    %s20 = sadd.s32 %s13, 1
    %s21 = ssub.s32 %s13, %s20
    %p22 = scmp.eq.s32.totalorder %s21, 0
    %s24 = sadd.s32 %s23, 1
    %s25 = scalar_select %p22, %s23, %s24
    %p28 = pneg %p22
    %p29 = scmp.eq.s32.totalorder %s13, 1
    %p30 = por %p28, %p29
    %p31 = scmp.ne.s32.totalorder %s23, %s26
    %p32 = scmp.eq.s32.totalorder %s13, 0
    %p33 = por %p31, %p32
    %p34 = scmp.ne.s32.totalorder %s23, %s26
    %p35 = scmp.eq.s32.totalorder %s18, 1
    %p36 = por %p34, %p35
    %p37 = scmp.ne.s32.totalorder %s26, %s27
    %p38 = scmp.eq.s32.totalorder %s18, 0
    %p39 = por %p37, %p38
    %p40 = scmp.ne.s32.totalorder %s26, %s27
    %p41 = scmp.eq.s32.totalorder %s19, 1
    %p42 = por %p40, %p41
    %p44 = scmp.ne.s32.totalorder %s27, %s43
    %p45 = scmp.eq.s32.totalorder %s19, 0
    %p46 = por %p44, %p45
    %s48 = sadd.s32 %s47, 1
    %p51 = scmp.eq.s32.totalorder %s13, 1
    %p52 = scmp.ne.s32.totalorder %s47, %s49
    %p53 = scmp.eq.s32.totalorder %s13, 0
    %p54 = por %p52, %p53
    %p55 = scmp.ne.s32.totalorder %s47, %s49
    %p56 = scmp.eq.s32.totalorder %s18, 1
    %p57 = por %p55, %p56
    %p58 = scmp.ne.s32.totalorder %s49, %s50
    %p59 = scmp.eq.s32.totalorder %s18, 0
    %p60 = por %p58, %p59
    %p61 = scmp.ne.s32.totalorder %s49, %s50
    %p62 = scmp.eq.s32.totalorder %s19, 1
    %p63 = por %p61, %p62
    %p65 = scmp.ne.s32.totalorder %s50, %s64
    %p66 = scmp.eq.s32.totalorder %s19, 0
    %p67 = por %p65, %p66
    %s69 = sadd.s32 %s68, 1
    %p72 = scmp.eq.s32.totalorder %s13, 1
    %p73 = scmp.ne.s32.totalorder %s68, %s70
    %p74 = scmp.eq.s32.totalorder %s13, 0
    %p75 = por %p73, %p74
    %p76 = scmp.ne.s32.totalorder %s68, %s70
    %p77 = scmp.eq.s32.totalorder %s18, 1
    %p78 = por %p76, %p77
    %p79 = scmp.ne.s32.totalorder %s70, %s71
    %p80 = scmp.eq.s32.totalorder %s18, 0
    %p81 = por %p79, %p80
    %p82 = scmp.ne.s32.totalorder %s70, %s71
    %p83 = scmp.eq.s32.totalorder %s19, 1
    %p84 = por %p82, %p83
    %p86 = scmp.ne.s32.totalorder %s71, %s85
    %p87 = scmp.eq.s32.totalorder %s19, 0
    %p88 = por %p86, %p87
    %s90 = sadd.s32 %s89, 1
    %p93 = scmp.eq.s32.totalorder %s13, 1
    %p94 = scmp.ne.s32.totalorder %s89, %s91
    %p95 = scmp.eq.s32.totalorder %s13, 0
    %p96 = por %p94, %p95
    %p97 = scmp.ne.s32.totalorder %s89, %s91
    %p98 = scmp.eq.s32.totalorder %s18, 1
    %p99 = por %p97, %p98
    %p100 = scmp.ne.s32.totalorder %s91, %s92
    %p101 = scmp.eq.s32.totalorder %s18, 0
    %p102 = por %p100, %p101
    %p103 = scmp.ne.s32.totalorder %s91, %s92
    %p104 = scmp.eq.s32.totalorder %s19, 1
    %p105 = por %p103, %p104
    %p107 = scmp.ne.s32.totalorder %s92, %s106
    %p108 = scmp.eq.s32.totalorder %s19, 0
    %p109 = por %p107, %p108
    %s111 = sadd.s32 %s110, 1
    %p114 = scmp.eq.s32.totalorder %s13, 1
    %p115 = scmp.ne.s32.totalorder %s110, %s112
    %p116 = scmp.eq.s32.totalorder %s13, 0
    %p117 = por %p115, %p116
    %p118 = scmp.ne.s32.totalorder %s110, %s112
    %p119 = scmp.eq.s32.totalorder %s18, 1
    %p120 = por %p118, %p119
    %p121 = scmp.ne.s32.totalorder %s112, %s113
    %p122 = scmp.eq.s32.totalorder %s18, 0
    %p123 = por %p121, %p122
    %p124 = scmp.ne.s32.totalorder %s112, %s113
    %p125 = scmp.eq.s32.totalorder %s19, 1
    %p126 = por %p124, %p125
    %p128 = scmp.ne.s32.totalorder %s113, %s127
    %p129 = scmp.eq.s32.totalorder %s19, 0
    %p130 = por %p128, %p129
    %s132 = sadd.s32 %s131, 1
    %p135 = scmp.eq.s32.totalorder %s13, 1
    %p136 = scmp.ne.s32.totalorder %s131, %s133
    %p137 = scmp.eq.s32.totalorder %s13, 0
    %p138 = por %p136, %p137
    %p139 = scmp.ne.s32.totalorder %s131, %s133
    %p140 = scmp.eq.s32.totalorder %s18, 1
    %p141 = por %p139, %p140
    %p142 = scmp.ne.s32.totalorder %s133, %s134
    %p143 = scmp.eq.s32.totalorder %s18, 0
    %p144 = por %p142, %p143
    %p145 = scmp.ne.s32.totalorder %s133, %s134
    %p146 = scmp.eq.s32.totalorder %s19, 1
    %p147 = por %p145, %p146
    %p149 = scmp.ne.s32.totalorder %s134, %s148
    %p150 = scmp.eq.s32.totalorder %s19, 0
    %p151 = por %p149, %p150
    %s153 = sadd.s32 %s152, 1
    %p156 = scmp.eq.s32.totalorder %s13, 1
    %p157 = scmp.ne.s32.totalorder %s152, %s154
    %p158 = scmp.eq.s32.totalorder %s13, 0
    %p159 = por %p157, %p158
    %p160 = scmp.ne.s32.totalorder %s152, %s154
    %p161 = scmp.eq.s32.totalorder %s18, 1
    %p162 = por %p160, %p161
    %p163 = scmp.ne.s32.totalorder %s154, %s155
    %p164 = scmp.eq.s32.totalorder %s18, 0
    %p165 = por %p163, %p164
    %p166 = scmp.ne.s32.totalorder %s154, %s155
    %p167 = scmp.eq.s32.totalorder %s19, 1
    %p168 = por %p166, %p167
    %p170 = scmp.ne.s32.totalorder %s155, %s169
    %p171 = scmp.eq.s32.totalorder %s19, 0
    %p172 = por %p170, %p171
    %s173 = ssub.s32 %s13, %s20
    %p174 = scmp.eq.s32.totalorder %s173, 0
    %s176 = sadd.s32 %s175, 1
    %s177 = scalar_select %p174, %s175, %s176
    %p180 = pneg %p174
    %p181 = scmp.eq.s32.totalorder %s13, 1
    %p182 = por %p180, %p181
    %p183 = scmp.ne.s32.totalorder %s175, %s178
    %p184 = scmp.eq.s32.totalorder %s13, 0
    %p185 = por %p183, %p184
    %p186 = scmp.ne.s32.totalorder %s175, %s178
    %p187 = scmp.eq.s32.totalorder %s18, 1
    %p188 = por %p186, %p187
    %p189 = scmp.ne.s32.totalorder %s178, %s179
    %p190 = scmp.eq.s32.totalorder %s18, 0
    %p191 = por %p189, %p190
    %p192 = scmp.ne.s32.totalorder %s178, %s179
    %p193 = scmp.eq.s32.totalorder %s19, 1
    %p194 = por %p192, %p193
    %p196 = scmp.ne.s32.totalorder %s179, %s195
    %p197 = scmp.eq.s32.totalorder %s19, 0
    %p198 = por %p196, %p197
    %p199 = scmp.le.s32.totalorder 1, %s13
    %p200 = scmp.lt.s32.totalorder %s13, 3
    %p201 = pnand %p199, %p200
    %p202 = pneg %p201
    // Predicated region
    $region9: #{mtawegnn_forward.3} parent=5 // pred_check
      _
    $region10: #{mtawegnn_forward.3} parent=5 // pred_check_branch
      %204 = sbr.rel (%p201) target = $region12
    $region11: #{mtawegnn_forward.3} parent=5 // pred_region
      %s205 = ssub.s32 %s13, 1
      // Predicated region
      $region13: #{mtawegnn_forward.3} parent=11 // pred_check
        %p206 = pneg %p60
      $region14: #{mtawegnn_forward.3} parent=11 // pred_check_branch
        %208 = sbr.rel (%p206) target = $region16
      $region15: #{mtawegnn_forward.3} parent=11 // pred_region
        _
      $region16: #{mtawegnn_forward.3} parent=11 // pred_fallthru
        _
      // Predicated region
      $region17: #{mtawegnn_forward.3} parent=11 // pred_check
        %p209 = pneg %p81
      $region18: #{mtawegnn_forward.3} parent=11 // pred_check_branch
        %211 = sbr.rel (%p209) target = $region20
      $region19: #{mtawegnn_forward.3} parent=11 // pred_region
        _
      $region20: #{mtawegnn_forward.3} parent=11 // pred_fallthru
        _
      // Predicated region
      $region21: #{mtawegnn_forward.3} parent=11 // pred_check
        %p212 = pneg %p102
      $region22: #{mtawegnn_forward.3} parent=11 // pred_check_branch
        %214 = sbr.rel (%p212) target = $region24
      $region23: #{mtawegnn_forward.3} parent=11 // pred_region
        _
      $region24: #{mtawegnn_forward.3} parent=11 // pred_fallthru
        _
      // Predicated region
      $region25: #{mtawegnn_forward.3} parent=11 // pred_check
        %p215 = pneg %p123
      $region26: #{mtawegnn_forward.3} parent=11 // pred_check_branch
        %217 = sbr.rel (%p215) target = $region28
      $region27: #{mtawegnn_forward.3} parent=11 // pred_region
        _
      $region28: #{mtawegnn_forward.3} parent=11 // pred_fallthru
        _
      // Predicated region
      $region29: #{mtawegnn_forward.3} parent=11 // pred_check
        %p218 = pneg %p144
      $region30: #{mtawegnn_forward.3} parent=11 // pred_check_branch
        %220 = sbr.rel (%p218) target = $region32
      $region31: #{mtawegnn_forward.3} parent=11 // pred_region
        _
      $region32: #{mtawegnn_forward.3} parent=11 // pred_fallthru
        _
      // Predicated region
      $region33: #{mtawegnn_forward.3} parent=11 // pred_check
        %p221 = pneg %p165
      $region34: #{mtawegnn_forward.3} parent=11 // pred_check_branch
        %223 = sbr.rel (%p221) target = $region36
      $region35: #{mtawegnn_forward.3} parent=11 // pred_region
        _
      $region36: #{mtawegnn_forward.3} parent=11 // pred_fallthru
        _
    $region12: #{mtawegnn_forward.3} parent=5 // pred_fallthru
      _
    %p224 = scmp.lt.s32.totalorder %s13, 2
    // Predicated region
    $region37: #{mtawegnn_forward.3} parent=5 // pred_check
      %p225 = pneg %p224
    $region38: #{mtawegnn_forward.3} parent=5 // pred_check_branch
      %227 = sbr.rel (%p225) target = $region40
    $region39: #{mtawegnn_forward.3} parent=5 // pred_region
      // Predicated region
      $region41: #{mtawegnn_forward.3} parent=39 // pred_check
        %p228 = pneg %p33
      $region42: #{mtawegnn_forward.3} parent=39 // pred_check_branch
        %230 = sbr.rel (%p228) target = $region44
      $region43: #{mtawegnn_forward.3} parent=39 // pred_region
        %s231 = smul.u32 64, %s13
        %p232 = scmp.lt.s32.totalorder %s231, 127
        %s233 = scalar_select %p232, %s231, 127
        %s234 = smul.addr %s233, 8
        %s235 = scalar_lea.vmem %s0, %s234
        %s236 = smul.u32 64, %s13
      $region44: #{mtawegnn_forward.3} parent=39 // pred_fallthru
        _
    $region40: #{mtawegnn_forward.3} parent=5 // pred_fallthru
      _
    %p237 = scmp.le.s32.totalorder 1, %s13
    %p238 = scmp.lt.s32.totalorder %s13, 3
    %p239 = pnand %p237, %p238
    %p240 = pneg %p239
    // Predicated region
    $region45: #{mtawegnn_forward.3} parent=5 // pred_check
      _
    $region46: #{mtawegnn_forward.3} parent=5 // pred_check_branch
      %242 = sbr.rel (%p239) target = $region48
    $region47: #{mtawegnn_forward.3} parent=5 // pred_region
      %s243 = ssub.s32 %s13, 1
      %s244 = smul.u32 64, %s18
      %p245 = scmp.lt.s32.totalorder %s244, 127
      %s246 = scalar_select %p245, %s244, 127
      %s247 = smul.addr %s246, 8
      %s248 = scalar_lea.vmem %s0, %s247
      %p249 = pneg %p39
      %p250 = pneg %p36
      %p251 = pneg %p60
      %p252 = pneg %p57
      %p253 = pneg %p81
      %p254 = pneg %p78
      %p255 = pneg %p102
      %p256 = pneg %p99
      %p257 = pneg %p123
      %p258 = pneg %p120
      %p259 = pneg %p144
      %p260 = pneg %p141
      %p261 = pneg %p165
      %p262 = pneg %p162
      %p263 = pneg %p191
      %p264 = pneg %p188
      %s265 = smul.u32 64, %s18
      %p266 = scmp.lt.s32.totalorder %s265, 127
      %s267 = scalar_select %p266, %s265, 127
      %s268 = smul.addr %s267, 8
      %s269 = scalar_lea.vmem %s7, %s268
      %s270 = smul.u32 64, %s18
      %p271 = scmp.lt.s32.totalorder %s270, 127
      %s272 = scalar_select %p271, %s270, 127
      %s273 = smul.addr %s272, 8
      %s274 = scalar_lea.vmem %s0, %s273
      %s275 = smul.u32 64, %s18
      %s276 = smul.u32 64, %s18
      %p277 = scmp.lt.s32.totalorder %s276, 127
      %s278 = scalar_select %p277, %s276, 127
      %s279 = smul.addr %s278, 8
      %s280 = scalar_lea.vmem %s7, %s279
      %s281 = smul.u32 64, %s18
      %v282 = vld [vmem:[%s274] sm:$0xff]
      %v283 = vld [vmem:[%s274 + $0x8] sm:$0xff]
      %v284 = vld [vmem:[%s274 + $0x10] sm:$0xff]
      %v285 = vld [vmem:[%s274 + $0x18] sm:$0xff]
      %v286 = vld [vmem:[%s274 + $0x20] sm:$0xff]
      %v287 = vld [vmem:[%s274 + $0x28] sm:$0xff]
      %v288 = vld [vmem:[%s274 + $0x30] sm:$0xff]
      %v289 = vld [vmem:[%s274 + $0x38] sm:$0xff]
      %v290 = vld [vmem:[%s274 + $0x40] sm:$0xff]
      %v291 = vld [vmem:[%s274 + $0x48] sm:$0xff]
      %v292 = vld [vmem:[%s274 + $0x50] sm:$0xff]
      %v293 = vld [vmem:[%s274 + $0x58] sm:$0xff]
      %v294 = vld [vmem:[%s274 + $0x60] sm:$0xff]
      %v295 = vld [vmem:[%s274 + $0x68] sm:$0xff]
      %v296 = vld [vmem:[%s274 + $0x70] sm:$0xff]
      %v297 = vld [vmem:[%s274 + $0x78] sm:$0xff]
      %v298 = vld [vmem:[%s274 + $0x80] sm:$0xff]
      %v299 = vld [vmem:[%s274 + $0x88] sm:$0xff]
      %v300 = vld [vmem:[%s274 + $0x90] sm:$0xff]
      %v301 = vld [vmem:[%s274 + $0x98] sm:$0xff]
      %v302 = vld [vmem:[%s274 + $0xa0] sm:$0xff]
      %v303 = vld [vmem:[%s274 + $0xa8] sm:$0xff]
      %v304 = vld [vmem:[%s274 + $0xb0] sm:$0xff]
      %v305 = vld [vmem:[%s274 + $0xb8] sm:$0xff]
      %v306 = vld [vmem:[%s274 + $0xc0] sm:$0xff]
      %v307 = vld [vmem:[%s274 + $0xc8] sm:$0xff]
      %v308 = vld [vmem:[%s274 + $0xd0] sm:$0xff]
      %v309 = vld [vmem:[%s274 + $0xd8] sm:$0xff]
      %v310 = vld [vmem:[%s274 + $0xe0] sm:$0xff]
      %v311 = vld [vmem:[%s274 + $0xe8] sm:$0xff]
      %v312 = vld [vmem:[%s274 + $0xf0] sm:$0xff]
      %v313 = vld [vmem:[%s274 + $0xf8] sm:$0xff]
      %v314 = vld [vmem:[%s274 + $0x100] sm:$0xff]
      %v315 = vld [vmem:[%s274 + $0x108] sm:$0xff]
      %v316 = vld [vmem:[%s274 + $0x110] sm:$0xff]
      %v317 = vld [vmem:[%s274 + $0x118] sm:$0xff]
      %v318 = vld [vmem:[%s274 + $0x120] sm:$0xff]
      %v319 = vld [vmem:[%s274 + $0x128] sm:$0xff]
      %v320 = vld [vmem:[%s274 + $0x130] sm:$0xff]
      %v321 = vld [vmem:[%s274 + $0x138] sm:$0xff]
      %v322 = vld [vmem:[%s274 + $0x140] sm:$0xff]
      %v323 = vld [vmem:[%s274 + $0x148] sm:$0xff]
      %v324 = vld [vmem:[%s274 + $0x150] sm:$0xff]
      %v325 = vld [vmem:[%s274 + $0x158] sm:$0xff]
      %v326 = vld [vmem:[%s274 + $0x160] sm:$0xff]
      %v327 = vld [vmem:[%s274 + $0x168] sm:$0xff]
      %v328 = vld [vmem:[%s274 + $0x170] sm:$0xff]
      %v329 = vld [vmem:[%s274 + $0x178] sm:$0xff]
      %v330 = vld [vmem:[%s274 + $0x180] sm:$0xff]
      %v331 = vld [vmem:[%s274 + $0x188] sm:$0xff]
      %v332 = vld [vmem:[%s274 + $0x190] sm:$0xff]
      %v333 = vld [vmem:[%s274 + $0x198] sm:$0xff]
      %v334 = vld [vmem:[%s274 + $0x1a0] sm:$0xff]
      %v335 = vld [vmem:[%s274 + $0x1a8] sm:$0xff]
      %v336 = vld [vmem:[%s274 + $0x1b0] sm:$0xff]
      %v337 = vld [vmem:[%s274 + $0x1b8] sm:$0xff]
      %v338 = vld [vmem:[%s274 + $0x1c0] sm:$0xff]
      %v339 = vld [vmem:[%s274 + $0x1c8] sm:$0xff]
      %v340 = vld [vmem:[%s274 + $0x1d0] sm:$0xff]
      %v341 = vld [vmem:[%s274 + $0x1d8] sm:$0xff]
      %v342 = vld [vmem:[%s274 + $0x1e0] sm:$0xff]
      %v343 = vld [vmem:[%s274 + $0x1e8] sm:$0xff]
      %v344 = vld [vmem:[%s274 + $0x1f0] sm:$0xff]
      %v345 = vld [vmem:[%s274 + $0x1f8] sm:$0xff]
      %v346 = vld [vmem:[%s1] sm:$0xff]
      %v347 = vld [vmem:[%s1 + $0x8] sm:$0xff]
      %v348 = vld [vmem:[%s1 + $0x10] sm:$0xff]
      %v349 = vld [vmem:[%s1 + $0x18] sm:$0xff]
      %v350 = vld [vmem:[%s1 + $0x20] sm:$0xff]
      %v351 = vld [vmem:[%s1 + $0x28] sm:$0xff]
      %v352 = vld [vmem:[%s1 + $0x30] sm:$0xff]
      %v353 = vld [vmem:[%s1 + $0x38] sm:$0xff]
      %v354 = vld [vmem:[%s1 + $0x40] sm:$0xff]
      %v355 = vld [vmem:[%s1 + $0x48] sm:$0xff]
      %v356 = vld [vmem:[%s1 + $0x50] sm:$0xff]
      %v357 = vld [vmem:[%s1 + $0x58] sm:$0xff]
      %v358 = vld [vmem:[%s1 + $0x60] sm:$0xff]
      %v359 = vld [vmem:[%s1 + $0x68] sm:$0xff]
      %v360 = vld [vmem:[%s1 + $0x70] sm:$0xff]
      %v361 = vld [vmem:[%s1 + $0x78] sm:$0xff]
      %v362 = vld [vmem:[%s2] sm:$0x1]
      %v364 = vlaneseq
      %v365 = vshrl.u32 %v364, 7
      %v366 = vsub.s32 0, %v365
      %v367 = vrot.slane %v362, %v366
      %369 = vmatprep.subr.mxu0 0.0
      %370 = vmatpush1.msra.mxu0 %v361
      %371 = vmatprep.subr.mxu0 0.0
      %372 = vmatpush1.msra.mxu0 %v360
      %373 = vmatprep.subr.mxu0 0.0
      %374 = vmatpush1.msra.mxu0 %v359
      %375 = vmatprep.subr.mxu0 0.0
      %376 = vmatpush1.msra.mxu0 %v358
      %377 = vmatprep.subr.mxu0 0.0
      %378 = vmatpush1.msra.mxu0 %v357
      %379 = vmatprep.subr.mxu0 0.0
      %380 = vmatpush1.msra.mxu0 %v356
      %381 = vmatprep.subr.mxu0 0.0
      %382 = vmatpush1.msra.mxu0 %v355
      %383 = vmatprep.subr.mxu0 0.0
      %384 = vmatpush1.msra.mxu0 %v354
      %385 = vmatprep.subr.mxu0 0.0
      %386 = vmatpush1.msra.mxu0 %v353
      %387 = vmatprep.subr.mxu0 0.0
      %388 = vmatpush1.msra.mxu0 %v352
      %389 = vmatprep.subr.mxu0 0.0
      %390 = vmatpush1.msra.mxu0 %v351
      %391 = vmatprep.subr.mxu0 0.0
      %392 = vmatpush1.msra.mxu0 %v350
      %393 = vmatprep.subr.mxu0 0.0
      %394 = vmatpush1.msra.mxu0 %v349
      %395 = vmatprep.subr.mxu0 0.0
      %396 = vmatpush1.msra.mxu0 %v348
      %397 = vmatprep.subr.mxu0 0.0
      %398 = vmatpush1.msra.mxu0 %v347
      %399 = vmatprep.subr.mxu0 0.0
      %400 = vmatpush1.msra.mxu0 %v346
      %401 = vmatprep.subr.mxu0 0.0
      %402 = vmatpush2.msra.mxu0 0.0
      %403 = vmatprep.subr.mxu0 0.0
      %404 = vmatpush2.msra.mxu0 0.0
      %405 = vmatprep.subr.mxu0 0.0
      %406 = vmatpush2.msra.mxu0 0.0
      %407 = vmatprep.subr.mxu0 0.0
      %408 = vmatpush2.msra.mxu0 0.0
      %409 = vmatprep.subr.mxu0 0.0
      %410 = vmatpush2.msra.mxu0 0.0
      %411 = vmatprep.subr.mxu0 0.0
      %412 = vmatpush2.msra.mxu0 0.0
      %413 = vmatprep.subr.mxu0 0.0
      %414 = vmatpush2.msra.mxu0 0.0
      %415 = vmatprep.subr.mxu0 0.0
      %416 = vmatpush2.msra.mxu0 0.0
      %417 = vmatprep.subr.mxu0 0.0
      %418 = vmatpush2.msra.mxu0 0.0
      %419 = vmatprep.subr.mxu0 0.0
      %420 = vmatpush2.msra.mxu0 0.0
      %421 = vmatprep.subr.mxu0 0.0
      %422 = vmatpush2.msra.mxu0 0.0
      %423 = vmatprep.subr.mxu0 0.0
      %424 = vmatpush2.msra.mxu0 0.0
      %425 = vmatprep.subr.mxu0 0.0
      %426 = vmatpush2.msra.mxu0 0.0
      %427 = vmatprep.subr.mxu0 0.0
      %428 = vmatpush2.msra.mxu0 0.0
      %429 = vmatprep.subr.mxu0 0.0
      %430 = vmatpush2.msra.mxu0 0.0
      %431 = vmatprep.subr.mxu0 0.0
      %432 = vmatpush2.msra.mxu0 0.0
      %433 = vmatprep.mubr.f32.mxu0 0.0
      %434 = vmatmul.mubr.f32.gmra.mxu0 %v282
      %v435 = vpop.f32.mrf.mxu0
      %v436 = vadd.f32 %v367, %v435
      %v437 = vpop.f32.mrf.mxu0
      %438 = vmatprep.mubr.f32.mxu0 0.0
      %439 = vmatmul.mubr.f32.gmra.mxu0 %v283
      %v440 = vpop.f32.mrf.mxu0
      %v441 = vadd.f32 %v367, %v440
      %v442 = vpop.f32.mrf.mxu0
      %443 = vmatprep.mubr.f32.mxu0 0.0
      %444 = vmatmul.mubr.f32.gmra.mxu0 %v284
      %v445 = vpop.f32.mrf.mxu0
      %v446 = vadd.f32 %v367, %v445
      %v447 = vpop.f32.mrf.mxu0
      %448 = vmatprep.mubr.f32.mxu0 0.0
      %449 = vmatmul.mubr.f32.gmra.mxu0 %v285
      %v450 = vpop.f32.mrf.mxu0
      %v451 = vadd.f32 %v367, %v450
      %v452 = vpop.f32.mrf.mxu0
      %453 = vmatprep.mubr.f32.mxu0 0.0
      %454 = vmatmul.mubr.f32.gmra.mxu0 %v286
      %v455 = vpop.f32.mrf.mxu0
      %v456 = vadd.f32 %v367, %v455
      %v457 = vpop.f32.mrf.mxu0
      %458 = vmatprep.mubr.f32.mxu0 0.0
      %459 = vmatmul.mubr.f32.gmra.mxu0 %v287
      %v460 = vpop.f32.mrf.mxu0
      %v461 = vadd.f32 %v367, %v460
      %v462 = vpop.f32.mrf.mxu0
      %463 = vmatprep.mubr.f32.mxu0 0.0
      %464 = vmatmul.mubr.f32.gmra.mxu0 %v288
      %v465 = vpop.f32.mrf.mxu0
      %v466 = vadd.f32 %v367, %v465
      %v467 = vpop.f32.mrf.mxu0
      %468 = vmatprep.mubr.f32.mxu0 0.0
      %469 = vmatmul.mubr.f32.gmra.mxu0 %v289
      %v470 = vpop.f32.mrf.mxu0
      %v471 = vadd.f32 %v367, %v470
      %v472 = vpop.f32.mrf.mxu0
      %473 = vmatprep.mubr.f32.mxu0 0.0
      %474 = vmatmul.mubr.f32.gmra.mxu0 %v290
      %v475 = vpop.f32.mrf.mxu0
      %v476 = vadd.f32 %v367, %v475
      %v477 = vpop.f32.mrf.mxu0
      %478 = vmatprep.mubr.f32.mxu0 0.0
      %479 = vmatmul.mubr.f32.gmra.mxu0 %v291
      %v480 = vpop.f32.mrf.mxu0
      %v481 = vadd.f32 %v367, %v480
      %v482 = vpop.f32.mrf.mxu0
      %483 = vmatprep.mubr.f32.mxu0 0.0
      %484 = vmatmul.mubr.f32.gmra.mxu0 %v292
      %v485 = vpop.f32.mrf.mxu0
      %v486 = vadd.f32 %v367, %v485
      %v487 = vpop.f32.mrf.mxu0
      %488 = vmatprep.mubr.f32.mxu0 0.0
      %489 = vmatmul.mubr.f32.gmra.mxu0 %v293
      %v490 = vpop.f32.mrf.mxu0
      %v491 = vadd.f32 %v367, %v490
      %v492 = vpop.f32.mrf.mxu0
      %493 = vmatprep.mubr.f32.mxu0 0.0
      %494 = vmatmul.mubr.f32.gmra.mxu0 %v294
      %v495 = vpop.f32.mrf.mxu0
      %v496 = vadd.f32 %v367, %v495
      %v497 = vpop.f32.mrf.mxu0
      %498 = vmatprep.mubr.f32.mxu0 0.0
      %499 = vmatmul.mubr.f32.gmra.mxu0 %v295
      %v500 = vpop.f32.mrf.mxu0
      %v501 = vadd.f32 %v367, %v500
      %v502 = vpop.f32.mrf.mxu0
      %503 = vmatprep.mubr.f32.mxu0 0.0
      %504 = vmatmul.mubr.f32.gmra.mxu0 %v296
      %v505 = vpop.f32.mrf.mxu0
      %v506 = vadd.f32 %v367, %v505
      %v507 = vpop.f32.mrf.mxu0
      %508 = vmatprep.mubr.f32.mxu0 0.0
      %509 = vmatmul.mubr.f32.gmra.mxu0 %v297
      %v510 = vpop.f32.mrf.mxu0
      %v511 = vadd.f32 %v367, %v510
      %v512 = vpop.f32.mrf.mxu0
      %513 = vmatprep.mubr.f32.mxu0 0.0
      %514 = vmatmul.mubr.f32.gmra.mxu0 %v298
      %v515 = vpop.f32.mrf.mxu0
      %v516 = vadd.f32 %v367, %v515
      %v517 = vpop.f32.mrf.mxu0
      %518 = vmatprep.mubr.f32.mxu0 0.0
      %519 = vmatmul.mubr.f32.gmra.mxu0 %v299
      %v520 = vpop.f32.mrf.mxu0
      %v521 = vadd.f32 %v367, %v520
      %v522 = vpop.f32.mrf.mxu0
      %523 = vmatprep.mubr.f32.mxu0 0.0
      %524 = vmatmul.mubr.f32.gmra.mxu0 %v300
      %v525 = vpop.f32.mrf.mxu0
      %v526 = vadd.f32 %v367, %v525
      %v527 = vpop.f32.mrf.mxu0
      %528 = vmatprep.mubr.f32.mxu0 0.0
      %529 = vmatmul.mubr.f32.gmra.mxu0 %v301
      %v530 = vpop.f32.mrf.mxu0
      %v531 = vadd.f32 %v367, %v530
      %v532 = vpop.f32.mrf.mxu0
      %533 = vmatprep.mubr.f32.mxu0 0.0
      %534 = vmatmul.mubr.f32.gmra.mxu0 %v302
      %v535 = vpop.f32.mrf.mxu0
      %v536 = vadd.f32 %v367, %v535
      %v537 = vpop.f32.mrf.mxu0
      %538 = vmatprep.mubr.f32.mxu0 0.0
      %539 = vmatmul.mubr.f32.gmra.mxu0 %v303
      %v540 = vpop.f32.mrf.mxu0
      %v541 = vadd.f32 %v367, %v540
      %v542 = vpop.f32.mrf.mxu0
      %543 = vmatprep.mubr.f32.mxu0 0.0
      %544 = vmatmul.mubr.f32.gmra.mxu0 %v304
      %v545 = vpop.f32.mrf.mxu0
      %v546 = vadd.f32 %v367, %v545
      %v547 = vpop.f32.mrf.mxu0
      %548 = vmatprep.mubr.f32.mxu0 0.0
      %549 = vmatmul.mubr.f32.gmra.mxu0 %v305
      %v550 = vpop.f32.mrf.mxu0
      %v551 = vadd.f32 %v367, %v550
      %v552 = vpop.f32.mrf.mxu0
      %553 = vmatprep.mubr.f32.mxu0 0.0
      %554 = vmatmul.mubr.f32.gmra.mxu0 %v306
      %v555 = vpop.f32.mrf.mxu0
      %v556 = vadd.f32 %v367, %v555
      %v557 = vpop.f32.mrf.mxu0
      %558 = vmatprep.mubr.f32.mxu0 0.0
      %559 = vmatmul.mubr.f32.gmra.mxu0 %v307
      %v560 = vpop.f32.mrf.mxu0
      %v561 = vadd.f32 %v367, %v560
      %v562 = vpop.f32.mrf.mxu0
      %563 = vmatprep.mubr.f32.mxu0 0.0
      %564 = vmatmul.mubr.f32.gmra.mxu0 %v308
      %v565 = vpop.f32.mrf.mxu0
      %v566 = vadd.f32 %v367, %v565
      %v567 = vpop.f32.mrf.mxu0
      %568 = vmatprep.mubr.f32.mxu0 0.0
      %569 = vmatmul.mubr.f32.gmra.mxu0 %v309
      %v570 = vpop.f32.mrf.mxu0
      %v571 = vadd.f32 %v367, %v570
      %v572 = vpop.f32.mrf.mxu0
      %573 = vmatprep.mubr.f32.mxu0 0.0
      %574 = vmatmul.mubr.f32.gmra.mxu0 %v310
      %v575 = vpop.f32.mrf.mxu0
      %v576 = vadd.f32 %v367, %v575
      %v577 = vpop.f32.mrf.mxu0
      %578 = vmatprep.mubr.f32.mxu0 0.0
      %579 = vmatmul.mubr.f32.gmra.mxu0 %v311
      %v580 = vpop.f32.mrf.mxu0
      %v581 = vadd.f32 %v367, %v580
      %v582 = vpop.f32.mrf.mxu0
      %583 = vmatprep.mubr.f32.mxu0 0.0
      %584 = vmatmul.mubr.f32.gmra.mxu0 %v312
      %v585 = vpop.f32.mrf.mxu0
      %v586 = vadd.f32 %v367, %v585
      %v587 = vpop.f32.mrf.mxu0
      %588 = vmatprep.mubr.f32.mxu0 0.0
      %589 = vmatmul.mubr.f32.gmra.mxu0 %v313
      %v590 = vpop.f32.mrf.mxu0
      %v591 = vadd.f32 %v367, %v590
      %v592 = vpop.f32.mrf.mxu0
      %593 = vmatprep.mubr.f32.mxu0 0.0
      %594 = vmatmul.mubr.f32.gmra.mxu0 %v314
      %v595 = vpop.f32.mrf.mxu0
      %v596 = vadd.f32 %v367, %v595
      %v597 = vpop.f32.mrf.mxu0
      %598 = vmatprep.mubr.f32.mxu0 0.0
      %599 = vmatmul.mubr.f32.gmra.mxu0 %v315
      %v600 = vpop.f32.mrf.mxu0
      %v601 = vadd.f32 %v367, %v600
      %v602 = vpop.f32.mrf.mxu0
      %603 = vmatprep.mubr.f32.mxu0 0.0
      %604 = vmatmul.mubr.f32.gmra.mxu0 %v316
      %v605 = vpop.f32.mrf.mxu0
      %v606 = vadd.f32 %v367, %v605
      %v607 = vpop.f32.mrf.mxu0
      %608 = vmatprep.mubr.f32.mxu0 0.0
      %609 = vmatmul.mubr.f32.gmra.mxu0 %v317
      %v610 = vpop.f32.mrf.mxu0
      %v611 = vadd.f32 %v367, %v610
      %v612 = vpop.f32.mrf.mxu0
      %613 = vmatprep.mubr.f32.mxu0 0.0
      %614 = vmatmul.mubr.f32.gmra.mxu0 %v318
      %v615 = vpop.f32.mrf.mxu0
      %v616 = vadd.f32 %v367, %v615
      %v617 = vpop.f32.mrf.mxu0
      %618 = vmatprep.mubr.f32.mxu0 0.0
      %619 = vmatmul.mubr.f32.gmra.mxu0 %v319
      %v620 = vpop.f32.mrf.mxu0
      %v621 = vadd.f32 %v367, %v620
      %v622 = vpop.f32.mrf.mxu0
      %623 = vmatprep.mubr.f32.mxu0 0.0
      %624 = vmatmul.mubr.f32.gmra.mxu0 %v320
      %v625 = vpop.f32.mrf.mxu0
      %v626 = vadd.f32 %v367, %v625
      %v627 = vpop.f32.mrf.mxu0
      %628 = vmatprep.mubr.f32.mxu0 0.0
      %629 = vmatmul.mubr.f32.gmra.mxu0 %v321
      %v630 = vpop.f32.mrf.mxu0
      %v631 = vadd.f32 %v367, %v630
      %v632 = vpop.f32.mrf.mxu0
      %633 = vmatprep.mubr.f32.mxu0 0.0
      %634 = vmatmul.mubr.f32.gmra.mxu0 %v322
      %v635 = vpop.f32.mrf.mxu0
      %v636 = vadd.f32 %v367, %v635
      %v637 = vpop.f32.mrf.mxu0
      %638 = vmatprep.mubr.f32.mxu0 0.0
      %639 = vmatmul.mubr.f32.gmra.mxu0 %v323
      %v640 = vpop.f32.mrf.mxu0
      %v641 = vadd.f32 %v367, %v640
      %v642 = vpop.f32.mrf.mxu0
      %643 = vmatprep.mubr.f32.mxu0 0.0
      %644 = vmatmul.mubr.f32.gmra.mxu0 %v324
      %v645 = vpop.f32.mrf.mxu0
      %v646 = vadd.f32 %v367, %v645
      %v647 = vpop.f32.mrf.mxu0
      %648 = vmatprep.mubr.f32.mxu0 0.0
      %649 = vmatmul.mubr.f32.gmra.mxu0 %v325
      %v650 = vpop.f32.mrf.mxu0
      %v651 = vadd.f32 %v367, %v650
      %v652 = vpop.f32.mrf.mxu0
      %653 = vmatprep.mubr.f32.mxu0 0.0
      %654 = vmatmul.mubr.f32.gmra.mxu0 %v326
      %v655 = vpop.f32.mrf.mxu0
      %v656 = vadd.f32 %v367, %v655
      %v657 = vpop.f32.mrf.mxu0
      %658 = vmatprep.mubr.f32.mxu0 0.0
      %659 = vmatmul.mubr.f32.gmra.mxu0 %v327
      %v660 = vpop.f32.mrf.mxu0
      %v661 = vadd.f32 %v367, %v660
      %v662 = vpop.f32.mrf.mxu0
      %663 = vmatprep.mubr.f32.mxu0 0.0
      %664 = vmatmul.mubr.f32.gmra.mxu0 %v328
      %v665 = vpop.f32.mrf.mxu0
      %v666 = vadd.f32 %v367, %v665
      %v667 = vpop.f32.mrf.mxu0
      %668 = vmatprep.mubr.f32.mxu0 0.0
      %669 = vmatmul.mubr.f32.gmra.mxu0 %v329
      %v670 = vpop.f32.mrf.mxu0
      %v671 = vadd.f32 %v367, %v670
      %v672 = vpop.f32.mrf.mxu0
      %673 = vmatprep.mubr.f32.mxu0 0.0
      %674 = vmatmul.mubr.f32.gmra.mxu0 %v330
      %v675 = vpop.f32.mrf.mxu0
      %v676 = vadd.f32 %v367, %v675
      %v677 = vpop.f32.mrf.mxu0
      %678 = vmatprep.mubr.f32.mxu0 0.0
      %679 = vmatmul.mubr.f32.gmra.mxu0 %v331
      %v680 = vpop.f32.mrf.mxu0
      %v681 = vadd.f32 %v367, %v680
      %v682 = vpop.f32.mrf.mxu0
      %683 = vmatprep.mubr.f32.mxu0 0.0
      %684 = vmatmul.mubr.f32.gmra.mxu0 %v332
      %v685 = vpop.f32.mrf.mxu0
      %v686 = vadd.f32 %v367, %v685
      %v687 = vpop.f32.mrf.mxu0
      %688 = vmatprep.mubr.f32.mxu0 0.0
      %689 = vmatmul.mubr.f32.gmra.mxu0 %v333
      %v690 = vpop.f32.mrf.mxu0
      %v691 = vadd.f32 %v367, %v690
      %v692 = vpop.f32.mrf.mxu0
      %693 = vmatprep.mubr.f32.mxu0 0.0
      %694 = vmatmul.mubr.f32.gmra.mxu0 %v334
      %v695 = vpop.f32.mrf.mxu0
      %v696 = vadd.f32 %v367, %v695
      %v697 = vpop.f32.mrf.mxu0
      %698 = vmatprep.mubr.f32.mxu0 0.0
      %699 = vmatmul.mubr.f32.gmra.mxu0 %v335
      %v700 = vpop.f32.mrf.mxu0
      %v701 = vadd.f32 %v367, %v700
      %v702 = vpop.f32.mrf.mxu0
      %703 = vmatprep.mubr.f32.mxu0 0.0
      %704 = vmatmul.mubr.f32.gmra.mxu0 %v336
      %v705 = vpop.f32.mrf.mxu0
      %v706 = vadd.f32 %v367, %v705
      %v707 = vpop.f32.mrf.mxu0
      %708 = vmatprep.mubr.f32.mxu0 0.0
      %709 = vmatmul.mubr.f32.gmra.mxu0 %v337
      %v710 = vpop.f32.mrf.mxu0
      %v711 = vadd.f32 %v367, %v710
      %v712 = vpop.f32.mrf.mxu0
      %713 = vmatprep.mubr.f32.mxu0 0.0
      %714 = vmatmul.mubr.f32.gmra.mxu0 %v338
      %v715 = vpop.f32.mrf.mxu0
      %v716 = vadd.f32 %v367, %v715
      %v717 = vpop.f32.mrf.mxu0
      %718 = vmatprep.mubr.f32.mxu0 0.0
      %719 = vmatmul.mubr.f32.gmra.mxu0 %v339
      %v720 = vpop.f32.mrf.mxu0
      %v721 = vadd.f32 %v367, %v720
      %v722 = vpop.f32.mrf.mxu0
      %723 = vmatprep.mubr.f32.mxu0 0.0
      %724 = vmatmul.mubr.f32.gmra.mxu0 %v340
      %v725 = vpop.f32.mrf.mxu0
      %v726 = vadd.f32 %v367, %v725
      %v727 = vpop.f32.mrf.mxu0
      %728 = vmatprep.mubr.f32.mxu0 0.0
      %729 = vmatmul.mubr.f32.gmra.mxu0 %v341
      %v730 = vpop.f32.mrf.mxu0
      %v731 = vadd.f32 %v367, %v730
      %v732 = vpop.f32.mrf.mxu0
      %733 = vmatprep.mubr.f32.mxu0 0.0
      %734 = vmatmul.mubr.f32.gmra.mxu0 %v342
      %v735 = vpop.f32.mrf.mxu0
      %v736 = vadd.f32 %v367, %v735
      %v737 = vpop.f32.mrf.mxu0
      %738 = vmatprep.mubr.f32.mxu0 0.0
      %739 = vmatmul.mubr.f32.gmra.mxu0 %v343
      %v740 = vpop.f32.mrf.mxu0
      %v741 = vadd.f32 %v367, %v740
      %v742 = vpop.f32.mrf.mxu0
      %743 = vmatprep.mubr.f32.mxu0 0.0
      %744 = vmatmul.mubr.f32.gmra.mxu0 %v344
      %v745 = vpop.f32.mrf.mxu0
      %v746 = vadd.f32 %v367, %v745
      %v747 = vpop.f32.mrf.mxu0
      %748 = vmatprep.mubr.f32.mxu0 0.0
      %749 = vmatmul.mubr.f32.gmra.mxu0 %v345
      %v750 = vpop.f32.mrf.mxu0
      %v751 = vadd.f32 %v367, %v750
      %v752 = vpop.f32.mrf.mxu0
      %753 = vdwg.mxu0
      %v754 = vmax.f32 %v436, 0.0
      %v755 = vmax.f32 %v441, 0.0
      %v756 = vmax.f32 %v446, 0.0
      %v757 = vmax.f32 %v451, 0.0
      %v758 = vmax.f32 %v456, 0.0
      %v759 = vmax.f32 %v461, 0.0
      %v760 = vmax.f32 %v466, 0.0
      %v761 = vmax.f32 %v471, 0.0
      %v762 = vmax.f32 %v476, 0.0
      %v763 = vmax.f32 %v481, 0.0
      %v764 = vmax.f32 %v486, 0.0
      %v765 = vmax.f32 %v491, 0.0
      %v766 = vmax.f32 %v496, 0.0
      %v767 = vmax.f32 %v501, 0.0
      %v768 = vmax.f32 %v506, 0.0
      %v769 = vmax.f32 %v511, 0.0
      %v770 = vmax.f32 %v516, 0.0
      %v771 = vmax.f32 %v521, 0.0
      %v772 = vmax.f32 %v526, 0.0
      %v773 = vmax.f32 %v531, 0.0
      %v774 = vmax.f32 %v536, 0.0
      %v775 = vmax.f32 %v541, 0.0
      %v776 = vmax.f32 %v546, 0.0
      %v777 = vmax.f32 %v551, 0.0
      %v778 = vmax.f32 %v556, 0.0
      %v779 = vmax.f32 %v561, 0.0
      %v780 = vmax.f32 %v566, 0.0
      %v781 = vmax.f32 %v571, 0.0
      %v782 = vmax.f32 %v576, 0.0
      %v783 = vmax.f32 %v581, 0.0
      %v784 = vmax.f32 %v586, 0.0
      %v785 = vmax.f32 %v591, 0.0
      %v786 = vmax.f32 %v596, 0.0
      %v787 = vmax.f32 %v601, 0.0
      %v788 = vmax.f32 %v606, 0.0
      %v789 = vmax.f32 %v611, 0.0
      %v790 = vmax.f32 %v616, 0.0
      %v791 = vmax.f32 %v621, 0.0
      %v792 = vmax.f32 %v626, 0.0
      %v793 = vmax.f32 %v631, 0.0
      %v794 = vmax.f32 %v636, 0.0
      %v795 = vmax.f32 %v641, 0.0
      %v796 = vmax.f32 %v646, 0.0
      %v797 = vmax.f32 %v651, 0.0
      %v798 = vmax.f32 %v656, 0.0
      %v799 = vmax.f32 %v661, 0.0
      %v800 = vmax.f32 %v666, 0.0
      %v801 = vmax.f32 %v671, 0.0
      %v802 = vmax.f32 %v676, 0.0
      %v803 = vmax.f32 %v681, 0.0
      %v804 = vmax.f32 %v686, 0.0
      %v805 = vmax.f32 %v691, 0.0
      %v806 = vmax.f32 %v696, 0.0
      %v807 = vmax.f32 %v701, 0.0
      %v808 = vmax.f32 %v706, 0.0
      %v809 = vmax.f32 %v711, 0.0
      %v810 = vmax.f32 %v716, 0.0
      %v811 = vmax.f32 %v721, 0.0
      %v812 = vmax.f32 %v726, 0.0
      %v813 = vmax.f32 %v731, 0.0
      %v814 = vmax.f32 %v736, 0.0
      %v815 = vmax.f32 %v741, 0.0
      %v816 = vmax.f32 %v746, 0.0
      %v817 = vmax.f32 %v751, 0.0
      %v818 = vld [vmem:[%s3] sm:$0xff]
      %v819 = vld [vmem:[%s3 + $0x8] sm:$0xff]
      %v820 = vld [vmem:[%s3 + $0x10] sm:$0xff]
      %v821 = vld [vmem:[%s3 + $0x18] sm:$0xff]
      %v822 = vld [vmem:[%s3 + $0x20] sm:$0xff]
      %v823 = vld [vmem:[%s3 + $0x28] sm:$0xff]
      %v824 = vld [vmem:[%s3 + $0x30] sm:$0xff]
      %v825 = vld [vmem:[%s3 + $0x38] sm:$0xff]
      %v826 = vld [vmem:[%s3 + $0x40] sm:$0xff]
      %v827 = vld [vmem:[%s3 + $0x48] sm:$0xff]
      %v828 = vld [vmem:[%s3 + $0x50] sm:$0xff]
      %v829 = vld [vmem:[%s3 + $0x58] sm:$0xff]
      %v830 = vld [vmem:[%s3 + $0x60] sm:$0xff]
      %v831 = vld [vmem:[%s3 + $0x68] sm:$0xff]
      %v832 = vld [vmem:[%s3 + $0x70] sm:$0xff]
      %v833 = vld [vmem:[%s3 + $0x78] sm:$0xff]
      %v834 = vld [vmem:[%s4] sm:$0x1]
      %v836 = vlaneseq
      %v837 = vshrl.u32 %v836, 7
      %v838 = vsub.s32 0, %v837
      %v839 = vrot.slane %v834, %v838
      %841 = vmatprep.subr.mxu0 0.0
      %842 = vmatpush1.msra.mxu0 %v833
      %843 = vmatprep.subr.mxu0 0.0
      %844 = vmatpush1.msra.mxu0 %v832
      %845 = vmatprep.subr.mxu0 0.0
      %846 = vmatpush1.msra.mxu0 %v831
      %847 = vmatprep.subr.mxu0 0.0
      %848 = vmatpush1.msra.mxu0 %v830
      %849 = vmatprep.subr.mxu0 0.0
      %850 = vmatpush1.msra.mxu0 %v829
      %851 = vmatprep.subr.mxu0 0.0
      %852 = vmatpush1.msra.mxu0 %v828
      %853 = vmatprep.subr.mxu0 0.0
      %854 = vmatpush1.msra.mxu0 %v827
      %855 = vmatprep.subr.mxu0 0.0
      %856 = vmatpush1.msra.mxu0 %v826
      %857 = vmatprep.subr.mxu0 0.0
      %858 = vmatpush1.msra.mxu0 %v825
      %859 = vmatprep.subr.mxu0 0.0
      %860 = vmatpush1.msra.mxu0 %v824
      %861 = vmatprep.subr.mxu0 0.0
      %862 = vmatpush1.msra.mxu0 %v823
      %863 = vmatprep.subr.mxu0 0.0
      %864 = vmatpush1.msra.mxu0 %v822
      %865 = vmatprep.subr.mxu0 0.0
      %866 = vmatpush1.msra.mxu0 %v821
      %867 = vmatprep.subr.mxu0 0.0
      %868 = vmatpush1.msra.mxu0 %v820
      %869 = vmatprep.subr.mxu0 0.0
      %870 = vmatpush1.msra.mxu0 %v819
      %871 = vmatprep.subr.mxu0 0.0
      %872 = vmatpush1.msra.mxu0 %v818
      %873 = vmatprep.subr.mxu0 0.0
      %874 = vmatpush2.msra.mxu0 0.0
      %875 = vmatprep.subr.mxu0 0.0
      %876 = vmatpush2.msra.mxu0 0.0
      %877 = vmatprep.subr.mxu0 0.0
      %878 = vmatpush2.msra.mxu0 0.0
      %879 = vmatprep.subr.mxu0 0.0
      %880 = vmatpush2.msra.mxu0 0.0
      %881 = vmatprep.subr.mxu0 0.0
      %882 = vmatpush2.msra.mxu0 0.0
      %883 = vmatprep.subr.mxu0 0.0
      %884 = vmatpush2.msra.mxu0 0.0
      %885 = vmatprep.subr.mxu0 0.0
      %886 = vmatpush2.msra.mxu0 0.0
      %887 = vmatprep.subr.mxu0 0.0
      %888 = vmatpush2.msra.mxu0 0.0
      %889 = vmatprep.subr.mxu0 0.0
      %890 = vmatpush2.msra.mxu0 0.0
      %891 = vmatprep.subr.mxu0 0.0
      %892 = vmatpush2.msra.mxu0 0.0
      %893 = vmatprep.subr.mxu0 0.0
      %894 = vmatpush2.msra.mxu0 0.0
      %895 = vmatprep.subr.mxu0 0.0
      %896 = vmatpush2.msra.mxu0 0.0
      %897 = vmatprep.subr.mxu0 0.0
      %898 = vmatpush2.msra.mxu0 0.0
      %899 = vmatprep.subr.mxu0 0.0
      %900 = vmatpush2.msra.mxu0 0.0
      %901 = vmatprep.subr.mxu0 0.0
      %902 = vmatpush2.msra.mxu0 0.0
      %903 = vmatprep.subr.mxu0 0.0
      %904 = vmatpush2.msra.mxu0 0.0
      %905 = vmatprep.mubr.f32.mxu0 0.0
      %906 = vmatmul.mubr.f32.gmra.mxu0 %v754
      %v907 = vpop.f32.mrf.mxu0
      %v908 = vadd.f32 %v839, %v907
      %v909 = vpop.f32.mrf.mxu0
      %910 = vmatprep.mubr.f32.mxu0 0.0
      %911 = vmatmul.mubr.f32.gmra.mxu0 %v755
      %v912 = vpop.f32.mrf.mxu0
      %v913 = vadd.f32 %v839, %v912
      %v914 = vpop.f32.mrf.mxu0
      %915 = vmatprep.mubr.f32.mxu0 0.0
      %916 = vmatmul.mubr.f32.gmra.mxu0 %v756
      %v917 = vpop.f32.mrf.mxu0
      %v918 = vadd.f32 %v839, %v917
      %v919 = vpop.f32.mrf.mxu0
      %920 = vmatprep.mubr.f32.mxu0 0.0
      %921 = vmatmul.mubr.f32.gmra.mxu0 %v757
      %v922 = vpop.f32.mrf.mxu0
      %v923 = vadd.f32 %v839, %v922
      %v924 = vpop.f32.mrf.mxu0
      %925 = vmatprep.mubr.f32.mxu0 0.0
      %926 = vmatmul.mubr.f32.gmra.mxu0 %v758
      %v927 = vpop.f32.mrf.mxu0
      %v928 = vadd.f32 %v839, %v927
      %v929 = vpop.f32.mrf.mxu0
      %930 = vmatprep.mubr.f32.mxu0 0.0
      %931 = vmatmul.mubr.f32.gmra.mxu0 %v759
      %v932 = vpop.f32.mrf.mxu0
      %v933 = vadd.f32 %v839, %v932
      %v934 = vpop.f32.mrf.mxu0
      %935 = vmatprep.mubr.f32.mxu0 0.0
      %936 = vmatmul.mubr.f32.gmra.mxu0 %v760
      %v937 = vpop.f32.mrf.mxu0
      %v938 = vadd.f32 %v839, %v937
      %v939 = vpop.f32.mrf.mxu0
      %940 = vmatprep.mubr.f32.mxu0 0.0
      %941 = vmatmul.mubr.f32.gmra.mxu0 %v761
      %v942 = vpop.f32.mrf.mxu0
      %v943 = vadd.f32 %v839, %v942
      %v944 = vpop.f32.mrf.mxu0
      %945 = vmatprep.mubr.f32.mxu0 0.0
      %946 = vmatmul.mubr.f32.gmra.mxu0 %v762
      %v947 = vpop.f32.mrf.mxu0
      %v948 = vadd.f32 %v839, %v947
      %v949 = vpop.f32.mrf.mxu0
      %950 = vmatprep.mubr.f32.mxu0 0.0
      %951 = vmatmul.mubr.f32.gmra.mxu0 %v763
      %v952 = vpop.f32.mrf.mxu0
      %v953 = vadd.f32 %v839, %v952
      %v954 = vpop.f32.mrf.mxu0
      %955 = vmatprep.mubr.f32.mxu0 0.0
      %956 = vmatmul.mubr.f32.gmra.mxu0 %v764
      %v957 = vpop.f32.mrf.mxu0
      %v958 = vadd.f32 %v839, %v957
      %v959 = vpop.f32.mrf.mxu0
      %960 = vmatprep.mubr.f32.mxu0 0.0
      %961 = vmatmul.mubr.f32.gmra.mxu0 %v765
      %v962 = vpop.f32.mrf.mxu0
      %v963 = vadd.f32 %v839, %v962
      %v964 = vpop.f32.mrf.mxu0
      %965 = vmatprep.mubr.f32.mxu0 0.0
      %966 = vmatmul.mubr.f32.gmra.mxu0 %v766
      %v967 = vpop.f32.mrf.mxu0
      %v968 = vadd.f32 %v839, %v967
      %v969 = vpop.f32.mrf.mxu0
      %970 = vmatprep.mubr.f32.mxu0 0.0
      %971 = vmatmul.mubr.f32.gmra.mxu0 %v767
      %v972 = vpop.f32.mrf.mxu0
      %v973 = vadd.f32 %v839, %v972
      %v974 = vpop.f32.mrf.mxu0
      %975 = vmatprep.mubr.f32.mxu0 0.0
      %976 = vmatmul.mubr.f32.gmra.mxu0 %v768
      %v977 = vpop.f32.mrf.mxu0
      %v978 = vadd.f32 %v839, %v977
      %v979 = vpop.f32.mrf.mxu0
      %980 = vmatprep.mubr.f32.mxu0 0.0
      %981 = vmatmul.mubr.f32.gmra.mxu0 %v769
      %v982 = vpop.f32.mrf.mxu0
      %v983 = vadd.f32 %v839, %v982
      %v984 = vpop.f32.mrf.mxu0
      %985 = vmatprep.mubr.f32.mxu0 0.0
      %986 = vmatmul.mubr.f32.gmra.mxu0 %v770
      %v987 = vpop.f32.mrf.mxu0
      %v988 = vadd.f32 %v839, %v987
      %v989 = vpop.f32.mrf.mxu0
      %990 = vmatprep.mubr.f32.mxu0 0.0
      %991 = vmatmul.mubr.f32.gmra.mxu0 %v771
      %v992 = vpop.f32.mrf.mxu0
      %v993 = vadd.f32 %v839, %v992
      %v994 = vpop.f32.mrf.mxu0
      %995 = vmatprep.mubr.f32.mxu0 0.0
      %996 = vmatmul.mubr.f32.gmra.mxu0 %v772
      %v997 = vpop.f32.mrf.mxu0
      %v998 = vadd.f32 %v839, %v997
      %v999 = vpop.f32.mrf.mxu0
      %1000 = vmatprep.mubr.f32.mxu0 0.0
      %1001 = vmatmul.mubr.f32.gmra.mxu0 %v773
      %v1002 = vpop.f32.mrf.mxu0
      %v1003 = vadd.f32 %v839, %v1002
      %v1004 = vpop.f32.mrf.mxu0
      %1005 = vmatprep.mubr.f32.mxu0 0.0
      %1006 = vmatmul.mubr.f32.gmra.mxu0 %v774
      %v1007 = vpop.f32.mrf.mxu0
      %v1008 = vadd.f32 %v839, %v1007
      %v1009 = vpop.f32.mrf.mxu0
      %1010 = vmatprep.mubr.f32.mxu0 0.0
      %1011 = vmatmul.mubr.f32.gmra.mxu0 %v775
      %v1012 = vpop.f32.mrf.mxu0
      %v1013 = vadd.f32 %v839, %v1012
      %v1014 = vpop.f32.mrf.mxu0
      %1015 = vmatprep.mubr.f32.mxu0 0.0
      %1016 = vmatmul.mubr.f32.gmra.mxu0 %v776
      %v1017 = vpop.f32.mrf.mxu0
      %v1018 = vadd.f32 %v839, %v1017
      %v1019 = vpop.f32.mrf.mxu0
      %1020 = vmatprep.mubr.f32.mxu0 0.0
      %1021 = vmatmul.mubr.f32.gmra.mxu0 %v777
      %v1022 = vpop.f32.mrf.mxu0
      %v1023 = vadd.f32 %v839, %v1022
      %v1024 = vpop.f32.mrf.mxu0
      %1025 = vmatprep.mubr.f32.mxu0 0.0
      %1026 = vmatmul.mubr.f32.gmra.mxu0 %v778
      %v1027 = vpop.f32.mrf.mxu0
      %v1028 = vadd.f32 %v839, %v1027
      %v1029 = vpop.f32.mrf.mxu0
      %1030 = vmatprep.mubr.f32.mxu0 0.0
      %1031 = vmatmul.mubr.f32.gmra.mxu0 %v779
      %v1032 = vpop.f32.mrf.mxu0
      %v1033 = vadd.f32 %v839, %v1032
      %v1034 = vpop.f32.mrf.mxu0
      %1035 = vmatprep.mubr.f32.mxu0 0.0
      %1036 = vmatmul.mubr.f32.gmra.mxu0 %v780
      %v1037 = vpop.f32.mrf.mxu0
      %v1038 = vadd.f32 %v839, %v1037
      %v1039 = vpop.f32.mrf.mxu0
      %1040 = vmatprep.mubr.f32.mxu0 0.0
      %1041 = vmatmul.mubr.f32.gmra.mxu0 %v781
      %v1042 = vpop.f32.mrf.mxu0
      %v1043 = vadd.f32 %v839, %v1042
      %v1044 = vpop.f32.mrf.mxu0
      %1045 = vmatprep.mubr.f32.mxu0 0.0
      %1046 = vmatmul.mubr.f32.gmra.mxu0 %v782
      %v1047 = vpop.f32.mrf.mxu0
      %v1048 = vadd.f32 %v839, %v1047
      %v1049 = vpop.f32.mrf.mxu0
      %1050 = vmatprep.mubr.f32.mxu0 0.0
      %1051 = vmatmul.mubr.f32.gmra.mxu0 %v783
      %v1052 = vpop.f32.mrf.mxu0
      %v1053 = vadd.f32 %v839, %v1052
      %v1054 = vpop.f32.mrf.mxu0
      %1055 = vmatprep.mubr.f32.mxu0 0.0
      %1056 = vmatmul.mubr.f32.gmra.mxu0 %v784
      %v1057 = vpop.f32.mrf.mxu0
      %v1058 = vadd.f32 %v839, %v1057
      %v1059 = vpop.f32.mrf.mxu0
      %1060 = vmatprep.mubr.f32.mxu0 0.0
      %1061 = vmatmul.mubr.f32.gmra.mxu0 %v785
      %v1062 = vpop.f32.mrf.mxu0
      %v1063 = vadd.f32 %v839, %v1062
      %v1064 = vpop.f32.mrf.mxu0
      %1065 = vmatprep.mubr.f32.mxu0 0.0
      %1066 = vmatmul.mubr.f32.gmra.mxu0 %v786
      %v1067 = vpop.f32.mrf.mxu0
      %v1068 = vadd.f32 %v839, %v1067
      %v1069 = vpop.f32.mrf.mxu0
      %1070 = vmatprep.mubr.f32.mxu0 0.0
      %1071 = vmatmul.mubr.f32.gmra.mxu0 %v787
      %v1072 = vpop.f32.mrf.mxu0
      %v1073 = vadd.f32 %v839, %v1072
      %v1074 = vpop.f32.mrf.mxu0
      %1075 = vmatprep.mubr.f32.mxu0 0.0
      %1076 = vmatmul.mubr.f32.gmra.mxu0 %v788
      %v1077 = vpop.f32.mrf.mxu0
      %v1078 = vadd.f32 %v839, %v1077
      %v1079 = vpop.f32.mrf.mxu0
      %1080 = vmatprep.mubr.f32.mxu0 0.0
      %1081 = vmatmul.mubr.f32.gmra.mxu0 %v789
      %v1082 = vpop.f32.mrf.mxu0
      %v1083 = vadd.f32 %v839, %v1082
      %v1084 = vpop.f32.mrf.mxu0
      %1085 = vmatprep.mubr.f32.mxu0 0.0
      %1086 = vmatmul.mubr.f32.gmra.mxu0 %v790
      %v1087 = vpop.f32.mrf.mxu0
      %v1088 = vadd.f32 %v839, %v1087
      %v1089 = vpop.f32.mrf.mxu0
      %1090 = vmatprep.mubr.f32.mxu0 0.0
      %1091 = vmatmul.mubr.f32.gmra.mxu0 %v791
      %v1092 = vpop.f32.mrf.mxu0
      %v1093 = vadd.f32 %v839, %v1092
      %v1094 = vpop.f32.mrf.mxu0
      %1095 = vmatprep.mubr.f32.mxu0 0.0
      %1096 = vmatmul.mubr.f32.gmra.mxu0 %v792
      %v1097 = vpop.f32.mrf.mxu0
      %v1098 = vadd.f32 %v839, %v1097
      %v1099 = vpop.f32.mrf.mxu0
      %1100 = vmatprep.mubr.f32.mxu0 0.0
      %1101 = vmatmul.mubr.f32.gmra.mxu0 %v793
      %v1102 = vpop.f32.mrf.mxu0
      %v1103 = vadd.f32 %v839, %v1102
      %v1104 = vpop.f32.mrf.mxu0
      %1105 = vmatprep.mubr.f32.mxu0 0.0
      %1106 = vmatmul.mubr.f32.gmra.mxu0 %v794
      %v1107 = vpop.f32.mrf.mxu0
      %v1108 = vadd.f32 %v839, %v1107
      %v1109 = vpop.f32.mrf.mxu0
      %1110 = vmatprep.mubr.f32.mxu0 0.0
      %1111 = vmatmul.mubr.f32.gmra.mxu0 %v795
      %v1112 = vpop.f32.mrf.mxu0
      %v1113 = vadd.f32 %v839, %v1112
      %v1114 = vpop.f32.mrf.mxu0
      %1115 = vmatprep.mubr.f32.mxu0 0.0
      %1116 = vmatmul.mubr.f32.gmra.mxu0 %v796
      %v1117 = vpop.f32.mrf.mxu0
      %v1118 = vadd.f32 %v839, %v1117
      %v1119 = vpop.f32.mrf.mxu0
      %1120 = vmatprep.mubr.f32.mxu0 0.0
      %1121 = vmatmul.mubr.f32.gmra.mxu0 %v797
      %v1122 = vpop.f32.mrf.mxu0
      %v1123 = vadd.f32 %v839, %v1122
      %v1124 = vpop.f32.mrf.mxu0
      %1125 = vmatprep.mubr.f32.mxu0 0.0
      %1126 = vmatmul.mubr.f32.gmra.mxu0 %v798
      %v1127 = vpop.f32.mrf.mxu0
      %v1128 = vadd.f32 %v839, %v1127
      %v1129 = vpop.f32.mrf.mxu0
      %1130 = vmatprep.mubr.f32.mxu0 0.0
      %1131 = vmatmul.mubr.f32.gmra.mxu0 %v799
      %v1132 = vpop.f32.mrf.mxu0
      %v1133 = vadd.f32 %v839, %v1132
      %v1134 = vpop.f32.mrf.mxu0
      %1135 = vmatprep.mubr.f32.mxu0 0.0
      %1136 = vmatmul.mubr.f32.gmra.mxu0 %v800
      %v1137 = vpop.f32.mrf.mxu0
      %v1138 = vadd.f32 %v839, %v1137
      %v1139 = vpop.f32.mrf.mxu0
      %1140 = vmatprep.mubr.f32.mxu0 0.0
      %1141 = vmatmul.mubr.f32.gmra.mxu0 %v801
      %v1142 = vpop.f32.mrf.mxu0
      %v1143 = vadd.f32 %v839, %v1142
      %v1144 = vpop.f32.mrf.mxu0
      %1145 = vmatprep.mubr.f32.mxu0 0.0
      %1146 = vmatmul.mubr.f32.gmra.mxu0 %v802
      %v1147 = vpop.f32.mrf.mxu0
      %v1148 = vadd.f32 %v839, %v1147
      %v1149 = vpop.f32.mrf.mxu0
      %1150 = vmatprep.mubr.f32.mxu0 0.0
      %1151 = vmatmul.mubr.f32.gmra.mxu0 %v803
      %v1152 = vpop.f32.mrf.mxu0
      %v1153 = vadd.f32 %v839, %v1152
      %v1154 = vpop.f32.mrf.mxu0
      %1155 = vmatprep.mubr.f32.mxu0 0.0
      %1156 = vmatmul.mubr.f32.gmra.mxu0 %v804
      %v1157 = vpop.f32.mrf.mxu0
      %v1158 = vadd.f32 %v839, %v1157
      %v1159 = vpop.f32.mrf.mxu0
      %1160 = vmatprep.mubr.f32.mxu0 0.0
      %1161 = vmatmul.mubr.f32.gmra.mxu0 %v805
      %v1162 = vpop.f32.mrf.mxu0
      %v1163 = vadd.f32 %v839, %v1162
      %v1164 = vpop.f32.mrf.mxu0
      %1165 = vmatprep.mubr.f32.mxu0 0.0
      %1166 = vmatmul.mubr.f32.gmra.mxu0 %v806
      %v1167 = vpop.f32.mrf.mxu0
      %v1168 = vadd.f32 %v839, %v1167
      %v1169 = vpop.f32.mrf.mxu0
      %1170 = vmatprep.mubr.f32.mxu0 0.0
      %1171 = vmatmul.mubr.f32.gmra.mxu0 %v807
      %v1172 = vpop.f32.mrf.mxu0
      %v1173 = vadd.f32 %v839, %v1172
      %v1174 = vpop.f32.mrf.mxu0
      %1175 = vmatprep.mubr.f32.mxu0 0.0
      %1176 = vmatmul.mubr.f32.gmra.mxu0 %v808
      %v1177 = vpop.f32.mrf.mxu0
      %v1178 = vadd.f32 %v839, %v1177
      %v1179 = vpop.f32.mrf.mxu0
      %1180 = vmatprep.mubr.f32.mxu0 0.0
      %1181 = vmatmul.mubr.f32.gmra.mxu0 %v809
      %v1182 = vpop.f32.mrf.mxu0
      %v1183 = vadd.f32 %v839, %v1182
      %v1184 = vpop.f32.mrf.mxu0
      %1185 = vmatprep.mubr.f32.mxu0 0.0
      %1186 = vmatmul.mubr.f32.gmra.mxu0 %v810
      %v1187 = vpop.f32.mrf.mxu0
      %v1188 = vadd.f32 %v839, %v1187
      %v1189 = vpop.f32.mrf.mxu0
      %1190 = vmatprep.mubr.f32.mxu0 0.0
      %1191 = vmatmul.mubr.f32.gmra.mxu0 %v811
      %v1192 = vpop.f32.mrf.mxu0
      %v1193 = vadd.f32 %v839, %v1192
      %v1194 = vpop.f32.mrf.mxu0
      %1195 = vmatprep.mubr.f32.mxu0 0.0
      %1196 = vmatmul.mubr.f32.gmra.mxu0 %v812
      %v1197 = vpop.f32.mrf.mxu0
      %v1198 = vadd.f32 %v839, %v1197
      %v1199 = vpop.f32.mrf.mxu0
      %1200 = vmatprep.mubr.f32.mxu0 0.0
      %1201 = vmatmul.mubr.f32.gmra.mxu0 %v813
      %v1202 = vpop.f32.mrf.mxu0
      %v1203 = vadd.f32 %v839, %v1202
      %v1204 = vpop.f32.mrf.mxu0
      %1205 = vmatprep.mubr.f32.mxu0 0.0
      %1206 = vmatmul.mubr.f32.gmra.mxu0 %v814
      %v1207 = vpop.f32.mrf.mxu0
      %v1208 = vadd.f32 %v839, %v1207
      %v1209 = vpop.f32.mrf.mxu0
      %1210 = vmatprep.mubr.f32.mxu0 0.0
      %1211 = vmatmul.mubr.f32.gmra.mxu0 %v815
      %v1212 = vpop.f32.mrf.mxu0
      %v1213 = vadd.f32 %v839, %v1212
      %v1214 = vpop.f32.mrf.mxu0
      %1215 = vmatprep.mubr.f32.mxu0 0.0
      %1216 = vmatmul.mubr.f32.gmra.mxu0 %v816
      %v1217 = vpop.f32.mrf.mxu0
      %v1218 = vadd.f32 %v839, %v1217
      %v1219 = vpop.f32.mrf.mxu0
      %1220 = vmatprep.mubr.f32.mxu0 0.0
      %1221 = vmatmul.mubr.f32.gmra.mxu0 %v817
      %v1222 = vpop.f32.mrf.mxu0
      %v1223 = vadd.f32 %v839, %v1222
      %v1224 = vpop.f32.mrf.mxu0
      %1225 = vdwg.mxu0
      %v1226 = vmax.f32 %v908, 0.0
      %v1227 = vmax.f32 %v913, 0.0
      %v1228 = vmax.f32 %v918, 0.0
      %v1229 = vmax.f32 %v923, 0.0
      %v1230 = vmax.f32 %v928, 0.0
      %v1231 = vmax.f32 %v933, 0.0
      %v1232 = vmax.f32 %v938, 0.0
      %v1233 = vmax.f32 %v943, 0.0
      %v1234 = vmax.f32 %v948, 0.0
      %v1235 = vmax.f32 %v953, 0.0
      %v1236 = vmax.f32 %v958, 0.0
      %v1237 = vmax.f32 %v963, 0.0
      %v1238 = vmax.f32 %v968, 0.0
      %v1239 = vmax.f32 %v973, 0.0
      %v1240 = vmax.f32 %v978, 0.0
      %v1241 = vmax.f32 %v983, 0.0
      %v1242 = vmax.f32 %v988, 0.0
      %v1243 = vmax.f32 %v993, 0.0
      %v1244 = vmax.f32 %v998, 0.0
      %v1245 = vmax.f32 %v1003, 0.0
      %v1246 = vmax.f32 %v1008, 0.0
      %v1247 = vmax.f32 %v1013, 0.0
      %v1248 = vmax.f32 %v1018, 0.0
      %v1249 = vmax.f32 %v1023, 0.0
      %v1250 = vmax.f32 %v1028, 0.0
      %v1251 = vmax.f32 %v1033, 0.0
      %v1252 = vmax.f32 %v1038, 0.0
      %v1253 = vmax.f32 %v1043, 0.0
      %v1254 = vmax.f32 %v1048, 0.0
      %v1255 = vmax.f32 %v1053, 0.0
      %v1256 = vmax.f32 %v1058, 0.0
      %v1257 = vmax.f32 %v1063, 0.0
      %v1258 = vmax.f32 %v1068, 0.0
      %v1259 = vmax.f32 %v1073, 0.0
      %v1260 = vmax.f32 %v1078, 0.0
      %v1261 = vmax.f32 %v1083, 0.0
      %v1262 = vmax.f32 %v1088, 0.0
      %v1263 = vmax.f32 %v1093, 0.0
      %v1264 = vmax.f32 %v1098, 0.0
      %v1265 = vmax.f32 %v1103, 0.0
      %v1266 = vmax.f32 %v1108, 0.0
      %v1267 = vmax.f32 %v1113, 0.0
      %v1268 = vmax.f32 %v1118, 0.0
      %v1269 = vmax.f32 %v1123, 0.0
      %v1270 = vmax.f32 %v1128, 0.0
      %v1271 = vmax.f32 %v1133, 0.0
      %v1272 = vmax.f32 %v1138, 0.0
      %v1273 = vmax.f32 %v1143, 0.0
      %v1274 = vmax.f32 %v1148, 0.0
      %v1275 = vmax.f32 %v1153, 0.0
      %v1276 = vmax.f32 %v1158, 0.0
      %v1277 = vmax.f32 %v1163, 0.0
      %v1278 = vmax.f32 %v1168, 0.0
      %v1279 = vmax.f32 %v1173, 0.0
      %v1280 = vmax.f32 %v1178, 0.0
      %v1281 = vmax.f32 %v1183, 0.0
      %v1282 = vmax.f32 %v1188, 0.0
      %v1283 = vmax.f32 %v1193, 0.0
      %v1284 = vmax.f32 %v1198, 0.0
      %v1285 = vmax.f32 %v1203, 0.0
      %v1286 = vmax.f32 %v1208, 0.0
      %v1287 = vmax.f32 %v1213, 0.0
      %v1288 = vmax.f32 %v1218, 0.0
      %v1289 = vmax.f32 %v1223, 0.0
      %v1290 = vld [vmem:[%s5] sm:$0xff]
      %v1291 = vld [vmem:[%s5 + $0x8] sm:$0xff]
      %v1292 = vld [vmem:[%s5 + $0x10] sm:$0xff]
      %v1293 = vld [vmem:[%s5 + $0x18] sm:$0xff]
      %v1294 = vld [vmem:[%s5 + $0x20] sm:$0xff]
      %v1295 = vld [vmem:[%s5 + $0x28] sm:$0xff]
      %v1296 = vld [vmem:[%s5 + $0x30] sm:$0xff]
      %v1297 = vld [vmem:[%s5 + $0x38] sm:$0xff]
      %v1298 = vld [vmem:[%s5 + $0x40] sm:$0xff]
      %v1299 = vld [vmem:[%s5 + $0x48] sm:$0xff]
      %v1300 = vld [vmem:[%s5 + $0x50] sm:$0xff]
      %v1301 = vld [vmem:[%s5 + $0x58] sm:$0xff]
      %v1302 = vld [vmem:[%s5 + $0x60] sm:$0xff]
      %v1303 = vld [vmem:[%s5 + $0x68] sm:$0xff]
      %v1304 = vld [vmem:[%s5 + $0x70] sm:$0xff]
      %v1305 = vld [vmem:[%s5 + $0x78] sm:$0xff]
      %v1306 = vld [vmem:[%s6] sm:$0x1]
      %v1308 = vlaneseq
      %v1309 = vshrl.u32 %v1308, 7
      %v1310 = vsub.s32 0, %v1309
      %v1311 = vrot.slane %v1306, %v1310
      %1313 = vmatprep.subr.mxu0 0.0
      %1314 = vmatpush1.msra.mxu0 %v1305
      %1315 = vmatprep.subr.mxu0 0.0
      %1316 = vmatpush1.msra.mxu0 %v1304
      %1317 = vmatprep.subr.mxu0 0.0
      %1318 = vmatpush1.msra.mxu0 %v1303
      %1319 = vmatprep.subr.mxu0 0.0
      %1320 = vmatpush1.msra.mxu0 %v1302
      %1321 = vmatprep.subr.mxu0 0.0
      %1322 = vmatpush1.msra.mxu0 %v1301
      %1323 = vmatprep.subr.mxu0 0.0
      %1324 = vmatpush1.msra.mxu0 %v1300
      %1325 = vmatprep.subr.mxu0 0.0
      %1326 = vmatpush1.msra.mxu0 %v1299
      %1327 = vmatprep.subr.mxu0 0.0
      %1328 = vmatpush1.msra.mxu0 %v1298
      %1329 = vmatprep.subr.mxu0 0.0
      %1330 = vmatpush1.msra.mxu0 %v1297
      %1331 = vmatprep.subr.mxu0 0.0
      %1332 = vmatpush1.msra.mxu0 %v1296
      %1333 = vmatprep.subr.mxu0 0.0
      %1334 = vmatpush1.msra.mxu0 %v1295
      %1335 = vmatprep.subr.mxu0 0.0
      %1336 = vmatpush1.msra.mxu0 %v1294
      %1337 = vmatprep.subr.mxu0 0.0
      %1338 = vmatpush1.msra.mxu0 %v1293
      %1339 = vmatprep.subr.mxu0 0.0
      %1340 = vmatpush1.msra.mxu0 %v1292
      %1341 = vmatprep.subr.mxu0 0.0
      %1342 = vmatpush1.msra.mxu0 %v1291
      %1343 = vmatprep.subr.mxu0 0.0
      %1344 = vmatpush1.msra.mxu0 %v1290
      %1345 = vmatprep.subr.mxu0 0.0
      %1346 = vmatpush2.msra.mxu0 0.0
      %1347 = vmatprep.subr.mxu0 0.0
      %1348 = vmatpush2.msra.mxu0 0.0
      %1349 = vmatprep.subr.mxu0 0.0
      %1350 = vmatpush2.msra.mxu0 0.0
      %1351 = vmatprep.subr.mxu0 0.0
      %1352 = vmatpush2.msra.mxu0 0.0
      %1353 = vmatprep.subr.mxu0 0.0
      %1354 = vmatpush2.msra.mxu0 0.0
      %1355 = vmatprep.subr.mxu0 0.0
      %1356 = vmatpush2.msra.mxu0 0.0
      %1357 = vmatprep.subr.mxu0 0.0
      %1358 = vmatpush2.msra.mxu0 0.0
      %1359 = vmatprep.subr.mxu0 0.0
      %1360 = vmatpush2.msra.mxu0 0.0
      %1361 = vmatprep.subr.mxu0 0.0
      %1362 = vmatpush2.msra.mxu0 0.0
      %1363 = vmatprep.subr.mxu0 0.0
      %1364 = vmatpush2.msra.mxu0 0.0
      %1365 = vmatprep.subr.mxu0 0.0
      %1366 = vmatpush2.msra.mxu0 0.0
      %1367 = vmatprep.subr.mxu0 0.0
      %1368 = vmatpush2.msra.mxu0 0.0
      %1369 = vmatprep.subr.mxu0 0.0
      %1370 = vmatpush2.msra.mxu0 0.0
      %1371 = vmatprep.subr.mxu0 0.0
      %1372 = vmatpush2.msra.mxu0 0.0
      %1373 = vmatprep.subr.mxu0 0.0
      %1374 = vmatpush2.msra.mxu0 0.0
      %1375 = vmatprep.subr.mxu0 0.0
      %1376 = vmatpush2.msra.mxu0 0.0
      %1377 = vmatprep.mubr.f32.mxu0 0.0
      %1378 = vmatmul.mubr.f32.gmra.mxu0 %v1226
      %v1379 = vpop.f32.mrf.mxu0
      %v1380 = vadd.f32 %v1311, %v1379
      %v1381 = vpop.f32.mrf.mxu0
      %1382 = vmatprep.mubr.f32.mxu0 0.0
      %1383 = vmatmul.mubr.f32.gmra.mxu0 %v1227
      %v1384 = vpop.f32.mrf.mxu0
      %v1385 = vadd.f32 %v1311, %v1384
      %v1386 = vpop.f32.mrf.mxu0
      %1387 = vmatprep.mubr.f32.mxu0 0.0
      %1388 = vmatmul.mubr.f32.gmra.mxu0 %v1228
      %v1389 = vpop.f32.mrf.mxu0
      %v1390 = vadd.f32 %v1311, %v1389
      %v1391 = vpop.f32.mrf.mxu0
      %1392 = vmatprep.mubr.f32.mxu0 0.0
      %1393 = vmatmul.mubr.f32.gmra.mxu0 %v1229
      %v1394 = vpop.f32.mrf.mxu0
      %v1395 = vadd.f32 %v1311, %v1394
      %v1396 = vpop.f32.mrf.mxu0
      %1397 = vmatprep.mubr.f32.mxu0 0.0
      %1398 = vmatmul.mubr.f32.gmra.mxu0 %v1230
      %v1399 = vpop.f32.mrf.mxu0
      %v1400 = vadd.f32 %v1311, %v1399
      %v1401 = vpop.f32.mrf.mxu0
      %1402 = vmatprep.mubr.f32.mxu0 0.0
      %1403 = vmatmul.mubr.f32.gmra.mxu0 %v1231
      %v1404 = vpop.f32.mrf.mxu0
      %v1405 = vadd.f32 %v1311, %v1404
      %v1406 = vpop.f32.mrf.mxu0
      %1407 = vmatprep.mubr.f32.mxu0 0.0
      %1408 = vmatmul.mubr.f32.gmra.mxu0 %v1232
      %v1409 = vpop.f32.mrf.mxu0
      %v1410 = vadd.f32 %v1311, %v1409
      %v1411 = vpop.f32.mrf.mxu0
      %1412 = vmatprep.mubr.f32.mxu0 0.0
      %1413 = vmatmul.mubr.f32.gmra.mxu0 %v1233
      %v1414 = vpop.f32.mrf.mxu0
      %v1415 = vadd.f32 %v1311, %v1414
      %v1416 = vpop.f32.mrf.mxu0
      %1417 = vmatprep.mubr.f32.mxu0 0.0
      %1418 = vmatmul.mubr.f32.gmra.mxu0 %v1234
      %v1419 = vpop.f32.mrf.mxu0
      %v1420 = vadd.f32 %v1311, %v1419
      %v1421 = vpop.f32.mrf.mxu0
      %1422 = vmatprep.mubr.f32.mxu0 0.0
      %1423 = vmatmul.mubr.f32.gmra.mxu0 %v1235
      %v1424 = vpop.f32.mrf.mxu0
      %v1425 = vadd.f32 %v1311, %v1424
      %v1426 = vpop.f32.mrf.mxu0
      %1427 = vmatprep.mubr.f32.mxu0 0.0
      %1428 = vmatmul.mubr.f32.gmra.mxu0 %v1236
      %v1429 = vpop.f32.mrf.mxu0
      %v1430 = vadd.f32 %v1311, %v1429
      %v1431 = vpop.f32.mrf.mxu0
      %1432 = vmatprep.mubr.f32.mxu0 0.0
      %1433 = vmatmul.mubr.f32.gmra.mxu0 %v1237
      %v1434 = vpop.f32.mrf.mxu0
      %v1435 = vadd.f32 %v1311, %v1434
      %v1436 = vpop.f32.mrf.mxu0
      %1437 = vmatprep.mubr.f32.mxu0 0.0
      %1438 = vmatmul.mubr.f32.gmra.mxu0 %v1238
      %v1439 = vpop.f32.mrf.mxu0
      %v1440 = vadd.f32 %v1311, %v1439
      %v1441 = vpop.f32.mrf.mxu0
      %1442 = vmatprep.mubr.f32.mxu0 0.0
      %1443 = vmatmul.mubr.f32.gmra.mxu0 %v1239
      %v1444 = vpop.f32.mrf.mxu0
      %v1445 = vadd.f32 %v1311, %v1444
      %v1446 = vpop.f32.mrf.mxu0
      %1447 = vmatprep.mubr.f32.mxu0 0.0
      %1448 = vmatmul.mubr.f32.gmra.mxu0 %v1240
      %v1449 = vpop.f32.mrf.mxu0
      %v1450 = vadd.f32 %v1311, %v1449
      %v1451 = vpop.f32.mrf.mxu0
      %1452 = vmatprep.mubr.f32.mxu0 0.0
      %1453 = vmatmul.mubr.f32.gmra.mxu0 %v1241
      %v1454 = vpop.f32.mrf.mxu0
      %v1455 = vadd.f32 %v1311, %v1454
      %v1456 = vpop.f32.mrf.mxu0
      %1457 = vmatprep.mubr.f32.mxu0 0.0
      %1458 = vmatmul.mubr.f32.gmra.mxu0 %v1242
      %v1459 = vpop.f32.mrf.mxu0
      %v1460 = vadd.f32 %v1311, %v1459
      %v1461 = vpop.f32.mrf.mxu0
      %1462 = vmatprep.mubr.f32.mxu0 0.0
      %1463 = vmatmul.mubr.f32.gmra.mxu0 %v1243
      %v1464 = vpop.f32.mrf.mxu0
      %v1465 = vadd.f32 %v1311, %v1464
      %v1466 = vpop.f32.mrf.mxu0
      %1467 = vmatprep.mubr.f32.mxu0 0.0
      %1468 = vmatmul.mubr.f32.gmra.mxu0 %v1244
      %v1469 = vpop.f32.mrf.mxu0
      %v1470 = vadd.f32 %v1311, %v1469
      %v1471 = vpop.f32.mrf.mxu0
      %1472 = vmatprep.mubr.f32.mxu0 0.0
      %1473 = vmatmul.mubr.f32.gmra.mxu0 %v1245
      %v1474 = vpop.f32.mrf.mxu0
      %v1475 = vadd.f32 %v1311, %v1474
      %v1476 = vpop.f32.mrf.mxu0
      %1477 = vmatprep.mubr.f32.mxu0 0.0
      %1478 = vmatmul.mubr.f32.gmra.mxu0 %v1246
      %v1479 = vpop.f32.mrf.mxu0
      %v1480 = vadd.f32 %v1311, %v1479
      %v1481 = vpop.f32.mrf.mxu0
      %1482 = vmatprep.mubr.f32.mxu0 0.0
      %1483 = vmatmul.mubr.f32.gmra.mxu0 %v1247
      %v1484 = vpop.f32.mrf.mxu0
      %v1485 = vadd.f32 %v1311, %v1484
      %v1486 = vpop.f32.mrf.mxu0
      %1487 = vmatprep.mubr.f32.mxu0 0.0
      %1488 = vmatmul.mubr.f32.gmra.mxu0 %v1248
      %v1489 = vpop.f32.mrf.mxu0
      %v1490 = vadd.f32 %v1311, %v1489
      %v1491 = vpop.f32.mrf.mxu0
      %1492 = vmatprep.mubr.f32.mxu0 0.0
      %1493 = vmatmul.mubr.f32.gmra.mxu0 %v1249
      %v1494 = vpop.f32.mrf.mxu0
      %v1495 = vadd.f32 %v1311, %v1494
      %v1496 = vpop.f32.mrf.mxu0
      %1497 = vmatprep.mubr.f32.mxu0 0.0
      %1498 = vmatmul.mubr.f32.gmra.mxu0 %v1250
      %v1499 = vpop.f32.mrf.mxu0
      %v1500 = vadd.f32 %v1311, %v1499
      %v1501 = vpop.f32.mrf.mxu0
      %1502 = vmatprep.mubr.f32.mxu0 0.0
      %1503 = vmatmul.mubr.f32.gmra.mxu0 %v1251
      %v1504 = vpop.f32.mrf.mxu0
      %v1505 = vadd.f32 %v1311, %v1504
      %v1506 = vpop.f32.mrf.mxu0
      %1507 = vmatprep.mubr.f32.mxu0 0.0
      %1508 = vmatmul.mubr.f32.gmra.mxu0 %v1252
      %v1509 = vpop.f32.mrf.mxu0
      %v1510 = vadd.f32 %v1311, %v1509
      %v1511 = vpop.f32.mrf.mxu0
      %1512 = vmatprep.mubr.f32.mxu0 0.0
      %1513 = vmatmul.mubr.f32.gmra.mxu0 %v1253
      %v1514 = vpop.f32.mrf.mxu0
      %v1515 = vadd.f32 %v1311, %v1514
      %v1516 = vpop.f32.mrf.mxu0
      %1517 = vmatprep.mubr.f32.mxu0 0.0
      %1518 = vmatmul.mubr.f32.gmra.mxu0 %v1254
      %v1519 = vpop.f32.mrf.mxu0
      %v1520 = vadd.f32 %v1311, %v1519
      %v1521 = vpop.f32.mrf.mxu0
      %1522 = vmatprep.mubr.f32.mxu0 0.0
      %1523 = vmatmul.mubr.f32.gmra.mxu0 %v1255
      %v1524 = vpop.f32.mrf.mxu0
      %v1525 = vadd.f32 %v1311, %v1524
      %v1526 = vpop.f32.mrf.mxu0
      %1527 = vmatprep.mubr.f32.mxu0 0.0
      %1528 = vmatmul.mubr.f32.gmra.mxu0 %v1256
      %v1529 = vpop.f32.mrf.mxu0
      %v1530 = vadd.f32 %v1311, %v1529
      %v1531 = vpop.f32.mrf.mxu0
      %1532 = vmatprep.mubr.f32.mxu0 0.0
      %1533 = vmatmul.mubr.f32.gmra.mxu0 %v1257
      %v1534 = vpop.f32.mrf.mxu0
      %v1535 = vadd.f32 %v1311, %v1534
      %v1536 = vpop.f32.mrf.mxu0
      %1537 = vmatprep.mubr.f32.mxu0 0.0
      %1538 = vmatmul.mubr.f32.gmra.mxu0 %v1258
      %v1539 = vpop.f32.mrf.mxu0
      %v1540 = vadd.f32 %v1311, %v1539
      %v1541 = vpop.f32.mrf.mxu0
      %1542 = vmatprep.mubr.f32.mxu0 0.0
      %1543 = vmatmul.mubr.f32.gmra.mxu0 %v1259
      %v1544 = vpop.f32.mrf.mxu0
      %v1545 = vadd.f32 %v1311, %v1544
      %v1546 = vpop.f32.mrf.mxu0
      %1547 = vmatprep.mubr.f32.mxu0 0.0
      %1548 = vmatmul.mubr.f32.gmra.mxu0 %v1260
      %v1549 = vpop.f32.mrf.mxu0
      %v1550 = vadd.f32 %v1311, %v1549
      %v1551 = vpop.f32.mrf.mxu0
      %1552 = vmatprep.mubr.f32.mxu0 0.0
      %1553 = vmatmul.mubr.f32.gmra.mxu0 %v1261
      %v1554 = vpop.f32.mrf.mxu0
      %v1555 = vadd.f32 %v1311, %v1554
      %v1556 = vpop.f32.mrf.mxu0
      %1557 = vmatprep.mubr.f32.mxu0 0.0
      %1558 = vmatmul.mubr.f32.gmra.mxu0 %v1262
      %v1559 = vpop.f32.mrf.mxu0
      %v1560 = vadd.f32 %v1311, %v1559
      %v1561 = vpop.f32.mrf.mxu0
      %1562 = vmatprep.mubr.f32.mxu0 0.0
      %1563 = vmatmul.mubr.f32.gmra.mxu0 %v1263
      %v1564 = vpop.f32.mrf.mxu0
      %v1565 = vadd.f32 %v1311, %v1564
      %v1566 = vpop.f32.mrf.mxu0
      %1567 = vmatprep.mubr.f32.mxu0 0.0
      %1568 = vmatmul.mubr.f32.gmra.mxu0 %v1264
      %v1569 = vpop.f32.mrf.mxu0
      %v1570 = vadd.f32 %v1311, %v1569
      %v1571 = vpop.f32.mrf.mxu0
      %1572 = vmatprep.mubr.f32.mxu0 0.0
      %1573 = vmatmul.mubr.f32.gmra.mxu0 %v1265
      %v1574 = vpop.f32.mrf.mxu0
      %v1575 = vadd.f32 %v1311, %v1574
      %v1576 = vpop.f32.mrf.mxu0
      %1577 = vmatprep.mubr.f32.mxu0 0.0
      %1578 = vmatmul.mubr.f32.gmra.mxu0 %v1266
      %v1579 = vpop.f32.mrf.mxu0
      %v1580 = vadd.f32 %v1311, %v1579
      %v1581 = vpop.f32.mrf.mxu0
      %1582 = vmatprep.mubr.f32.mxu0 0.0
      %1583 = vmatmul.mubr.f32.gmra.mxu0 %v1267
      %v1584 = vpop.f32.mrf.mxu0
      %v1585 = vadd.f32 %v1311, %v1584
      %v1586 = vpop.f32.mrf.mxu0
      %1587 = vmatprep.mubr.f32.mxu0 0.0
      %1588 = vmatmul.mubr.f32.gmra.mxu0 %v1268
      %v1589 = vpop.f32.mrf.mxu0
      %v1590 = vadd.f32 %v1311, %v1589
      %v1591 = vpop.f32.mrf.mxu0
      %1592 = vmatprep.mubr.f32.mxu0 0.0
      %1593 = vmatmul.mubr.f32.gmra.mxu0 %v1269
      %v1594 = vpop.f32.mrf.mxu0
      %v1595 = vadd.f32 %v1311, %v1594
      %v1596 = vpop.f32.mrf.mxu0
      %1597 = vmatprep.mubr.f32.mxu0 0.0
      %1598 = vmatmul.mubr.f32.gmra.mxu0 %v1270
      %v1599 = vpop.f32.mrf.mxu0
      %v1600 = vadd.f32 %v1311, %v1599
      %v1601 = vpop.f32.mrf.mxu0
      %1602 = vmatprep.mubr.f32.mxu0 0.0
      %1603 = vmatmul.mubr.f32.gmra.mxu0 %v1271
      %v1604 = vpop.f32.mrf.mxu0
      %v1605 = vadd.f32 %v1311, %v1604
      %v1606 = vpop.f32.mrf.mxu0
      %1607 = vmatprep.mubr.f32.mxu0 0.0
      %1608 = vmatmul.mubr.f32.gmra.mxu0 %v1272
      %v1609 = vpop.f32.mrf.mxu0
      %v1610 = vadd.f32 %v1311, %v1609
      %v1611 = vpop.f32.mrf.mxu0
      %1612 = vmatprep.mubr.f32.mxu0 0.0
      %1613 = vmatmul.mubr.f32.gmra.mxu0 %v1273
      %v1614 = vpop.f32.mrf.mxu0
      %v1615 = vadd.f32 %v1311, %v1614
      %v1616 = vpop.f32.mrf.mxu0
      %1617 = vmatprep.mubr.f32.mxu0 0.0
      %1618 = vmatmul.mubr.f32.gmra.mxu0 %v1274
      %v1619 = vpop.f32.mrf.mxu0
      %v1620 = vadd.f32 %v1311, %v1619
      %v1621 = vpop.f32.mrf.mxu0
      %1622 = vmatprep.mubr.f32.mxu0 0.0
      %1623 = vmatmul.mubr.f32.gmra.mxu0 %v1275
      %v1624 = vpop.f32.mrf.mxu0
      %v1625 = vadd.f32 %v1311, %v1624
      %v1626 = vpop.f32.mrf.mxu0
      %1627 = vmatprep.mubr.f32.mxu0 0.0
      %1628 = vmatmul.mubr.f32.gmra.mxu0 %v1276
      %v1629 = vpop.f32.mrf.mxu0
      %v1630 = vadd.f32 %v1311, %v1629
      %v1631 = vpop.f32.mrf.mxu0
      %1632 = vmatprep.mubr.f32.mxu0 0.0
      %1633 = vmatmul.mubr.f32.gmra.mxu0 %v1277
      %v1634 = vpop.f32.mrf.mxu0
      %v1635 = vadd.f32 %v1311, %v1634
      %v1636 = vpop.f32.mrf.mxu0
      %1637 = vmatprep.mubr.f32.mxu0 0.0
      %1638 = vmatmul.mubr.f32.gmra.mxu0 %v1278
      %v1639 = vpop.f32.mrf.mxu0
      %v1640 = vadd.f32 %v1311, %v1639
      %v1641 = vpop.f32.mrf.mxu0
      %1642 = vmatprep.mubr.f32.mxu0 0.0
      %1643 = vmatmul.mubr.f32.gmra.mxu0 %v1279
      %v1644 = vpop.f32.mrf.mxu0
      %v1645 = vadd.f32 %v1311, %v1644
      %v1646 = vpop.f32.mrf.mxu0
      %1647 = vmatprep.mubr.f32.mxu0 0.0
      %1648 = vmatmul.mubr.f32.gmra.mxu0 %v1280
      %v1649 = vpop.f32.mrf.mxu0
      %v1650 = vadd.f32 %v1311, %v1649
      %v1651 = vpop.f32.mrf.mxu0
      %1652 = vmatprep.mubr.f32.mxu0 0.0
      %1653 = vmatmul.mubr.f32.gmra.mxu0 %v1281
      %v1654 = vpop.f32.mrf.mxu0
      %v1655 = vadd.f32 %v1311, %v1654
      %v1656 = vpop.f32.mrf.mxu0
      %1657 = vmatprep.mubr.f32.mxu0 0.0
      %1658 = vmatmul.mubr.f32.gmra.mxu0 %v1282
      %v1659 = vpop.f32.mrf.mxu0
      %v1660 = vadd.f32 %v1311, %v1659
      %v1661 = vpop.f32.mrf.mxu0
      %1662 = vmatprep.mubr.f32.mxu0 0.0
      %1663 = vmatmul.mubr.f32.gmra.mxu0 %v1283
      %v1664 = vpop.f32.mrf.mxu0
      %v1665 = vadd.f32 %v1311, %v1664
      %v1666 = vpop.f32.mrf.mxu0
      %1667 = vmatprep.mubr.f32.mxu0 0.0
      %1668 = vmatmul.mubr.f32.gmra.mxu0 %v1284
      %v1669 = vpop.f32.mrf.mxu0
      %v1670 = vadd.f32 %v1311, %v1669
      %v1671 = vpop.f32.mrf.mxu0
      %1672 = vmatprep.mubr.f32.mxu0 0.0
      %1673 = vmatmul.mubr.f32.gmra.mxu0 %v1285
      %v1674 = vpop.f32.mrf.mxu0
      %v1675 = vadd.f32 %v1311, %v1674
      %v1676 = vpop.f32.mrf.mxu0
      %1677 = vmatprep.mubr.f32.mxu0 0.0
      %1678 = vmatmul.mubr.f32.gmra.mxu0 %v1286
      %v1679 = vpop.f32.mrf.mxu0
      %v1680 = vadd.f32 %v1311, %v1679
      %v1681 = vpop.f32.mrf.mxu0
      %1682 = vmatprep.mubr.f32.mxu0 0.0
      %1683 = vmatmul.mubr.f32.gmra.mxu0 %v1287
      %v1684 = vpop.f32.mrf.mxu0
      %v1685 = vadd.f32 %v1311, %v1684
      %v1686 = vpop.f32.mrf.mxu0
      %1687 = vmatprep.mubr.f32.mxu0 0.0
      %1688 = vmatmul.mubr.f32.gmra.mxu0 %v1288
      %v1689 = vpop.f32.mrf.mxu0
      %v1690 = vadd.f32 %v1311, %v1689
      %v1691 = vpop.f32.mrf.mxu0
      %1692 = vmatprep.mubr.f32.mxu0 0.0
      %1693 = vmatmul.mubr.f32.gmra.mxu0 %v1289
      %v1694 = vpop.f32.mrf.mxu0
      %v1695 = vadd.f32 %v1311, %v1694
      %v1696 = vpop.f32.mrf.mxu0
      %1697 = vdwg.mxu0
      %s1698 = smul.u32 %s18, 512
      %v1699 = vlaneseq
      %v1700 = vshrl.u32 %v1699, 7
      %v1701 = vadd.s32 %v1700, 8
      %v1702 = vadd.s32 %v1700, 16
      %v1703 = vadd.s32 %v1700, 24
      %v1704 = vadd.s32 %v1700, 32
      %v1705 = vadd.s32 %v1700, 40
      %v1706 = vadd.s32 %v1700, 48
      %v1707 = vadd.s32 %v1700, 56
      %v1708 = vadd.s32 %v1700, 64
      %v1709 = vadd.s32 %v1700, 72
      %v1710 = vadd.s32 %v1700, 80
      %v1711 = vadd.s32 %v1700, 88
      %v1712 = vadd.s32 %v1700, 96
      %v1713 = vadd.s32 %v1700, 104
      %v1714 = vadd.s32 %v1700, 112
      %v1715 = vadd.s32 %v1700, 120
      %v1716 = vadd.s32 %v1700, 128
      %v1717 = vadd.s32 %v1700, 136
      %v1718 = vadd.s32 %v1700, 144
      %v1719 = vadd.s32 %v1700, 152
      %v1720 = vadd.s32 %v1700, 160
      %v1721 = vadd.s32 %v1700, 168
      %v1722 = vadd.s32 %v1700, 176
      %v1723 = vadd.s32 %v1700, 184
      %v1724 = vadd.s32 %v1700, 192
      %v1725 = vadd.s32 %v1700, 200
      %v1726 = vadd.s32 %v1700, 208
      %v1727 = vadd.s32 %v1700, 216
      %v1728 = vadd.s32 %v1700, 224
      %v1729 = vadd.s32 %v1700, 232
      %v1730 = vadd.s32 %v1700, 240
      %v1731 = vadd.s32 %v1700, 248
      %v1732 = vadd.s32 %v1700, 256
      %v1733 = vadd.s32 %v1700, 264
      %v1734 = vadd.s32 %v1700, 272
      %v1735 = vadd.s32 %v1700, 280
      %v1736 = vadd.s32 %v1700, 288
      %v1737 = vadd.s32 %v1700, 296
      %v1738 = vadd.s32 %v1700, 304
      %v1739 = vadd.s32 %v1700, 312
      %v1740 = vadd.s32 %v1700, 320
      %v1741 = vadd.s32 %v1700, 328
      %v1742 = vadd.s32 %v1700, 336
      %v1743 = vadd.s32 %v1700, 344
      %v1744 = vadd.s32 %v1700, 352
      %v1745 = vadd.s32 %v1700, 360
      %v1746 = vadd.s32 %v1700, 368
      %v1747 = vadd.s32 %v1700, 376
      %v1748 = vadd.s32 %v1700, 384
      %v1749 = vadd.s32 %v1700, 392
      %v1750 = vadd.s32 %v1700, 400
      %v1751 = vadd.s32 %v1700, 408
      %v1752 = vadd.s32 %v1700, 416
      %v1753 = vadd.s32 %v1700, 424
      %v1754 = vadd.s32 %v1700, 432
      %v1755 = vadd.s32 %v1700, 440
      %v1756 = vadd.s32 %v1700, 448
      %v1757 = vadd.s32 %v1700, 456
      %v1758 = vadd.s32 %v1700, 464
      %v1759 = vadd.s32 %v1700, 472
      %v1760 = vadd.s32 %v1700, 480
      %v1761 = vadd.s32 %v1700, 488
      %v1762 = vadd.s32 %v1700, 496
      %v1763 = vadd.s32 %v1700, 504
      %v1764 = vstv %s1698
      %v1765 = vadd.s32 %v1764, %v1700
      %v1766 = vadd.s32 %v1764, %v1701
      %v1767 = vadd.s32 %v1764, %v1702
      %v1768 = vadd.s32 %v1764, %v1703
      %v1769 = vadd.s32 %v1764, %v1704
      %v1770 = vadd.s32 %v1764, %v1705
      %v1771 = vadd.s32 %v1764, %v1706
      %v1772 = vadd.s32 %v1764, %v1707
      %v1773 = vadd.s32 %v1764, %v1708
      %v1774 = vadd.s32 %v1764, %v1709
      %v1775 = vadd.s32 %v1764, %v1710
      %v1776 = vadd.s32 %v1764, %v1711
      %v1777 = vadd.s32 %v1764, %v1712
      %v1778 = vadd.s32 %v1764, %v1713
      %v1779 = vadd.s32 %v1764, %v1714
      %v1780 = vadd.s32 %v1764, %v1715
      %v1781 = vadd.s32 %v1764, %v1716
      %v1782 = vadd.s32 %v1764, %v1717
      %v1783 = vadd.s32 %v1764, %v1718
      %v1784 = vadd.s32 %v1764, %v1719
      %v1785 = vadd.s32 %v1764, %v1720
      %v1786 = vadd.s32 %v1764, %v1721
      %v1787 = vadd.s32 %v1764, %v1722
      %v1788 = vadd.s32 %v1764, %v1723
      %v1789 = vadd.s32 %v1764, %v1724
      %v1790 = vadd.s32 %v1764, %v1725
      %v1791 = vadd.s32 %v1764, %v1726
      %v1792 = vadd.s32 %v1764, %v1727
      %v1793 = vadd.s32 %v1764, %v1728
      %v1794 = vadd.s32 %v1764, %v1729
      %v1795 = vadd.s32 %v1764, %v1730
      %v1796 = vadd.s32 %v1764, %v1731
      %v1797 = vadd.s32 %v1764, %v1732
      %v1798 = vadd.s32 %v1764, %v1733
      %v1799 = vadd.s32 %v1764, %v1734
      %v1800 = vadd.s32 %v1764, %v1735
      %v1801 = vadd.s32 %v1764, %v1736
      %v1802 = vadd.s32 %v1764, %v1737
      %v1803 = vadd.s32 %v1764, %v1738
      %v1804 = vadd.s32 %v1764, %v1739
      %v1805 = vadd.s32 %v1764, %v1740
      %v1806 = vadd.s32 %v1764, %v1741
      %v1807 = vadd.s32 %v1764, %v1742
      %v1808 = vadd.s32 %v1764, %v1743
      %v1809 = vadd.s32 %v1764, %v1744
      %v1810 = vadd.s32 %v1764, %v1745
      %v1811 = vadd.s32 %v1764, %v1746
      %v1812 = vadd.s32 %v1764, %v1747
      %v1813 = vadd.s32 %v1764, %v1748
      %v1814 = vadd.s32 %v1764, %v1749
      %v1815 = vadd.s32 %v1764, %v1750
      %v1816 = vadd.s32 %v1764, %v1751
      %v1817 = vadd.s32 %v1764, %v1752
      %v1818 = vadd.s32 %v1764, %v1753
      %v1819 = vadd.s32 %v1764, %v1754
      %v1820 = vadd.s32 %v1764, %v1755
      %v1821 = vadd.s32 %v1764, %v1756
      %v1822 = vadd.s32 %v1764, %v1757
      %v1823 = vadd.s32 %v1764, %v1758
      %v1824 = vadd.s32 %v1764, %v1759
      %v1825 = vadd.s32 %v1764, %v1760
      %v1826 = vadd.s32 %v1764, %v1761
      %v1827 = vadd.s32 %v1764, %v1762
      %v1828 = vadd.s32 %v1764, %v1763
      %vm1829 = vcmp.ge.s32.totalorder %v1765, 256
      %vm1830 = vcmp.ge.s32.totalorder %v1766, 256
      %vm1831 = vcmp.ge.s32.totalorder %v1767, 256
      %vm1832 = vcmp.ge.s32.totalorder %v1768, 256
      %vm1833 = vcmp.ge.s32.totalorder %v1769, 256
      %vm1834 = vcmp.ge.s32.totalorder %v1770, 256
      %vm1835 = vcmp.ge.s32.totalorder %v1771, 256
      %vm1836 = vcmp.ge.s32.totalorder %v1772, 256
      %vm1837 = vcmp.ge.s32.totalorder %v1773, 256
      %vm1838 = vcmp.ge.s32.totalorder %v1774, 256
      %vm1839 = vcmp.ge.s32.totalorder %v1775, 256
      %vm1840 = vcmp.ge.s32.totalorder %v1776, 256
      %vm1841 = vcmp.ge.s32.totalorder %v1777, 256
      %vm1842 = vcmp.ge.s32.totalorder %v1778, 256
      %vm1843 = vcmp.ge.s32.totalorder %v1779, 256
      %vm1844 = vcmp.ge.s32.totalorder %v1780, 256
      %vm1845 = vcmp.ge.s32.totalorder %v1781, 256
      %vm1846 = vcmp.ge.s32.totalorder %v1782, 256
      %vm1847 = vcmp.ge.s32.totalorder %v1783, 256
      %vm1848 = vcmp.ge.s32.totalorder %v1784, 256
      %vm1849 = vcmp.ge.s32.totalorder %v1785, 256
      %vm1850 = vcmp.ge.s32.totalorder %v1786, 256
      %vm1851 = vcmp.ge.s32.totalorder %v1787, 256
      %vm1852 = vcmp.ge.s32.totalorder %v1788, 256
      %vm1853 = vcmp.ge.s32.totalorder %v1789, 256
      %vm1854 = vcmp.ge.s32.totalorder %v1790, 256
      %vm1855 = vcmp.ge.s32.totalorder %v1791, 256
      %vm1856 = vcmp.ge.s32.totalorder %v1792, 256
      %vm1857 = vcmp.ge.s32.totalorder %v1793, 256
      %vm1858 = vcmp.ge.s32.totalorder %v1794, 256
      %vm1859 = vcmp.ge.s32.totalorder %v1795, 256
      %vm1860 = vcmp.ge.s32.totalorder %v1796, 256
      %vm1861 = vcmp.ge.s32.totalorder %v1797, 256
      %vm1862 = vcmp.ge.s32.totalorder %v1798, 256
      %vm1863 = vcmp.ge.s32.totalorder %v1799, 256
      %vm1864 = vcmp.ge.s32.totalorder %v1800, 256
      %vm1865 = vcmp.ge.s32.totalorder %v1801, 256
      %vm1866 = vcmp.ge.s32.totalorder %v1802, 256
      %vm1867 = vcmp.ge.s32.totalorder %v1803, 256
      %vm1868 = vcmp.ge.s32.totalorder %v1804, 256
      %vm1869 = vcmp.ge.s32.totalorder %v1805, 256
      %vm1870 = vcmp.ge.s32.totalorder %v1806, 256
      %vm1871 = vcmp.ge.s32.totalorder %v1807, 256
      %vm1872 = vcmp.ge.s32.totalorder %v1808, 256
      %vm1873 = vcmp.ge.s32.totalorder %v1809, 256
      %vm1874 = vcmp.ge.s32.totalorder %v1810, 256
      %vm1875 = vcmp.ge.s32.totalorder %v1811, 256
      %vm1876 = vcmp.ge.s32.totalorder %v1812, 256
      %vm1877 = vcmp.ge.s32.totalorder %v1813, 256
      %vm1878 = vcmp.ge.s32.totalorder %v1814, 256
      %vm1879 = vcmp.ge.s32.totalorder %v1815, 256
      %vm1880 = vcmp.ge.s32.totalorder %v1816, 256
      %vm1881 = vcmp.ge.s32.totalorder %v1817, 256
      %vm1882 = vcmp.ge.s32.totalorder %v1818, 256
      %vm1883 = vcmp.ge.s32.totalorder %v1819, 256
      %vm1884 = vcmp.ge.s32.totalorder %v1820, 256
      %vm1885 = vcmp.ge.s32.totalorder %v1821, 256
      %vm1886 = vcmp.ge.s32.totalorder %v1822, 256
      %vm1887 = vcmp.ge.s32.totalorder %v1823, 256
      %vm1888 = vcmp.ge.s32.totalorder %v1824, 256
      %vm1889 = vcmp.ge.s32.totalorder %v1825, 256
      %vm1890 = vcmp.ge.s32.totalorder %v1826, 256
      %vm1891 = vcmp.ge.s32.totalorder %v1827, 256
      %vm1892 = vcmp.ge.s32.totalorder %v1828, 256
      %v1893 = vsel %vm1829, 1, 0
      %v1894 = vsel %vm1830, 1, 0
      %v1895 = vsel %vm1831, 1, 0
      %v1896 = vsel %vm1832, 1, 0
      %v1897 = vsel %vm1833, 1, 0
      %v1898 = vsel %vm1834, 1, 0
      %v1899 = vsel %vm1835, 1, 0
      %v1900 = vsel %vm1836, 1, 0
      %v1901 = vsel %vm1837, 1, 0
      %v1902 = vsel %vm1838, 1, 0
      %v1903 = vsel %vm1839, 1, 0
      %v1904 = vsel %vm1840, 1, 0
      %v1905 = vsel %vm1841, 1, 0
      %v1906 = vsel %vm1842, 1, 0
      %v1907 = vsel %vm1843, 1, 0
      %v1908 = vsel %vm1844, 1, 0
      %v1909 = vsel %vm1845, 1, 0
      %v1910 = vsel %vm1846, 1, 0
      %v1911 = vsel %vm1847, 1, 0
      %v1912 = vsel %vm1848, 1, 0
      %v1913 = vsel %vm1849, 1, 0
      %v1914 = vsel %vm1850, 1, 0
      %v1915 = vsel %vm1851, 1, 0
      %v1916 = vsel %vm1852, 1, 0
      %v1917 = vsel %vm1853, 1, 0
      %v1918 = vsel %vm1854, 1, 0
      %v1919 = vsel %vm1855, 1, 0
      %v1920 = vsel %vm1856, 1, 0
      %v1921 = vsel %vm1857, 1, 0
      %v1922 = vsel %vm1858, 1, 0
      %v1923 = vsel %vm1859, 1, 0
      %v1924 = vsel %vm1860, 1, 0
      %v1925 = vsel %vm1861, 1, 0
      %v1926 = vsel %vm1862, 1, 0
      %v1927 = vsel %vm1863, 1, 0
      %v1928 = vsel %vm1864, 1, 0
      %v1929 = vsel %vm1865, 1, 0
      %v1930 = vsel %vm1866, 1, 0
      %v1931 = vsel %vm1867, 1, 0
      %v1932 = vsel %vm1868, 1, 0
      %v1933 = vsel %vm1869, 1, 0
      %v1934 = vsel %vm1870, 1, 0
      %v1935 = vsel %vm1871, 1, 0
      %v1936 = vsel %vm1872, 1, 0
      %v1937 = vsel %vm1873, 1, 0
      %v1938 = vsel %vm1874, 1, 0
      %v1939 = vsel %vm1875, 1, 0
      %v1940 = vsel %vm1876, 1, 0
      %v1941 = vsel %vm1877, 1, 0
      %v1942 = vsel %vm1878, 1, 0
      %v1943 = vsel %vm1879, 1, 0
      %v1944 = vsel %vm1880, 1, 0
      %v1945 = vsel %vm1881, 1, 0
      %v1946 = vsel %vm1882, 1, 0
      %v1947 = vsel %vm1883, 1, 0
      %v1948 = vsel %vm1884, 1, 0
      %v1949 = vsel %vm1885, 1, 0
      %v1950 = vsel %vm1886, 1, 0
      %v1951 = vsel %vm1887, 1, 0
      %v1952 = vsel %vm1888, 1, 0
      %v1953 = vsel %vm1889, 1, 0
      %v1954 = vsel %vm1890, 1, 0
      %v1955 = vsel %vm1891, 1, 0
      %v1956 = vsel %vm1892, 1, 0
      %vm1957 = vcmp.ge.s32.totalorder %v1765, 512
      %vm1958 = vcmp.ge.s32.totalorder %v1766, 512
      %vm1959 = vcmp.ge.s32.totalorder %v1767, 512
      %vm1960 = vcmp.ge.s32.totalorder %v1768, 512
      %vm1961 = vcmp.ge.s32.totalorder %v1769, 512
      %vm1962 = vcmp.ge.s32.totalorder %v1770, 512
      %vm1963 = vcmp.ge.s32.totalorder %v1771, 512
      %vm1964 = vcmp.ge.s32.totalorder %v1772, 512
      %vm1965 = vcmp.ge.s32.totalorder %v1773, 512
      %vm1966 = vcmp.ge.s32.totalorder %v1774, 512
      %vm1967 = vcmp.ge.s32.totalorder %v1775, 512
      %vm1968 = vcmp.ge.s32.totalorder %v1776, 512
      %vm1969 = vcmp.ge.s32.totalorder %v1777, 512
      %vm1970 = vcmp.ge.s32.totalorder %v1778, 512
      %vm1971 = vcmp.ge.s32.totalorder %v1779, 512
      %vm1972 = vcmp.ge.s32.totalorder %v1780, 512
      %vm1973 = vcmp.ge.s32.totalorder %v1781, 512
      %vm1974 = vcmp.ge.s32.totalorder %v1782, 512
      %vm1975 = vcmp.ge.s32.totalorder %v1783, 512
      %vm1976 = vcmp.ge.s32.totalorder %v1784, 512
      %vm1977 = vcmp.ge.s32.totalorder %v1785, 512
      %vm1978 = vcmp.ge.s32.totalorder %v1786, 512
      %vm1979 = vcmp.ge.s32.totalorder %v1787, 512
      %vm1980 = vcmp.ge.s32.totalorder %v1788, 512
      %vm1981 = vcmp.ge.s32.totalorder %v1789, 512
      %vm1982 = vcmp.ge.s32.totalorder %v1790, 512
      %vm1983 = vcmp.ge.s32.totalorder %v1791, 512
      %vm1984 = vcmp.ge.s32.totalorder %v1792, 512
      %vm1985 = vcmp.ge.s32.totalorder %v1793, 512
      %vm1986 = vcmp.ge.s32.totalorder %v1794, 512
      %vm1987 = vcmp.ge.s32.totalorder %v1795, 512
      %vm1988 = vcmp.ge.s32.totalorder %v1796, 512
      %vm1989 = vcmp.ge.s32.totalorder %v1797, 512
      %vm1990 = vcmp.ge.s32.totalorder %v1798, 512
      %vm1991 = vcmp.ge.s32.totalorder %v1799, 512
      %vm1992 = vcmp.ge.s32.totalorder %v1800, 512
      %vm1993 = vcmp.ge.s32.totalorder %v1801, 512
      %vm1994 = vcmp.ge.s32.totalorder %v1802, 512
      %vm1995 = vcmp.ge.s32.totalorder %v1803, 512
      %vm1996 = vcmp.ge.s32.totalorder %v1804, 512
      %vm1997 = vcmp.ge.s32.totalorder %v1805, 512
      %vm1998 = vcmp.ge.s32.totalorder %v1806, 512
      %vm1999 = vcmp.ge.s32.totalorder %v1807, 512
      %vm2000 = vcmp.ge.s32.totalorder %v1808, 512
      %vm2001 = vcmp.ge.s32.totalorder %v1809, 512
      %vm2002 = vcmp.ge.s32.totalorder %v1810, 512
      %vm2003 = vcmp.ge.s32.totalorder %v1811, 512
      %vm2004 = vcmp.ge.s32.totalorder %v1812, 512
      %vm2005 = vcmp.ge.s32.totalorder %v1813, 512
      %vm2006 = vcmp.ge.s32.totalorder %v1814, 512
      %vm2007 = vcmp.ge.s32.totalorder %v1815, 512
      %vm2008 = vcmp.ge.s32.totalorder %v1816, 512
      %vm2009 = vcmp.ge.s32.totalorder %v1817, 512
      %vm2010 = vcmp.ge.s32.totalorder %v1818, 512
      %vm2011 = vcmp.ge.s32.totalorder %v1819, 512
      %vm2012 = vcmp.ge.s32.totalorder %v1820, 512
      %vm2013 = vcmp.ge.s32.totalorder %v1821, 512
      %vm2014 = vcmp.ge.s32.totalorder %v1822, 512
      %vm2015 = vcmp.ge.s32.totalorder %v1823, 512
      %vm2016 = vcmp.ge.s32.totalorder %v1824, 512
      %vm2017 = vcmp.ge.s32.totalorder %v1825, 512
      %vm2018 = vcmp.ge.s32.totalorder %v1826, 512
      %vm2019 = vcmp.ge.s32.totalorder %v1827, 512
      %vm2020 = vcmp.ge.s32.totalorder %v1828, 512
      %v2021 = vsel %vm1957, 1, 0
      %v2022 = vsel %vm1958, 1, 0
      %v2023 = vsel %vm1959, 1, 0
      %v2024 = vsel %vm1960, 1, 0
      %v2025 = vsel %vm1961, 1, 0
      %v2026 = vsel %vm1962, 1, 0
      %v2027 = vsel %vm1963, 1, 0
      %v2028 = vsel %vm1964, 1, 0
      %v2029 = vsel %vm1965, 1, 0
      %v2030 = vsel %vm1966, 1, 0
      %v2031 = vsel %vm1967, 1, 0
      %v2032 = vsel %vm1968, 1, 0
      %v2033 = vsel %vm1969, 1, 0
      %v2034 = vsel %vm1970, 1, 0
      %v2035 = vsel %vm1971, 1, 0
      %v2036 = vsel %vm1972, 1, 0
      %v2037 = vsel %vm1973, 1, 0
      %v2038 = vsel %vm1974, 1, 0
      %v2039 = vsel %vm1975, 1, 0
      %v2040 = vsel %vm1976, 1, 0
      %v2041 = vsel %vm1977, 1, 0
      %v2042 = vsel %vm1978, 1, 0
      %v2043 = vsel %vm1979, 1, 0
      %v2044 = vsel %vm1980, 1, 0
      %v2045 = vsel %vm1981, 1, 0
      %v2046 = vsel %vm1982, 1, 0
      %v2047 = vsel %vm1983, 1, 0
      %v2048 = vsel %vm1984, 1, 0
      %v2049 = vsel %vm1985, 1, 0
      %v2050 = vsel %vm1986, 1, 0
      %v2051 = vsel %vm1987, 1, 0
      %v2052 = vsel %vm1988, 1, 0
      %v2053 = vsel %vm1989, 1, 0
      %v2054 = vsel %vm1990, 1, 0
      %v2055 = vsel %vm1991, 1, 0
      %v2056 = vsel %vm1992, 1, 0
      %v2057 = vsel %vm1993, 1, 0
      %v2058 = vsel %vm1994, 1, 0
      %v2059 = vsel %vm1995, 1, 0
      %v2060 = vsel %vm1996, 1, 0
      %v2061 = vsel %vm1997, 1, 0
      %v2062 = vsel %vm1998, 1, 0
      %v2063 = vsel %vm1999, 1, 0
      %v2064 = vsel %vm2000, 1, 0
      %v2065 = vsel %vm2001, 1, 0
      %v2066 = vsel %vm2002, 1, 0
      %v2067 = vsel %vm2003, 1, 0
      %v2068 = vsel %vm2004, 1, 0
      %v2069 = vsel %vm2005, 1, 0
      %v2070 = vsel %vm2006, 1, 0
      %v2071 = vsel %vm2007, 1, 0
      %v2072 = vsel %vm2008, 1, 0
      %v2073 = vsel %vm2009, 1, 0
      %v2074 = vsel %vm2010, 1, 0
      %v2075 = vsel %vm2011, 1, 0
      %v2076 = vsel %vm2012, 1, 0
      %v2077 = vsel %vm2013, 1, 0
      %v2078 = vsel %vm2014, 1, 0
      %v2079 = vsel %vm2015, 1, 0
      %v2080 = vsel %vm2016, 1, 0
      %v2081 = vsel %vm2017, 1, 0
      %v2082 = vsel %vm2018, 1, 0
      %v2083 = vsel %vm2019, 1, 0
      %v2084 = vsel %vm2020, 1, 0
      %v2085 = vadd.s32 %v1893, %v2021
      %v2086 = vadd.s32 %v1894, %v2022
      %v2087 = vadd.s32 %v1895, %v2023
      %v2088 = vadd.s32 %v1896, %v2024
      %v2089 = vadd.s32 %v1897, %v2025
      %v2090 = vadd.s32 %v1898, %v2026
      %v2091 = vadd.s32 %v1899, %v2027
      %v2092 = vadd.s32 %v1900, %v2028
      %v2093 = vadd.s32 %v1901, %v2029
      %v2094 = vadd.s32 %v1902, %v2030
      %v2095 = vadd.s32 %v1903, %v2031
      %v2096 = vadd.s32 %v1904, %v2032
      %v2097 = vadd.s32 %v1905, %v2033
      %v2098 = vadd.s32 %v1906, %v2034
      %v2099 = vadd.s32 %v1907, %v2035
      %v2100 = vadd.s32 %v1908, %v2036
      %v2101 = vadd.s32 %v1909, %v2037
      %v2102 = vadd.s32 %v1910, %v2038
      %v2103 = vadd.s32 %v1911, %v2039
      %v2104 = vadd.s32 %v1912, %v2040
      %v2105 = vadd.s32 %v1913, %v2041
      %v2106 = vadd.s32 %v1914, %v2042
      %v2107 = vadd.s32 %v1915, %v2043
      %v2108 = vadd.s32 %v1916, %v2044
      %v2109 = vadd.s32 %v1917, %v2045
      %v2110 = vadd.s32 %v1918, %v2046
      %v2111 = vadd.s32 %v1919, %v2047
      %v2112 = vadd.s32 %v1920, %v2048
      %v2113 = vadd.s32 %v1921, %v2049
      %v2114 = vadd.s32 %v1922, %v2050
      %v2115 = vadd.s32 %v1923, %v2051
      %v2116 = vadd.s32 %v1924, %v2052
      %v2117 = vadd.s32 %v1925, %v2053
      %v2118 = vadd.s32 %v1926, %v2054
      %v2119 = vadd.s32 %v1927, %v2055
      %v2120 = vadd.s32 %v1928, %v2056
      %v2121 = vadd.s32 %v1929, %v2057
      %v2122 = vadd.s32 %v1930, %v2058
      %v2123 = vadd.s32 %v1931, %v2059
      %v2124 = vadd.s32 %v1932, %v2060
      %v2125 = vadd.s32 %v1933, %v2061
      %v2126 = vadd.s32 %v1934, %v2062
      %v2127 = vadd.s32 %v1935, %v2063
      %v2128 = vadd.s32 %v1936, %v2064
      %v2129 = vadd.s32 %v1937, %v2065
      %v2130 = vadd.s32 %v1938, %v2066
      %v2131 = vadd.s32 %v1939, %v2067
      %v2132 = vadd.s32 %v1940, %v2068
      %v2133 = vadd.s32 %v1941, %v2069
      %v2134 = vadd.s32 %v1942, %v2070
      %v2135 = vadd.s32 %v1943, %v2071
      %v2136 = vadd.s32 %v1944, %v2072
      %v2137 = vadd.s32 %v1945, %v2073
      %v2138 = vadd.s32 %v1946, %v2074
      %v2139 = vadd.s32 %v1947, %v2075
      %v2140 = vadd.s32 %v1948, %v2076
      %v2141 = vadd.s32 %v1949, %v2077
      %v2142 = vadd.s32 %v1950, %v2078
      %v2143 = vadd.s32 %v1951, %v2079
      %v2144 = vadd.s32 %v1952, %v2080
      %v2145 = vadd.s32 %v1953, %v2081
      %v2146 = vadd.s32 %v1954, %v2082
      %v2147 = vadd.s32 %v1955, %v2083
      %v2148 = vadd.s32 %v1956, %v2084
      %vm2149 = vcmp.ge.s32.totalorder %v1765, 768
      %vm2150 = vcmp.ge.s32.totalorder %v1766, 768
      %vm2151 = vcmp.ge.s32.totalorder %v1767, 768
      %vm2152 = vcmp.ge.s32.totalorder %v1768, 768
      %vm2153 = vcmp.ge.s32.totalorder %v1769, 768
      %vm2154 = vcmp.ge.s32.totalorder %v1770, 768
      %vm2155 = vcmp.ge.s32.totalorder %v1771, 768
      %vm2156 = vcmp.ge.s32.totalorder %v1772, 768
      %vm2157 = vcmp.ge.s32.totalorder %v1773, 768
      %vm2158 = vcmp.ge.s32.totalorder %v1774, 768
      %vm2159 = vcmp.ge.s32.totalorder %v1775, 768
      %vm2160 = vcmp.ge.s32.totalorder %v1776, 768
      %vm2161 = vcmp.ge.s32.totalorder %v1777, 768
      %vm2162 = vcmp.ge.s32.totalorder %v1778, 768
      %vm2163 = vcmp.ge.s32.totalorder %v1779, 768
      %vm2164 = vcmp.ge.s32.totalorder %v1780, 768
      %vm2165 = vcmp.ge.s32.totalorder %v1781, 768
      %vm2166 = vcmp.ge.s32.totalorder %v1782, 768
      %vm2167 = vcmp.ge.s32.totalorder %v1783, 768
      %vm2168 = vcmp.ge.s32.totalorder %v1784, 768
      %vm2169 = vcmp.ge.s32.totalorder %v1785, 768
      %vm2170 = vcmp.ge.s32.totalorder %v1786, 768
      %vm2171 = vcmp.ge.s32.totalorder %v1787, 768
      %vm2172 = vcmp.ge.s32.totalorder %v1788, 768
      %vm2173 = vcmp.ge.s32.totalorder %v1789, 768
      %vm2174 = vcmp.ge.s32.totalorder %v1790, 768
      %vm2175 = vcmp.ge.s32.totalorder %v1791, 768
      %vm2176 = vcmp.ge.s32.totalorder %v1792, 768
      %vm2177 = vcmp.ge.s32.totalorder %v1793, 768
      %vm2178 = vcmp.ge.s32.totalorder %v1794, 768
      %vm2179 = vcmp.ge.s32.totalorder %v1795, 768
      %vm2180 = vcmp.ge.s32.totalorder %v1796, 768
      %vm2181 = vcmp.ge.s32.totalorder %v1797, 768
      %vm2182 = vcmp.ge.s32.totalorder %v1798, 768
      %vm2183 = vcmp.ge.s32.totalorder %v1799, 768
      %vm2184 = vcmp.ge.s32.totalorder %v1800, 768
      %vm2185 = vcmp.ge.s32.totalorder %v1801, 768
      %vm2186 = vcmp.ge.s32.totalorder %v1802, 768
      %vm2187 = vcmp.ge.s32.totalorder %v1803, 768
      %vm2188 = vcmp.ge.s32.totalorder %v1804, 768
      %vm2189 = vcmp.ge.s32.totalorder %v1805, 768
      %vm2190 = vcmp.ge.s32.totalorder %v1806, 768
      %vm2191 = vcmp.ge.s32.totalorder %v1807, 768
      %vm2192 = vcmp.ge.s32.totalorder %v1808, 768
      %vm2193 = vcmp.ge.s32.totalorder %v1809, 768
      %vm2194 = vcmp.ge.s32.totalorder %v1810, 768
      %vm2195 = vcmp.ge.s32.totalorder %v1811, 768
      %vm2196 = vcmp.ge.s32.totalorder %v1812, 768
      %vm2197 = vcmp.ge.s32.totalorder %v1813, 768
      %vm2198 = vcmp.ge.s32.totalorder %v1814, 768
      %vm2199 = vcmp.ge.s32.totalorder %v1815, 768
      %vm2200 = vcmp.ge.s32.totalorder %v1816, 768
      %vm2201 = vcmp.ge.s32.totalorder %v1817, 768
      %vm2202 = vcmp.ge.s32.totalorder %v1818, 768
      %vm2203 = vcmp.ge.s32.totalorder %v1819, 768
      %vm2204 = vcmp.ge.s32.totalorder %v1820, 768
      %vm2205 = vcmp.ge.s32.totalorder %v1821, 768
      %vm2206 = vcmp.ge.s32.totalorder %v1822, 768
      %vm2207 = vcmp.ge.s32.totalorder %v1823, 768
      %vm2208 = vcmp.ge.s32.totalorder %v1824, 768
      %vm2209 = vcmp.ge.s32.totalorder %v1825, 768
      %vm2210 = vcmp.ge.s32.totalorder %v1826, 768
      %vm2211 = vcmp.ge.s32.totalorder %v1827, 768
      %vm2212 = vcmp.ge.s32.totalorder %v1828, 768
      %v2213 = vsel %vm2149, 1, 0
      %v2214 = vsel %vm2150, 1, 0
      %v2215 = vsel %vm2151, 1, 0
      %v2216 = vsel %vm2152, 1, 0
      %v2217 = vsel %vm2153, 1, 0
      %v2218 = vsel %vm2154, 1, 0
      %v2219 = vsel %vm2155, 1, 0
      %v2220 = vsel %vm2156, 1, 0
      %v2221 = vsel %vm2157, 1, 0
      %v2222 = vsel %vm2158, 1, 0
      %v2223 = vsel %vm2159, 1, 0
      %v2224 = vsel %vm2160, 1, 0
      %v2225 = vsel %vm2161, 1, 0
      %v2226 = vsel %vm2162, 1, 0
      %v2227 = vsel %vm2163, 1, 0
      %v2228 = vsel %vm2164, 1, 0
      %v2229 = vsel %vm2165, 1, 0
      %v2230 = vsel %vm2166, 1, 0
      %v2231 = vsel %vm2167, 1, 0
      %v2232 = vsel %vm2168, 1, 0
      %v2233 = vsel %vm2169, 1, 0
      %v2234 = vsel %vm2170, 1, 0
      %v2235 = vsel %vm2171, 1, 0
      %v2236 = vsel %vm2172, 1, 0
      %v2237 = vsel %vm2173, 1, 0
      %v2238 = vsel %vm2174, 1, 0
      %v2239 = vsel %vm2175, 1, 0
      %v2240 = vsel %vm2176, 1, 0
      %v2241 = vsel %vm2177, 1, 0
      %v2242 = vsel %vm2178, 1, 0
      %v2243 = vsel %vm2179, 1, 0
      %v2244 = vsel %vm2180, 1, 0
      %v2245 = vsel %vm2181, 1, 0
      %v2246 = vsel %vm2182, 1, 0
      %v2247 = vsel %vm2183, 1, 0
      %v2248 = vsel %vm2184, 1, 0
      %v2249 = vsel %vm2185, 1, 0
      %v2250 = vsel %vm2186, 1, 0
      %v2251 = vsel %vm2187, 1, 0
      %v2252 = vsel %vm2188, 1, 0
      %v2253 = vsel %vm2189, 1, 0
      %v2254 = vsel %vm2190, 1, 0
      %v2255 = vsel %vm2191, 1, 0
      %v2256 = vsel %vm2192, 1, 0
      %v2257 = vsel %vm2193, 1, 0
      %v2258 = vsel %vm2194, 1, 0
      %v2259 = vsel %vm2195, 1, 0
      %v2260 = vsel %vm2196, 1, 0
      %v2261 = vsel %vm2197, 1, 0
      %v2262 = vsel %vm2198, 1, 0
      %v2263 = vsel %vm2199, 1, 0
      %v2264 = vsel %vm2200, 1, 0
      %v2265 = vsel %vm2201, 1, 0
      %v2266 = vsel %vm2202, 1, 0
      %v2267 = vsel %vm2203, 1, 0
      %v2268 = vsel %vm2204, 1, 0
      %v2269 = vsel %vm2205, 1, 0
      %v2270 = vsel %vm2206, 1, 0
      %v2271 = vsel %vm2207, 1, 0
      %v2272 = vsel %vm2208, 1, 0
      %v2273 = vsel %vm2209, 1, 0
      %v2274 = vsel %vm2210, 1, 0
      %v2275 = vsel %vm2211, 1, 0
      %v2276 = vsel %vm2212, 1, 0
      %v2277 = vadd.s32 %v2085, %v2213
      %v2278 = vadd.s32 %v2086, %v2214
      %v2279 = vadd.s32 %v2087, %v2215
      %v2280 = vadd.s32 %v2088, %v2216
      %v2281 = vadd.s32 %v2089, %v2217
      %v2282 = vadd.s32 %v2090, %v2218
      %v2283 = vadd.s32 %v2091, %v2219
      %v2284 = vadd.s32 %v2092, %v2220
      %v2285 = vadd.s32 %v2093, %v2221
      %v2286 = vadd.s32 %v2094, %v2222
      %v2287 = vadd.s32 %v2095, %v2223
      %v2288 = vadd.s32 %v2096, %v2224
      %v2289 = vadd.s32 %v2097, %v2225
      %v2290 = vadd.s32 %v2098, %v2226
      %v2291 = vadd.s32 %v2099, %v2227
      %v2292 = vadd.s32 %v2100, %v2228
      %v2293 = vadd.s32 %v2101, %v2229
      %v2294 = vadd.s32 %v2102, %v2230
      %v2295 = vadd.s32 %v2103, %v2231
      %v2296 = vadd.s32 %v2104, %v2232
      %v2297 = vadd.s32 %v2105, %v2233
      %v2298 = vadd.s32 %v2106, %v2234
      %v2299 = vadd.s32 %v2107, %v2235
      %v2300 = vadd.s32 %v2108, %v2236
      %v2301 = vadd.s32 %v2109, %v2237
      %v2302 = vadd.s32 %v2110, %v2238
      %v2303 = vadd.s32 %v2111, %v2239
      %v2304 = vadd.s32 %v2112, %v2240
      %v2305 = vadd.s32 %v2113, %v2241
      %v2306 = vadd.s32 %v2114, %v2242
      %v2307 = vadd.s32 %v2115, %v2243
      %v2308 = vadd.s32 %v2116, %v2244
      %v2309 = vadd.s32 %v2117, %v2245
      %v2310 = vadd.s32 %v2118, %v2246
      %v2311 = vadd.s32 %v2119, %v2247
      %v2312 = vadd.s32 %v2120, %v2248
      %v2313 = vadd.s32 %v2121, %v2249
      %v2314 = vadd.s32 %v2122, %v2250
      %v2315 = vadd.s32 %v2123, %v2251
      %v2316 = vadd.s32 %v2124, %v2252
      %v2317 = vadd.s32 %v2125, %v2253
      %v2318 = vadd.s32 %v2126, %v2254
      %v2319 = vadd.s32 %v2127, %v2255
      %v2320 = vadd.s32 %v2128, %v2256
      %v2321 = vadd.s32 %v2129, %v2257
      %v2322 = vadd.s32 %v2130, %v2258
      %v2323 = vadd.s32 %v2131, %v2259
      %v2324 = vadd.s32 %v2132, %v2260
      %v2325 = vadd.s32 %v2133, %v2261
      %v2326 = vadd.s32 %v2134, %v2262
      %v2327 = vadd.s32 %v2135, %v2263
      %v2328 = vadd.s32 %v2136, %v2264
      %v2329 = vadd.s32 %v2137, %v2265
      %v2330 = vadd.s32 %v2138, %v2266
      %v2331 = vadd.s32 %v2139, %v2267
      %v2332 = vadd.s32 %v2140, %v2268
      %v2333 = vadd.s32 %v2141, %v2269
      %v2334 = vadd.s32 %v2142, %v2270
      %v2335 = vadd.s32 %v2143, %v2271
      %v2336 = vadd.s32 %v2144, %v2272
      %v2337 = vadd.s32 %v2145, %v2273
      %v2338 = vadd.s32 %v2146, %v2274
      %v2339 = vadd.s32 %v2147, %v2275
      %v2340 = vadd.s32 %v2148, %v2276
      %v2341 = vlaneseq
      %v2342 = vand.u32 %v2341, 127
      %vm2343 = vcmp.eq.s32.totalorder %v2342, %v2277
      %vm2344 = vcmp.eq.s32.totalorder %v2342, %v2278
      %vm2345 = vcmp.eq.s32.totalorder %v2342, %v2279
      %vm2346 = vcmp.eq.s32.totalorder %v2342, %v2280
      %vm2347 = vcmp.eq.s32.totalorder %v2342, %v2281
      %vm2348 = vcmp.eq.s32.totalorder %v2342, %v2282
      %vm2349 = vcmp.eq.s32.totalorder %v2342, %v2283
      %vm2350 = vcmp.eq.s32.totalorder %v2342, %v2284
      %vm2351 = vcmp.eq.s32.totalorder %v2342, %v2285
      %vm2352 = vcmp.eq.s32.totalorder %v2342, %v2286
      %vm2353 = vcmp.eq.s32.totalorder %v2342, %v2287
      %vm2354 = vcmp.eq.s32.totalorder %v2342, %v2288
      %vm2355 = vcmp.eq.s32.totalorder %v2342, %v2289
      %vm2356 = vcmp.eq.s32.totalorder %v2342, %v2290
      %vm2357 = vcmp.eq.s32.totalorder %v2342, %v2291
      %vm2358 = vcmp.eq.s32.totalorder %v2342, %v2292
      %vm2359 = vcmp.eq.s32.totalorder %v2342, %v2293
      %vm2360 = vcmp.eq.s32.totalorder %v2342, %v2294
      %vm2361 = vcmp.eq.s32.totalorder %v2342, %v2295
      %vm2362 = vcmp.eq.s32.totalorder %v2342, %v2296
      %vm2363 = vcmp.eq.s32.totalorder %v2342, %v2297
      %vm2364 = vcmp.eq.s32.totalorder %v2342, %v2298
      %vm2365 = vcmp.eq.s32.totalorder %v2342, %v2299
      %vm2366 = vcmp.eq.s32.totalorder %v2342, %v2300
      %vm2367 = vcmp.eq.s32.totalorder %v2342, %v2301
      %vm2368 = vcmp.eq.s32.totalorder %v2342, %v2302
      %vm2369 = vcmp.eq.s32.totalorder %v2342, %v2303
      %vm2370 = vcmp.eq.s32.totalorder %v2342, %v2304
      %vm2371 = vcmp.eq.s32.totalorder %v2342, %v2305
      %vm2372 = vcmp.eq.s32.totalorder %v2342, %v2306
      %vm2373 = vcmp.eq.s32.totalorder %v2342, %v2307
      %vm2374 = vcmp.eq.s32.totalorder %v2342, %v2308
      %vm2375 = vcmp.eq.s32.totalorder %v2342, %v2309
      %vm2376 = vcmp.eq.s32.totalorder %v2342, %v2310
      %vm2377 = vcmp.eq.s32.totalorder %v2342, %v2311
      %vm2378 = vcmp.eq.s32.totalorder %v2342, %v2312
      %vm2379 = vcmp.eq.s32.totalorder %v2342, %v2313
      %vm2380 = vcmp.eq.s32.totalorder %v2342, %v2314
      %vm2381 = vcmp.eq.s32.totalorder %v2342, %v2315
      %vm2382 = vcmp.eq.s32.totalorder %v2342, %v2316
      %vm2383 = vcmp.eq.s32.totalorder %v2342, %v2317
      %vm2384 = vcmp.eq.s32.totalorder %v2342, %v2318
      %vm2385 = vcmp.eq.s32.totalorder %v2342, %v2319
      %vm2386 = vcmp.eq.s32.totalorder %v2342, %v2320
      %vm2387 = vcmp.eq.s32.totalorder %v2342, %v2321
      %vm2388 = vcmp.eq.s32.totalorder %v2342, %v2322
      %vm2389 = vcmp.eq.s32.totalorder %v2342, %v2323
      %vm2390 = vcmp.eq.s32.totalorder %v2342, %v2324
      %vm2391 = vcmp.eq.s32.totalorder %v2342, %v2325
      %vm2392 = vcmp.eq.s32.totalorder %v2342, %v2326
      %vm2393 = vcmp.eq.s32.totalorder %v2342, %v2327
      %vm2394 = vcmp.eq.s32.totalorder %v2342, %v2328
      %vm2395 = vcmp.eq.s32.totalorder %v2342, %v2329
      %vm2396 = vcmp.eq.s32.totalorder %v2342, %v2330
      %vm2397 = vcmp.eq.s32.totalorder %v2342, %v2331
      %vm2398 = vcmp.eq.s32.totalorder %v2342, %v2332
      %vm2399 = vcmp.eq.s32.totalorder %v2342, %v2333
      %vm2400 = vcmp.eq.s32.totalorder %v2342, %v2334
      %vm2401 = vcmp.eq.s32.totalorder %v2342, %v2335
      %vm2402 = vcmp.eq.s32.totalorder %v2342, %v2336
      %vm2403 = vcmp.eq.s32.totalorder %v2342, %v2337
      %vm2404 = vcmp.eq.s32.totalorder %v2342, %v2338
      %vm2405 = vcmp.eq.s32.totalorder %v2342, %v2339
      %vm2406 = vcmp.eq.s32.totalorder %v2342, %v2340
      %v2407 = vsel %vm2343, 1, 0
      %v2408 = vsel %vm2344, 1, 0
      %v2409 = vsel %vm2345, 1, 0
      %v2410 = vsel %vm2346, 1, 0
      %v2411 = vsel %vm2347, 1, 0
      %v2412 = vsel %vm2348, 1, 0
      %v2413 = vsel %vm2349, 1, 0
      %v2414 = vsel %vm2350, 1, 0
      %v2415 = vsel %vm2351, 1, 0
      %v2416 = vsel %vm2352, 1, 0
      %v2417 = vsel %vm2353, 1, 0
      %v2418 = vsel %vm2354, 1, 0
      %v2419 = vsel %vm2355, 1, 0
      %v2420 = vsel %vm2356, 1, 0
      %v2421 = vsel %vm2357, 1, 0
      %v2422 = vsel %vm2358, 1, 0
      %v2423 = vsel %vm2359, 1, 0
      %v2424 = vsel %vm2360, 1, 0
      %v2425 = vsel %vm2361, 1, 0
      %v2426 = vsel %vm2362, 1, 0
      %v2427 = vsel %vm2363, 1, 0
      %v2428 = vsel %vm2364, 1, 0
      %v2429 = vsel %vm2365, 1, 0
      %v2430 = vsel %vm2366, 1, 0
      %v2431 = vsel %vm2367, 1, 0
      %v2432 = vsel %vm2368, 1, 0
      %v2433 = vsel %vm2369, 1, 0
      %v2434 = vsel %vm2370, 1, 0
      %v2435 = vsel %vm2371, 1, 0
      %v2436 = vsel %vm2372, 1, 0
      %v2437 = vsel %vm2373, 1, 0
      %v2438 = vsel %vm2374, 1, 0
      %v2439 = vsel %vm2375, 1, 0
      %v2440 = vsel %vm2376, 1, 0
      %v2441 = vsel %vm2377, 1, 0
      %v2442 = vsel %vm2378, 1, 0
      %v2443 = vsel %vm2379, 1, 0
      %v2444 = vsel %vm2380, 1, 0
      %v2445 = vsel %vm2381, 1, 0
      %v2446 = vsel %vm2382, 1, 0
      %v2447 = vsel %vm2383, 1, 0
      %v2448 = vsel %vm2384, 1, 0
      %v2449 = vsel %vm2385, 1, 0
      %v2450 = vsel %vm2386, 1, 0
      %v2451 = vsel %vm2387, 1, 0
      %v2452 = vsel %vm2388, 1, 0
      %v2453 = vsel %vm2389, 1, 0
      %v2454 = vsel %vm2390, 1, 0
      %v2455 = vsel %vm2391, 1, 0
      %v2456 = vsel %vm2392, 1, 0
      %v2457 = vsel %vm2393, 1, 0
      %v2458 = vsel %vm2394, 1, 0
      %v2459 = vsel %vm2395, 1, 0
      %v2460 = vsel %vm2396, 1, 0
      %v2461 = vsel %vm2397, 1, 0
      %v2462 = vsel %vm2398, 1, 0
      %v2463 = vsel %vm2399, 1, 0
      %v2464 = vsel %vm2400, 1, 0
      %v2465 = vsel %vm2401, 1, 0
      %v2466 = vsel %vm2402, 1, 0
      %v2467 = vsel %vm2403, 1, 0
      %v2468 = vsel %vm2404, 1, 0
      %v2469 = vsel %vm2405, 1, 0
      %v2470 = vsel %vm2406, 1, 0
      %v2471 = vcvt.s32.f32 %v2407
      %v2472 = vcvt.s32.f32 %v2408
      %v2473 = vcvt.s32.f32 %v2409
      %v2474 = vcvt.s32.f32 %v2410
      %v2475 = vcvt.s32.f32 %v2411
      %v2476 = vcvt.s32.f32 %v2412
      %v2477 = vcvt.s32.f32 %v2413
      %v2478 = vcvt.s32.f32 %v2414
      %v2479 = vcvt.s32.f32 %v2415
      %v2480 = vcvt.s32.f32 %v2416
      %v2481 = vcvt.s32.f32 %v2417
      %v2482 = vcvt.s32.f32 %v2418
      %v2483 = vcvt.s32.f32 %v2419
      %v2484 = vcvt.s32.f32 %v2420
      %v2485 = vcvt.s32.f32 %v2421
      %v2486 = vcvt.s32.f32 %v2422
      %v2487 = vcvt.s32.f32 %v2423
      %v2488 = vcvt.s32.f32 %v2424
      %v2489 = vcvt.s32.f32 %v2425
      %v2490 = vcvt.s32.f32 %v2426
      %v2491 = vcvt.s32.f32 %v2427
      %v2492 = vcvt.s32.f32 %v2428
      %v2493 = vcvt.s32.f32 %v2429
      %v2494 = vcvt.s32.f32 %v2430
      %v2495 = vcvt.s32.f32 %v2431
      %v2496 = vcvt.s32.f32 %v2432
      %v2497 = vcvt.s32.f32 %v2433
      %v2498 = vcvt.s32.f32 %v2434
      %v2499 = vcvt.s32.f32 %v2435
      %v2500 = vcvt.s32.f32 %v2436
      %v2501 = vcvt.s32.f32 %v2437
      %v2502 = vcvt.s32.f32 %v2438
      %v2503 = vcvt.s32.f32 %v2439
      %v2504 = vcvt.s32.f32 %v2440
      %v2505 = vcvt.s32.f32 %v2441
      %v2506 = vcvt.s32.f32 %v2442
      %v2507 = vcvt.s32.f32 %v2443
      %v2508 = vcvt.s32.f32 %v2444
      %v2509 = vcvt.s32.f32 %v2445
      %v2510 = vcvt.s32.f32 %v2446
      %v2511 = vcvt.s32.f32 %v2447
      %v2512 = vcvt.s32.f32 %v2448
      %v2513 = vcvt.s32.f32 %v2449
      %v2514 = vcvt.s32.f32 %v2450
      %v2515 = vcvt.s32.f32 %v2451
      %v2516 = vcvt.s32.f32 %v2452
      %v2517 = vcvt.s32.f32 %v2453
      %v2518 = vcvt.s32.f32 %v2454
      %v2519 = vcvt.s32.f32 %v2455
      %v2520 = vcvt.s32.f32 %v2456
      %v2521 = vcvt.s32.f32 %v2457
      %v2522 = vcvt.s32.f32 %v2458
      %v2523 = vcvt.s32.f32 %v2459
      %v2524 = vcvt.s32.f32 %v2460
      %v2525 = vcvt.s32.f32 %v2461
      %v2526 = vcvt.s32.f32 %v2462
      %v2527 = vcvt.s32.f32 %v2463
      %v2528 = vcvt.s32.f32 %v2464
      %v2529 = vcvt.s32.f32 %v2465
      %v2530 = vcvt.s32.f32 %v2466
      %v2531 = vcvt.s32.f32 %v2467
      %v2532 = vcvt.s32.f32 %v2468
      %v2533 = vcvt.s32.f32 %v2469
      %v2534 = vcvt.s32.f32 %v2470
      %v2535 = vmul.f32 %v1380, %v2471
      %v2536 = vmul.f32 %v1385, %v2472
      %v2537 = vmul.f32 %v1390, %v2473
      %v2538 = vmul.f32 %v1395, %v2474
      %v2539 = vmul.f32 %v1400, %v2475
      %v2540 = vmul.f32 %v1405, %v2476
      %v2541 = vmul.f32 %v1410, %v2477
      %v2542 = vmul.f32 %v1415, %v2478
      %v2543 = vmul.f32 %v1420, %v2479
      %v2544 = vmul.f32 %v1425, %v2480
      %v2545 = vmul.f32 %v1430, %v2481
      %v2546 = vmul.f32 %v1435, %v2482
      %v2547 = vmul.f32 %v1440, %v2483
      %v2548 = vmul.f32 %v1445, %v2484
      %v2549 = vmul.f32 %v1450, %v2485
      %v2550 = vmul.f32 %v1455, %v2486
      %v2551 = vmul.f32 %v1460, %v2487
      %v2552 = vmul.f32 %v1465, %v2488
      %v2553 = vmul.f32 %v1470, %v2489
      %v2554 = vmul.f32 %v1475, %v2490
      %v2555 = vmul.f32 %v1480, %v2491
      %v2556 = vmul.f32 %v1485, %v2492
      %v2557 = vmul.f32 %v1490, %v2493
      %v2558 = vmul.f32 %v1495, %v2494
      %v2559 = vmul.f32 %v1500, %v2495
      %v2560 = vmul.f32 %v1505, %v2496
      %v2561 = vmul.f32 %v1510, %v2497
      %v2562 = vmul.f32 %v1515, %v2498
      %v2563 = vmul.f32 %v1520, %v2499
      %v2564 = vmul.f32 %v1525, %v2500
      %v2565 = vmul.f32 %v1530, %v2501
      %v2566 = vmul.f32 %v1535, %v2502
      %v2567 = vmul.f32 %v1540, %v2503
      %v2568 = vmul.f32 %v1545, %v2504
      %v2569 = vmul.f32 %v1550, %v2505
      %v2570 = vmul.f32 %v1555, %v2506
      %v2571 = vmul.f32 %v1560, %v2507
      %v2572 = vmul.f32 %v1565, %v2508
      %v2573 = vmul.f32 %v1570, %v2509
      %v2574 = vmul.f32 %v1575, %v2510
      %v2575 = vmul.f32 %v1580, %v2511
      %v2576 = vmul.f32 %v1585, %v2512
      %v2577 = vmul.f32 %v1590, %v2513
      %v2578 = vmul.f32 %v1595, %v2514
      %v2579 = vmul.f32 %v1600, %v2515
      %v2580 = vmul.f32 %v1605, %v2516
      %v2581 = vmul.f32 %v1610, %v2517
      %v2582 = vmul.f32 %v1615, %v2518
      %v2583 = vmul.f32 %v1620, %v2519
      %v2584 = vmul.f32 %v1625, %v2520
      %v2585 = vmul.f32 %v1630, %v2521
      %v2586 = vmul.f32 %v1635, %v2522
      %v2587 = vmul.f32 %v1640, %v2523
      %v2588 = vmul.f32 %v1645, %v2524
      %v2589 = vmul.f32 %v1650, %v2525
      %v2590 = vmul.f32 %v1655, %v2526
      %v2591 = vmul.f32 %v1660, %v2527
      %v2592 = vmul.f32 %v1665, %v2528
      %v2593 = vmul.f32 %v1670, %v2529
      %v2594 = vmul.f32 %v1675, %v2530
      %v2595 = vmul.f32 %v1680, %v2531
      %v2596 = vmul.f32 %v1685, %v2532
      %v2597 = vmul.f32 %v1690, %v2533
      %v2598 = vmul.f32 %v1695, %v2534
      %2599 = vadd.xlane.f32.xlu0 %v2535
      %v2600 = vpop.xlane.xlu0 %2599
      %2601 = vadd.xlane.f32.xlu0 %v2536
      %v2602 = vpop.xlane.xlu0 %2601
      %2603 = vadd.xlane.f32.xlu0 %v2537
      %v2604 = vpop.xlane.xlu0 %2603
      %2605 = vadd.xlane.f32.xlu0 %v2538
      %v2606 = vpop.xlane.xlu0 %2605
      %2607 = vadd.xlane.f32.xlu0 %v2539
      %v2608 = vpop.xlane.xlu0 %2607
      %2609 = vadd.xlane.f32.xlu0 %v2540
      %v2610 = vpop.xlane.xlu0 %2609
      %2611 = vadd.xlane.f32.xlu0 %v2541
      %v2612 = vpop.xlane.xlu0 %2611
      %2613 = vadd.xlane.f32.xlu0 %v2542
      %v2614 = vpop.xlane.xlu0 %2613
      %2615 = vadd.xlane.f32.xlu0 %v2543
      %v2616 = vpop.xlane.xlu0 %2615
      %2617 = vadd.xlane.f32.xlu0 %v2544
      %v2618 = vpop.xlane.xlu0 %2617
      %2619 = vadd.xlane.f32.xlu0 %v2545
      %v2620 = vpop.xlane.xlu0 %2619
      %2621 = vadd.xlane.f32.xlu0 %v2546
      %v2622 = vpop.xlane.xlu0 %2621
      %2623 = vadd.xlane.f32.xlu0 %v2547
      %v2624 = vpop.xlane.xlu0 %2623
      %2625 = vadd.xlane.f32.xlu0 %v2548
      %v2626 = vpop.xlane.xlu0 %2625
      %2627 = vadd.xlane.f32.xlu0 %v2549
      %v2628 = vpop.xlane.xlu0 %2627
      %2629 = vadd.xlane.f32.xlu0 %v2550
      %v2630 = vpop.xlane.xlu0 %2629
      %2631 = vadd.xlane.f32.xlu0 %v2551
      %v2632 = vpop.xlane.xlu0 %2631
      %2633 = vadd.xlane.f32.xlu0 %v2552
      %v2634 = vpop.xlane.xlu0 %2633
      %2635 = vadd.xlane.f32.xlu0 %v2553
      %v2636 = vpop.xlane.xlu0 %2635
      %2637 = vadd.xlane.f32.xlu0 %v2554
      %v2638 = vpop.xlane.xlu0 %2637
      %2639 = vadd.xlane.f32.xlu0 %v2555
      %v2640 = vpop.xlane.xlu0 %2639
      %2641 = vadd.xlane.f32.xlu0 %v2556
      %v2642 = vpop.xlane.xlu0 %2641
      %2643 = vadd.xlane.f32.xlu0 %v2557
      %v2644 = vpop.xlane.xlu0 %2643
      %2645 = vadd.xlane.f32.xlu0 %v2558
      %v2646 = vpop.xlane.xlu0 %2645
      %2647 = vadd.xlane.f32.xlu0 %v2559
      %v2648 = vpop.xlane.xlu0 %2647
      %2649 = vadd.xlane.f32.xlu0 %v2560
      %v2650 = vpop.xlane.xlu0 %2649
      %2651 = vadd.xlane.f32.xlu0 %v2561
      %v2652 = vpop.xlane.xlu0 %2651
      %2653 = vadd.xlane.f32.xlu0 %v2562
      %v2654 = vpop.xlane.xlu0 %2653
      %2655 = vadd.xlane.f32.xlu0 %v2563
      %v2656 = vpop.xlane.xlu0 %2655
      %2657 = vadd.xlane.f32.xlu0 %v2564
      %v2658 = vpop.xlane.xlu0 %2657
      %2659 = vadd.xlane.f32.xlu0 %v2565
      %v2660 = vpop.xlane.xlu0 %2659
      %2661 = vadd.xlane.f32.xlu0 %v2566
      %v2662 = vpop.xlane.xlu0 %2661
      %2663 = vadd.xlane.f32.xlu0 %v2567
      %v2664 = vpop.xlane.xlu0 %2663
      %2665 = vadd.xlane.f32.xlu0 %v2568
      %v2666 = vpop.xlane.xlu0 %2665
      %2667 = vadd.xlane.f32.xlu0 %v2569
      %v2668 = vpop.xlane.xlu0 %2667
      %2669 = vadd.xlane.f32.xlu0 %v2570
      %v2670 = vpop.xlane.xlu0 %2669
      %2671 = vadd.xlane.f32.xlu0 %v2571
      %v2672 = vpop.xlane.xlu0 %2671
      %2673 = vadd.xlane.f32.xlu0 %v2572
      %v2674 = vpop.xlane.xlu0 %2673
      %2675 = vadd.xlane.f32.xlu0 %v2573
      %v2676 = vpop.xlane.xlu0 %2675
      %2677 = vadd.xlane.f32.xlu0 %v2574
      %v2678 = vpop.xlane.xlu0 %2677
      %2679 = vadd.xlane.f32.xlu0 %v2575
      %v2680 = vpop.xlane.xlu0 %2679
      %2681 = vadd.xlane.f32.xlu0 %v2576
      %v2682 = vpop.xlane.xlu0 %2681
      %2683 = vadd.xlane.f32.xlu0 %v2577
      %v2684 = vpop.xlane.xlu0 %2683
      %2685 = vadd.xlane.f32.xlu0 %v2578
      %v2686 = vpop.xlane.xlu0 %2685
      %2687 = vadd.xlane.f32.xlu0 %v2579
      %v2688 = vpop.xlane.xlu0 %2687
      %2689 = vadd.xlane.f32.xlu0 %v2580
      %v2690 = vpop.xlane.xlu0 %2689
      %2691 = vadd.xlane.f32.xlu0 %v2581
      %v2692 = vpop.xlane.xlu0 %2691
      %2693 = vadd.xlane.f32.xlu0 %v2582
      %v2694 = vpop.xlane.xlu0 %2693
      %2695 = vadd.xlane.f32.xlu0 %v2583
      %v2696 = vpop.xlane.xlu0 %2695
      %2697 = vadd.xlane.f32.xlu0 %v2584
      %v2698 = vpop.xlane.xlu0 %2697
      %2699 = vadd.xlane.f32.xlu0 %v2585
      %v2700 = vpop.xlane.xlu0 %2699
      %2701 = vadd.xlane.f32.xlu0 %v2586
      %v2702 = vpop.xlane.xlu0 %2701
      %2703 = vadd.xlane.f32.xlu0 %v2587
      %v2704 = vpop.xlane.xlu0 %2703
      %2705 = vadd.xlane.f32.xlu0 %v2588
      %v2706 = vpop.xlane.xlu0 %2705
      %2707 = vadd.xlane.f32.xlu0 %v2589
      %v2708 = vpop.xlane.xlu0 %2707
      %2709 = vadd.xlane.f32.xlu0 %v2590
      %v2710 = vpop.xlane.xlu0 %2709
      %2711 = vadd.xlane.f32.xlu0 %v2591
      %v2712 = vpop.xlane.xlu0 %2711
      %2713 = vadd.xlane.f32.xlu0 %v2592
      %v2714 = vpop.xlane.xlu0 %2713
      %2715 = vadd.xlane.f32.xlu0 %v2593
      %v2716 = vpop.xlane.xlu0 %2715
      %2717 = vadd.xlane.f32.xlu0 %v2594
      %v2718 = vpop.xlane.xlu0 %2717
      %2719 = vadd.xlane.f32.xlu0 %v2595
      %v2720 = vpop.xlane.xlu0 %2719
      %2721 = vadd.xlane.f32.xlu0 %v2596
      %v2722 = vpop.xlane.xlu0 %2721
      %2723 = vadd.xlane.f32.xlu0 %v2597
      %v2724 = vpop.xlane.xlu0 %2723
      %2725 = vadd.xlane.f32.xlu0 %v2598
      %v2726 = vpop.xlane.xlu0 %2725
      %vm2727 = vcmask 7168
      %2728 = vst.msk [vmem:[%s280] sm:$0xff] %vm2727, %v2600
      %2729 = vst.msk [vmem:[%s280 + $0x8] sm:$0xff] %vm2727, %v2602
      %2730 = vst.msk [vmem:[%s280 + $0x10] sm:$0xff] %vm2727, %v2604
      %2731 = vst.msk [vmem:[%s280 + $0x18] sm:$0xff] %vm2727, %v2606
      %2732 = vst.msk [vmem:[%s280 + $0x20] sm:$0xff] %vm2727, %v2608
      %2733 = vst.msk [vmem:[%s280 + $0x28] sm:$0xff] %vm2727, %v2610
      %2734 = vst.msk [vmem:[%s280 + $0x30] sm:$0xff] %vm2727, %v2612
      %2735 = vst.msk [vmem:[%s280 + $0x38] sm:$0xff] %vm2727, %v2614
      %2736 = vst.msk [vmem:[%s280 + $0x40] sm:$0xff] %vm2727, %v2616
      %2737 = vst.msk [vmem:[%s280 + $0x48] sm:$0xff] %vm2727, %v2618
      %2738 = vst.msk [vmem:[%s280 + $0x50] sm:$0xff] %vm2727, %v2620
      %2739 = vst.msk [vmem:[%s280 + $0x58] sm:$0xff] %vm2727, %v2622
      %2740 = vst.msk [vmem:[%s280 + $0x60] sm:$0xff] %vm2727, %v2624
      %2741 = vst.msk [vmem:[%s280 + $0x68] sm:$0xff] %vm2727, %v2626
      %2742 = vst.msk [vmem:[%s280 + $0x70] sm:$0xff] %vm2727, %v2628
      %2743 = vst.msk [vmem:[%s280 + $0x78] sm:$0xff] %vm2727, %v2630
      %2744 = vst.msk [vmem:[%s280 + $0x80] sm:$0xff] %vm2727, %v2632
      %2745 = vst.msk [vmem:[%s280 + $0x88] sm:$0xff] %vm2727, %v2634
      %2746 = vst.msk [vmem:[%s280 + $0x90] sm:$0xff] %vm2727, %v2636
      %2747 = vst.msk [vmem:[%s280 + $0x98] sm:$0xff] %vm2727, %v2638
      %2748 = vst.msk [vmem:[%s280 + $0xa0] sm:$0xff] %vm2727, %v2640
      %2749 = vst.msk [vmem:[%s280 + $0xa8] sm:$0xff] %vm2727, %v2642
      %2750 = vst.msk [vmem:[%s280 + $0xb0] sm:$0xff] %vm2727, %v2644
      %2751 = vst.msk [vmem:[%s280 + $0xb8] sm:$0xff] %vm2727, %v2646
      %2752 = vst.msk [vmem:[%s280 + $0xc0] sm:$0xff] %vm2727, %v2648
      %2753 = vst.msk [vmem:[%s280 + $0xc8] sm:$0xff] %vm2727, %v2650
      %2754 = vst.msk [vmem:[%s280 + $0xd0] sm:$0xff] %vm2727, %v2652
      %2755 = vst.msk [vmem:[%s280 + $0xd8] sm:$0xff] %vm2727, %v2654
      %2756 = vst.msk [vmem:[%s280 + $0xe0] sm:$0xff] %vm2727, %v2656
      %2757 = vst.msk [vmem:[%s280 + $0xe8] sm:$0xff] %vm2727, %v2658
      %2758 = vst.msk [vmem:[%s280 + $0xf0] sm:$0xff] %vm2727, %v2660
      %2759 = vst.msk [vmem:[%s280 + $0xf8] sm:$0xff] %vm2727, %v2662
      %2760 = vst.msk [vmem:[%s280 + $0x100] sm:$0xff] %vm2727, %v2664
      %2761 = vst.msk [vmem:[%s280 + $0x108] sm:$0xff] %vm2727, %v2666
      %2762 = vst.msk [vmem:[%s280 + $0x110] sm:$0xff] %vm2727, %v2668
      %2763 = vst.msk [vmem:[%s280 + $0x118] sm:$0xff] %vm2727, %v2670
      %2764 = vst.msk [vmem:[%s280 + $0x120] sm:$0xff] %vm2727, %v2672
      %2765 = vst.msk [vmem:[%s280 + $0x128] sm:$0xff] %vm2727, %v2674
      %2766 = vst.msk [vmem:[%s280 + $0x130] sm:$0xff] %vm2727, %v2676
      %2767 = vst.msk [vmem:[%s280 + $0x138] sm:$0xff] %vm2727, %v2678
      %2768 = vst.msk [vmem:[%s280 + $0x140] sm:$0xff] %vm2727, %v2680
      %2769 = vst.msk [vmem:[%s280 + $0x148] sm:$0xff] %vm2727, %v2682
      %2770 = vst.msk [vmem:[%s280 + $0x150] sm:$0xff] %vm2727, %v2684
      %2771 = vst.msk [vmem:[%s280 + $0x158] sm:$0xff] %vm2727, %v2686
      %2772 = vst.msk [vmem:[%s280 + $0x160] sm:$0xff] %vm2727, %v2688
      %2773 = vst.msk [vmem:[%s280 + $0x168] sm:$0xff] %vm2727, %v2690
      %2774 = vst.msk [vmem:[%s280 + $0x170] sm:$0xff] %vm2727, %v2692
      %2775 = vst.msk [vmem:[%s280 + $0x178] sm:$0xff] %vm2727, %v2694
      %2776 = vst.msk [vmem:[%s280 + $0x180] sm:$0xff] %vm2727, %v2696
      %2777 = vst.msk [vmem:[%s280 + $0x188] sm:$0xff] %vm2727, %v2698
      %2778 = vst.msk [vmem:[%s280 + $0x190] sm:$0xff] %vm2727, %v2700
      %2779 = vst.msk [vmem:[%s280 + $0x198] sm:$0xff] %vm2727, %v2702
      %2780 = vst.msk [vmem:[%s280 + $0x1a0] sm:$0xff] %vm2727, %v2704
      %2781 = vst.msk [vmem:[%s280 + $0x1a8] sm:$0xff] %vm2727, %v2706
      %2782 = vst.msk [vmem:[%s280 + $0x1b0] sm:$0xff] %vm2727, %v2708
      %2783 = vst.msk [vmem:[%s280 + $0x1b8] sm:$0xff] %vm2727, %v2710
      %2784 = vst.msk [vmem:[%s280 + $0x1c0] sm:$0xff] %vm2727, %v2712
      %2785 = vst.msk [vmem:[%s280 + $0x1c8] sm:$0xff] %vm2727, %v2714
      %2786 = vst.msk [vmem:[%s280 + $0x1d0] sm:$0xff] %vm2727, %v2716
      %2787 = vst.msk [vmem:[%s280 + $0x1d8] sm:$0xff] %vm2727, %v2718
      %2788 = vst.msk [vmem:[%s280 + $0x1e0] sm:$0xff] %vm2727, %v2720
      %2789 = vst.msk [vmem:[%s280 + $0x1e8] sm:$0xff] %vm2727, %v2722
      %2790 = vst.msk [vmem:[%s280 + $0x1f0] sm:$0xff] %vm2727, %v2724
      %2791 = vst.msk [vmem:[%s280 + $0x1f8] sm:$0xff] %vm2727, %v2726
      %s2792 = smul.u32 64, %s18
      %p2793 = scmp.lt.s32.totalorder %s2792, 127
      %s2794 = scalar_select %p2793, %s2792, 127
      %s2795 = smul.addr %s2794, 8
      %s2796 = scalar_lea.vmem %s7, %s2795
      // Predicated region
      $region49: #{mtawegnn_forward.3} parent=47 // pred_check
        %p2797 = pneg %p188
      $region50: #{mtawegnn_forward.3} parent=47 // pred_check_branch
        %2799 = sbr.rel (%p2797) target = $region52
      $region51: #{mtawegnn_forward.3} parent=47 // pred_region
        %s2800 = smul.u32 64, %s18
      $region52: #{mtawegnn_forward.3} parent=47 // pred_fallthru
        _
    $region48: #{mtawegnn_forward.3} parent=5 // pred_fallthru
      _
    %p2801 = scmp.le.s32.totalorder 2, %s13
    // Predicated region
    $region53: #{mtawegnn_forward.3} parent=5 // pred_check
      %p2802 = pneg %p2801
    $region54: #{mtawegnn_forward.3} parent=5 // pred_check_branch
      %2804 = sbr.rel (%p2802) target = $region56
    $region55: #{mtawegnn_forward.3} parent=5 // pred_region
      %s2805 = ssub.s32 %s13, 2
      // Predicated region
      $region57: #{mtawegnn_forward.3} parent=55 // pred_check
        %p2806 = pneg %p194
      $region58: #{mtawegnn_forward.3} parent=55 // pred_check_branch
        %2808 = sbr.rel (%p2806) target = $region60
      $region59: #{mtawegnn_forward.3} parent=55 // pred_region
        %s2809 = smul.u32 64, %s19
        %p2810 = scmp.lt.s32.totalorder %s2809, 127
        %s2811 = scalar_select %p2810, %s2809, 127
        %s2812 = smul.addr %s2811, 8
        %s2813 = scalar_lea.vmem %s7, %s2812
      $region60: #{mtawegnn_forward.3} parent=55 // pred_fallthru
        _
    $region56: #{mtawegnn_forward.3} parent=5 // pred_fallthru
      _
  $region6: #{mtawegnn_forward.3} parent=0 // loop_footer
    %s17 = sadd.s32 1, %s13
  $region7: #{mtawegnn_forward.3} parent=0 // loop_footer_branch
    %12 = sbr.rel target = $region3
  $region8: #{mtawegnn_forward.3} parent=0 // loop_exit
    _

</llo_original>
